<compile_context>
chip_gen: v5e
topology: v5e:2x2
jax: 0.10.0
libtpu: 0.0.40
codegen_flags: <defaults>
</compile_context>

<pallas_src>
import jax
import jax.numpy as jnp
import numpy as np
from jax.experimental import pallas as pl
from jax.experimental.pallas import tpu as pltpu

VMEM_SPEC = pl.BlockSpec(memory_space=pltpu.MemorySpace.VMEM)


# ----------------------------- Pallas kernels -----------------------------

def _conv_relu_kernel(col_ref, w_ref, b_ref, o_ref):
    """3x3 'same' conv as ONE im2col matmul (K = 9*Cin) + bias + ReLU."""
    o_ref[...] = jnp.maximum(
        jnp.dot(col_ref[...], w_ref[...], preferred_element_type=jnp.float32)
        + b_ref[...], 0.0)


def _conv_pool_bn_kernel(col_ref, w_ref, b_ref, g_ref, beta_ref, o_ref):
    """conv(K=9*Cin) + ReLU, fused 2x2 max-pool (rows are pre-permuted so the
    4 pool taps are 4 contiguous row blocks), fused training-mode BatchNorm
    with single-pass statistics."""
    mp = o_ref.shape[0]                                   # pooled pixel count
    y = jnp.maximum(
        jnp.dot(col_ref[...], w_ref[...], preferred_element_type=jnp.float32)
        + b_ref[...], 0.0)                                # (4*mp, C)
    p = jnp.maximum(jnp.maximum(y[0 * mp:1 * mp], y[1 * mp:2 * mp]),
                    jnp.maximum(y[2 * mp:3 * mp], y[3 * mp:4 * mp]))
    inv_m = 1.0 / mp
    mean = jnp.sum(p, axis=0, keepdims=True) * inv_m
    ex2 = jnp.sum(p * p, axis=0, keepdims=True) * inv_m
    var = ex2 - mean * mean                               # biased (training BN)
    scale = jax.lax.rsqrt(var + 1e-5) * g_ref[...]
    o_ref[...] = (p - mean) * scale + beta_ref[...]


def _enc_tail_decoder_kernel(col_ref, w3_ref, b3_ref,
                             wd1_ref, bd1_ref, g_ref, beta_ref,
                             grp_ref, grpT_ref,
                             wd2_ref, bd2_ref, wd3_ref, bd3_ref,
                             enc_ref, dec_ref):
    """enc3 conv + pool -> encoding, then the full decoder in VMEM."""
    me = enc_ref.shape[0]                                 # N * (H//4) * (W//4)

    # enc3: single K=288 matmul + ReLU; rows are in (dy, dx, n, i, j) order.
    y = jnp.maximum(
        jnp.dot(col_ref[...], w3_ref[...], preferred_element_type=jnp.float32)
        + b3_ref[...], 0.0)                               # (4*me, 3)
    # 2x2 max pool over the 4 contiguous row blocks -> encoding, rows (n,i,j).
    enc = jnp.maximum(jnp.maximum(y[0 * me:1 * me], y[1 * me:2 * me]),
                      jnp.maximum(y[2 * me:3 * me], y[3 * me:4 * me]))
    enc_ref[...] = enc

    # dec1: ConvTranspose2d(3->32, k=2, s=2) folded into lanes:
    # columns = (di, dj, co); the 4 output pixels of each input pixel are 4
    # lane groups of 32 -> lane-dense 128-wide output.
    d1 = jnp.maximum(
        jnp.dot(enc, wd1_ref[...], preferred_element_type=jnp.float32)
        + bd1_ref[...], 0.0)                              # (me, 128)

    # Training-mode BatchNorm2d(32): per-channel stats pooled over rows AND the
    # 4 spatial lane groups (4*me = N*H*W samples/channel). Group-sum and
    # broadcast-back are tiny matmuls against a constant 0/1 matrix.
    cnt = 4.0 * me
    s = jnp.sum(jnp.dot(d1, grp_ref[...], preferred_element_type=jnp.float32),
                axis=0, keepdims=True)                    # (1, 32)
    s2 = jnp.sum(jnp.dot(d1 * d1, grp_ref[...],
                         preferred_element_type=jnp.float32),
                 axis=0, keepdims=True)                   # (1, 32)
    mean = s * (1.0 / cnt)
    var = s2 * (1.0 / cnt) - mean * mean
    scale = jax.lax.rsqrt(var + 1e-5) * g_ref[...]
    shift = beta_ref[...] - mean * scale
    scale4 = jnp.dot(scale, grpT_ref[...], preferred_element_type=jnp.float32)
    shift4 = jnp.dot(shift, grpT_ref[...], preferred_element_type=jnp.float32)
    d1 = d1 * scale4 + shift4

    # dec2: ConvTranspose2d(32->16, k=2, s=2) for all 4 spatial groups via a
    # block-diagonal weight -> single lane-dense K=128 matmul.
    d2 = jnp.maximum(
        jnp.dot(d1, wd2_ref[...], preferred_element_type=jnp.float32)
        + bd2_ref[...], 0.0)                              # (me, 256)

    # dec3: 1x1 ConvTranspose2d(16->3) per group via block-diagonal weight,
    # then sigmoid (exp goes to the EUP slot).
    z = jnp.dot(d2, wd3_ref[...], preferred_element_type=jnp.float32) + bd3_ref[...]
    dec_ref[...] = 1.0 / (1.0 + jnp.exp(-z))              # (me, 48)


# ----------------------------- wrapper glue -----------------------------

def _im2col3x3(x_nhwc, pool_order):
    """im2col for a 3x3 'same' conv. Columns ordered (ky, kx, ci).
    If pool_order, rows are permuted to (dy, dx, n, ho, wo) so a following
    2x2 max-pool is a max over 4 contiguous row blocks inside the kernel."""
    N, H, W, C = x_nhwc.shape
    xp = jnp.pad(x_nhwc, ((0, 0), (1, 1), (1, 1), (0, 0)))
    cols = jnp.concatenate([xp[:, ky:ky + H, kx:kx + W, :]
                            for ky in range(3) for kx in range(3)], axis=-1)
    if not pool_order:
        return cols.reshape(N * H * W, 9 * C)
    Ho, Wo = H // 2, W // 2
    cols = cols.reshape(N, Ho, 2, Wo, 2, 9 * C)
    cols = jnp.transpose(cols, (2, 4, 0, 1, 3, 5))        # (dy, dx, n, ho, wo, 9C)
    return cols.reshape(4 * N * Ho * Wo, 9 * C)


def _conv_w(w_oihw):
    """(Cout, Cin, 3, 3) -> (9*Cin, Cout), row order (ky, kx, ci)."""
    return jnp.transpose(w_oihw, (2, 3, 1, 0)).reshape(-1, w_oihw.shape[0])


def _convT2_w(w_iohw):
    """ConvTranspose2d(k=2,s=2) weight (Cin, Cout, 2, 2) -> (Cin, 4*Cout),
    column order (di, dj, co)."""
    cin, cout = w_iohw.shape[0], w_iohw.shape[1]
    return jnp.transpose(w_iohw, (0, 2, 3, 1)).reshape(cin, 4 * cout)


def conv1_relu(col, w, b):
    m, cout = col.shape[0], w.shape[1]
    return pl.pallas_call(
        _conv_relu_kernel,
        out_shape=jax.ShapeDtypeStruct((m, cout), jnp.float32),
        in_specs=[VMEM_SPEC, VMEM_SPEC, VMEM_SPEC],
        out_specs=VMEM_SPEC,
    )(col, w, b.reshape(1, cout))


def conv_pool_bn(col, w, b, gamma, beta):
    mp, cout = col.shape[0] // 4, w.shape[1]
    return pl.pallas_call(
        _conv_pool_bn_kernel,
        out_shape=jax.ShapeDtypeStruct((mp, cout), jnp.float32),
        in_specs=[VMEM_SPEC] * 5,
        out_specs=VMEM_SPEC,
    )(col, w, b.reshape(1, cout), gamma.reshape(1, cout), beta.reshape(1, cout))


def enc_tail_and_decoder(col, params):
    me = col.shape[0] // 4
    w3 = _conv_w(params['enc3_w'])                              # (288, 3)
    wd1 = _convT2_w(params['dec1_w'])                           # (3, 128)
    wd2 = jnp.kron(jnp.eye(4, dtype=jnp.float32),
                   _convT2_w(params['dec2_w']))                 # (128, 256)
    wd3 = jnp.kron(jnp.eye(16, dtype=jnp.float32),
                   params['dec3_w'][:, :, 0, 0])                # (256, 48)
    bd1 = jnp.tile(params['dec1_b'], 4).reshape(1, -1)          # (1, 128)
    bd2 = jnp.tile(params['dec2_b'], 16).reshape(1, -1)         # (1, 256)
    bd3 = jnp.tile(params['dec3_b'], 16).reshape(1, -1)         # (1, 48)
    grpT = jnp.tile(jnp.eye(32, dtype=jnp.float32), (1, 4))     # (32, 128)
    grp = grpT.T                                                # (128, 32)
    return pl.pallas_call(
        _enc_tail_decoder_kernel,
        out_shape=(jax.ShapeDtypeStruct((me, 3), jnp.float32),
                   jax.ShapeDtypeStruct((me, 48), jnp.float32)),
        in_specs=[VMEM_SPEC] * 13,
        out_specs=(VMEM_SPEC, VMEM_SPEC),
    )(col, w3, params['enc3_b'].reshape(1, 3),
      wd1, bd1, params['bn_g'].reshape(1, -1), params['bn_b'].reshape(1, -1),
      grp, grpT, wd2, bd2, wd3, bd3)


# ----------------------------- model -----------------------------

def init_params(key):
    ks = jax.random.split(key, 12)

    def w(k, shape, scale=0.1):
        return scale * jax.random.normal(k, shape, dtype=jnp.float32)

    return dict(
        enc1_w=w(ks[0], (16, 3, 3, 3)),  enc1_b=w(ks[1], (16,)),
        enc2_w=w(ks[2], (32, 16, 3, 3)), enc2_b=w(ks[3], (32,)),
        enc3_w=w(ks[4], (3, 32, 3, 3)),  enc3_b=w(ks[5], (3,)),
        dec1_w=w(ks[6], (3, 32, 2, 2)),  dec1_b=w(ks[7], (32,)),
        dec2_w=w(ks[8], (32, 16, 2, 2)), dec2_b=w(ks[9], (16,)),
        dec3_w=w(ks[10], (16, 3, 1, 1)), dec3_b=w(ks[11], (3,)),
        # The PyTorch module reuses ONE BatchNorm2d(32) in encoder and decoder.
        bn_g=jnp.ones((32,), jnp.float32),
        bn_b=jnp.zeros((32,), jnp.float32),
    )


def pallas_forward(params, x_nchw):
    x = jnp.transpose(x_nchw, (0, 2, 3, 1)).astype(jnp.float32)   # NCHW -> NHWC
    N, H, W, _ = x.shape
    H2, W2, H4, W4 = H // 2, W // 2, H // 4, W // 4

    # --- call 1: enc1 (3x3 conv, single K=27 matmul + ReLU) ---
    col1 = _im2col3x3(x, pool_order=False)
    y1 = conv1_relu(col1, _conv_w(params['enc1_w']), params['enc1_b'])

    # --- call 2: enc2 + 2x2 max-pool + BatchNorm, fused ---
    col2 = _im2col3x3(y1.reshape(N, H, W, 16), pool_order=True)
    p1 = conv_pool_bn(col2, _conv_w(params['enc2_w']), params['enc2_b'],
                      params['bn_g'], params['bn_b'])              # (N*H2*W2, 32)

    # --- call 3: enc3 + pool + full decoder, fused ---
    col3 = _im2col3x3(p1.reshape(N, H2, W2, 32), pool_order=True)
    enc_flat, dec_flat = enc_tail_and_decoder(col3, params)

    encoding = jnp.transpose(enc_flat.reshape(N, H4, W4, 3), (0, 3, 1, 2))
    # decoding columns = (di1, dj1, di2, dj2, c); pixel-shuffle back to NHWC.
    d = dec_flat.reshape(N, H4, W4, 2, 2, 2, 2, 3)        # n,i,j,di1,dj1,di2,dj2,c
    d = jnp.transpose(d, (0, 1, 3, 5, 2, 4, 6, 7))        # n,i,di1,di2,j,dj1,dj2,c
    decoding = jnp.transpose(d.reshape(N, H, W, 3), (0, 3, 1, 2))
    return encoding, decoding


# ----------------------------- pure-JAX reference -----------------------------

def reference_forward(params, x_nchw):
    def conv(x, w, b):
        y = jax.lax.conv_general_dilated(x, w, (1, 1), ((1, 1), (1, 1)),
                                         dimension_numbers=('NCHW', 'OIHW', 'NCHW'))
        return jax.nn.relu(y + b[None, :, None, None])

    def pool(x):
        return jax.lax.reduce_window(x, -jnp.inf, jax.lax.max,
                                     (1, 1, 2, 2), (1, 1, 2, 2), 'VALID')

    def bn(x, g, be, eps=1e-5):
        mean = jnp.mean(x, axis=(0, 2, 3), keepdims=True)
        var = jnp.var(x, axis=(0, 2, 3), keepdims=True)
        return (x - mean) / jnp.sqrt(var + eps) * g[None, :, None, None] + be[None, :, None, None]

    def convT2(x, w, b):
        N, _, H, W = x.shape
        Cout = w.shape[1]
        y = jnp.einsum('ncij,copq->noipjq', x, w).reshape(N, Cout, 2 * H, 2 * W)
        return jax.nn.relu(y + b[None, :, None, None])

    x = conv(x_nchw, params['enc1_w'], params['enc1_b'])
    x = conv(x, params['enc2_w'], params['enc2_b'])
    x = pool(x)
    x = bn(x, params['bn_g'], params['bn_b'])
    x = conv(x, params['enc3_w'], params['enc3_b'])
    encoding = pool(x)
    x = convT2(encoding, params['dec1_w'], params['dec1_b'])
    x = bn(x, params['bn_g'], params['bn_b'])
    x = convT2(x, params['dec2_w'], params['dec2_b'])
    y = jnp.einsum('ncij,co->noij', x, params['dec3_w'][:, :, 0, 0]) \
        + params['dec3_b'][None, :, None, None]
    decoding = jax.nn.sigmoid(y)
    return encoding, decoding


# ----------------------------- main -----------------------------

if __name__ == "__main__":
    key = jax.random.PRNGKey(0)
    pkey, xkey = jax.random.split(key)
    params = init_params(pkey)
    x = jax.random.uniform(xkey, (2, 3, 16, 16), dtype=jnp.float32)

    enc, dec = jax.jit(pallas_forward)(params, x)
    jax.block_until_ready((enc, dec))

    assert enc.shape == (2, 3, 4, 4) and dec.shape == (2, 3, 16, 16)

    enc_ref, dec_ref = reference_forward(params, x)
    np.testing.assert_allclose(np.asarray(enc), np.asarray(enc_ref), atol=1e-4, rtol=1e-4)
    np.testing.assert_allclose(np.asarray(dec), np.asarray(dec_ref), atol=1e-4, rtol=1e-4)

    print("KERNEL_OK")
</pallas_src>

<mosaic_0001>
module attributes {stable_mosaic.version = 11 : i64} {
  func.func @_conv_relu_kernel(%arg0: memref<512x27xf32, #tpu.memory_space<vmem>>, %arg1: memref<27x16xf32, #tpu.memory_space<vmem>>, %arg2: memref<1x16xf32, #tpu.memory_space<vmem>>, %arg3: memref<512x16xf32, #tpu.memory_space<vmem>>) attributes {dimension_semantics = [], scalar_prefetch = 0 : i64, scratch_operands = 0 : i64, tpu.core_type = #tpu.core_type<tc>} {
    %c0 = arith.constant 0 : index
    %c0_0 = arith.constant 0 : index
    %0 = vector.load %arg0[%c0, %c0_0] : memref<512x27xf32, #tpu.memory_space<vmem>>, vector<512x27xf32>
    %c0_1 = arith.constant 0 : index
    %c0_2 = arith.constant 0 : index
    %1 = vector.load %arg1[%c0_1, %c0_2] : memref<27x16xf32, #tpu.memory_space<vmem>>, vector<27x16xf32>
    %cst = arith.constant dense<0.000000e+00> : vector<512x16xf32>
    %2 = tpu.matmul %0, %1, %cst {dimension_numbers = #tpu.dot_dimension_numbers<[1], [0], [0], [1], [0, 0, 1, 1], [], []>} : vector<512x27xf32>, vector<27x16xf32>, vector<512x16xf32> -> vector<512x16xf32>
    %c0_3 = arith.constant 0 : index
    %c0_4 = arith.constant 0 : index
    %3 = vector.load %arg2[%c0_3, %c0_4] : memref<1x16xf32, #tpu.memory_space<vmem>>, vector<1x16xf32>
    %4 = vector.broadcast %3 : vector<1x16xf32> to vector<512x16xf32>
    %5 = arith.addf %2, %4 : vector<512x16xf32>
    %cst_5 = arith.constant 0.000000e+00 : f32
    %6 = vector.broadcast %cst_5 : f32 to vector<512x16xf32>
    %7 = arith.maximumf %5, %6 : vector<512x16xf32>
    %c0_6 = arith.constant 0 : index
    %c0_7 = arith.constant 0 : index
    %8 = vector.load %arg3[%c0_6, %c0_7] : memref<512x16xf32, #tpu.memory_space<vmem>>, vector<512x16xf32>
    tpu.vector_store %arg3[%c0_6, %c0_7], %7 {strides = array<i32>} : memref<512x16xf32, #tpu.memory_space<vmem>>, vector<512x16xf32>,
    return
  }
}

module attributes {stable_mosaic.version = 11 : i64} {
  func.func @_conv_pool_bn_kernel(%arg0: memref<512x144xf32, #tpu.memory_space<vmem>>, %arg1: memref<144x32xf32, #tpu.memory_space<vmem>>, %arg2: memref<1x32xf32, #tpu.memory_space<vmem>>, %arg3: memref<1x32xf32, #tpu.memory_space<vmem>>, %arg4: memref<1x32xf32, #tpu.memory_space<vmem>>, %arg5: memref<128x32xf32, #tpu.memory_space<vmem>>) attributes {dimension_semantics = [], scalar_prefetch = 0 : i64, scratch_operands = 0 : i64, tpu.core_type = #tpu.core_type<tc>} {
    %c0 = arith.constant 0 : index
    %c0_0 = arith.constant 0 : index
    %0 = vector.load %arg0[%c0, %c0_0] : memref<512x144xf32, #tpu.memory_space<vmem>>, vector<512x144xf32>
    %c0_1 = arith.constant 0 : index
    %c0_2 = arith.constant 0 : index
    %1 = vector.load %arg1[%c0_1, %c0_2] : memref<144x32xf32, #tpu.memory_space<vmem>>, vector<144x32xf32>
    %cst = arith.constant dense<0.000000e+00> : vector<512x32xf32>
    %2 = tpu.matmul %0, %1, %cst {dimension_numbers = #tpu.dot_dimension_numbers<[1], [0], [0], [1], [0, 0, 1, 1], [], []>} : vector<512x144xf32>, vector<144x32xf32>, vector<512x32xf32> -> vector<512x32xf32>
    %c0_3 = arith.constant 0 : index
    %c0_4 = arith.constant 0 : index
    %3 = vector.load %arg2[%c0_3, %c0_4] : memref<1x32xf32, #tpu.memory_space<vmem>>, vector<1x32xf32>
    %4 = vector.broadcast %3 : vector<1x32xf32> to vector<512x32xf32>
    %5 = arith.addf %2, %4 : vector<512x32xf32>
    %cst_5 = arith.constant 0.000000e+00 : f32
    %6 = vector.broadcast %cst_5 : f32 to vector<512x32xf32>
    %7 = arith.maximumf %5, %6 : vector<512x32xf32>
    %8 = vector.extract_strided_slice %7 {offsets = [0, 0], sizes = [128, 32], strides = [1, 1]} : vector<512x32xf32> to vector<128x32xf32>
    %9 = vector.extract_strided_slice %7 {offsets = [128, 0], sizes = [128, 32], strides = [1, 1]} : vector<512x32xf32> to vector<128x32xf32>
    %10 = arith.maximumf %8, %9 : vector<128x32xf32>
    %11 = vector.extract_strided_slice %7 {offsets = [256, 0], sizes = [128, 32], strides = [1, 1]} : vector<512x32xf32> to vector<128x32xf32>
    %12 = vector.extract_strided_slice %7 {offsets = [384, 0], sizes = [128, 32], strides = [1, 1]} : vector<512x32xf32> to vector<128x32xf32>
    %13 = arith.maximumf %11, %12 : vector<128x32xf32>
    %14 = arith.maximumf %10, %13 : vector<128x32xf32>
    %cst_6 = arith.constant dense<0.000000e+00> : vector<32xf32>
    %15 = vector.multi_reduction <add>, %14, %cst_6 [0] : vector<128x32xf32> to vector<32xf32>
    %16 = vector.shape_cast %15 : vector<32xf32> to vector<1x32xf32>
    %cst_7 = arith.constant 7.812500e-03 : f32
    %17 = vector.broadcast %cst_7 : f32 to vector<1x32xf32>
    %18 = arith.mulf %16, %17 : vector<1x32xf32>
    %19 = arith.mulf %14, %14 : vector<128x32xf32>
    %cst_8 = arith.constant dense<0.000000e+00> : vector<32xf32>
    %20 = vector.multi_reduction <add>, %19, %cst_8 [0] : vector<128x32xf32> to vector<32xf32>
    %21 = vector.shape_cast %20 : vector<32xf32> to vector<1x32xf32>
    %cst_9 = arith.constant 7.812500e-03 : f32
    %22 = vector.broadcast %cst_9 : f32 to vector<1x32xf32>
    %23 = arith.mulf %21, %22 : vector<1x32xf32>
    %24 = arith.mulf %18, %18 : vector<1x32xf32>
    %25 = arith.subf %23, %24 : vector<1x32xf32>
    %cst_10 = arith.constant 9.99999974E-6 : f32
    %26 = vector.broadcast %cst_10 : f32 to vector<1x32xf32>
    %27 = arith.addf %25, %26 : vector<1x32xf32>
    %28 = math.rsqrt %27 : vector<1x32xf32>
    %c0_11 = arith.constant 0 : index
    %c0_12 = arith.constant 0 : index
    %29 = vector.load %arg3[%c0_11, %c0_12] : memref<1x32xf32, #tpu.memory_space<vmem>>, vector<1x32xf32>
    %30 = arith.mulf %28, %29 : vector<1x32xf32>
    %31 = vector.broadcast %18 : vector<1x32xf32> to vector<128x32xf32>
    %32 = arith.subf %14, %31 : vector<128x32xf32>
    %33 = vector.broadcast %30 : vector<1x32xf32> to vector<128x32xf32>
    %34 = arith.mulf %32, %33 : vector<128x32xf32>
    %c0_13 = arith.constant 0 : index
    %c0_14 = arith.constant 0 : index
    %35 = vector.load %arg4[%c0_13, %c0_14] : memref<1x32xf32, #tpu.memory_space<vmem>>, vector<1x32xf32>
    %36 = vector.broadcast %35 : vector<1x32xf32> to vector<128x32xf32>
    %37 = arith.addf %34, %36 : vector<128x32xf32>
    %c0_15 = arith.constant 0 : index
    %c0_16 = arith.constant 0 : index
    %38 = vector.load %arg5[%c0_15, %c0_16] : memref<128x32xf32, #tpu.memory_space<vmem>>, vector<128x32xf32>
    tpu.vector_store %arg5[%c0_15, %c0_16], %37 {strides = array<i32>} : memref<128x32xf32, #tpu.memory_space<vmem>>, vector<128x32xf32>,
    return
  }
}

module attributes {stable_mosaic.version = 11 : i64} {
  func.func @_enc_tail_decoder_kernel(%arg0: memref<128x288xf32, #tpu.memory_space<vmem>>, %arg1: memref<288x3xf32, #tpu.memory_space<vmem>>, %arg2: memref<1x3xf32, #tpu.memory_space<vmem>>, %arg3: memref<3x128xf32, #tpu.memory_space<vmem>>, %arg4: memref<1x128xf32, #tpu.memory_space<vmem>>, %arg5: memref<1x32xf32, #tpu.memory_space<vmem>>, %arg6: memref<1x32xf32, #tpu.memory_space<vmem>>, %arg7: memref<128x32xf32, #tpu.memory_space<vmem>>, %arg8: memref<32x128xf32, #tpu.memory_space<vmem>>, %arg9: memref<128x256xf32, #tpu.memory_space<vmem>>, %arg10: memref<1x256xf32, #tpu.memory_space<vmem>>, %arg11: memref<256x48xf32, #tpu.memory_space<vmem>>, %arg12: memref<1x48xf32, #tpu.memory_space<vmem>>, %arg13: memref<32x3xf32, #tpu.memory_space<vmem>>, %arg14: memref<32x48xf32, #tpu.memory_space<vmem>>) attributes {dimension_semantics = [], scalar_prefetch = 0 : i64, scratch_operands = 0 : i64, tpu.core_type = #tpu.core_type<tc>} {
    %c0 = arith.constant 0 : index
    %c0_0 = arith.constant 0 : index
    %0 = vector.load %arg0[%c0, %c0_0] : memref<128x288xf32, #tpu.memory_space<vmem>>, vector<128x288xf32>
    %c0_1 = arith.constant 0 : index
    %c0_2 = arith.constant 0 : index
    %1 = vector.load %arg1[%c0_1, %c0_2] : memref<288x3xf32, #tpu.memory_space<vmem>>, vector<288x3xf32>
    %cst = arith.constant dense<0.000000e+00> : vector<128x3xf32>
    %2 = tpu.matmul %0, %1, %cst {dimension_numbers = #tpu.dot_dimension_numbers<[1], [0], [0], [1], [0, 0, 1, 1], [], []>} : vector<128x288xf32>, vector<288x3xf32>, vector<128x3xf32> -> vector<128x3xf32>
    %c0_3 = arith.constant 0 : index
    %c0_4 = arith.constant 0 : index
    %3 = vector.load %arg2[%c0_3, %c0_4] : memref<1x3xf32, #tpu.memory_space<vmem>>, vector<1x3xf32>
    %4 = vector.broadcast %3 : vector<1x3xf32> to vector<128x3xf32>
    %5 = arith.addf %2, %4 : vector<128x3xf32>
    %cst_5 = arith.constant 0.000000e+00 : f32
    %6 = vector.broadcast %cst_5 : f32 to vector<128x3xf32>
    %7 = arith.maximumf %5, %6 : vector<128x3xf32>
    %8 = vector.extract_strided_slice %7 {offsets = [0, 0], sizes = [32, 3], strides = [1, 1]} : vector<128x3xf32> to vector<32x3xf32>
    %9 = vector.extract_strided_slice %7 {offsets = [32, 0], sizes = [32, 3], strides = [1, 1]} : vector<128x3xf32> to vector<32x3xf32>
    %10 = arith.maximumf %8, %9 : vector<32x3xf32>
    %11 = vector.extract_strided_slice %7 {offsets = [64, 0], sizes = [32, 3], strides = [1, 1]} : vector<128x3xf32> to vector<32x3xf32>
    %12 = vector.extract_strided_slice %7 {offsets = [96, 0], sizes = [32, 3], strides = [1, 1]} : vector<128x3xf32> to vector<32x3xf32>
    %13 = arith.maximumf %11, %12 : vector<32x3xf32>
    %14 = arith.maximumf %10, %13 : vector<32x3xf32>
    %c0_6 = arith.constant 0 : index
    %c0_7 = arith.constant 0 : index
    %15 = vector.load %arg13[%c0_6, %c0_7] : memref<32x3xf32, #tpu.memory_space<vmem>>, vector<32x3xf32>
    tpu.vector_store %arg13[%c0_6, %c0_7], %14 {strides = array<i32>} : memref<32x3xf32, #tpu.memory_space<vmem>>, vector<32x3xf32>,
    %c0_8 = arith.constant 0 : index
    %c0_9 = arith.constant 0 : index
    %16 = vector.load %arg3[%c0_8, %c0_9] : memref<3x128xf32, #tpu.memory_space<vmem>>, vector<3x128xf32>
    %cst_10 = arith.constant dense<0.000000e+00> : vector<32x128xf32>
    %17 = tpu.matmul %14, %16, %cst_10 {dimension_numbers = #tpu.dot_dimension_numbers<[1], [0], [0], [1], [0, 0, 1, 1], [], []>} : vector<32x3xf32>, vector<3x128xf32>, vector<32x128xf32> -> vector<32x128xf32>
    %c0_11 = arith.constant 0 : index
    %c0_12 = arith.constant 0 : index
    %18 = vector.load %arg4[%c0_11, %c0_12] : memref<1x128xf32, #tpu.memory_space<vmem>>, vector<1x128xf32>
    %19 = vector.broadcast %18 : vector<1x128xf32> to vector<32x128xf32>
    %20 = arith.addf %17, %19 : vector<32x128xf32>
    %cst_13 = arith.constant 0.000000e+00 : f32
    %21 = vector.broadcast %cst_13 : f32 to vector<32x128xf32>
    %22 = arith.maximumf %20, %21 : vector<32x128xf32>
    %c0_14 = arith.constant 0 : index
    %c0_15 = arith.constant 0 : index
    %23 = vector.load %arg7[%c0_14, %c0_15] : memref<128x32xf32, #tpu.memory_space<vmem>>, vector<128x32xf32>
    %cst_16 = arith.constant dense<0.000000e+00> : vector<32x32xf32>
    %24 = tpu.matmul %22, %23, %cst_16 {dimension_numbers = #tpu.dot_dimension_numbers<[1], [0], [0], [1], [0, 0, 1, 1], [], []>} : vector<32x128xf32>, vector<128x32xf32>, vector<32x32xf32> -> vector<32x32xf32>
    %cst_17 = arith.constant dense<0.000000e+00> : vector<32xf32>
    %25 = vector.multi_reduction <add>, %24, %cst_17 [0] : vector<32x32xf32> to vector<32xf32>
    %26 = vector.shape_cast %25 : vector<32xf32> to vector<1x32xf32>
    %27 = arith.mulf %22, %22 : vector<32x128xf32>
    %c0_18 = arith.constant 0 : index
    %c0_19 = arith.constant 0 : index
    %28 = vector.load %arg7[%c0_18, %c0_19] : memref<128x32xf32, #tpu.memory_space<vmem>>, vector<128x32xf32>
    %cst_20 = arith.constant dense<0.000000e+00> : vector<32x32xf32>
    %29 = tpu.matmul %27, %28, %cst_20 {dimension_numbers = #tpu.dot_dimension_numbers<[1], [0], [0], [1], [0, 0, 1, 1], [], []>} : vector<32x128xf32>, vector<128x32xf32>, vector<32x32xf32> -> vector<32x32xf32>
    %cst_21 = arith.constant dense<0.000000e+00> : vector<32xf32>
    %30 = vector.multi_reduction <add>, %29, %cst_21 [0] : vector<32x32xf32> to vector<32xf32>
    %31 = vector.shape_cast %30 : vector<32xf32> to vector<1x32xf32>
    %cst_22 = arith.constant 7.812500e-03 : f32
    %32 = vector.broadcast %cst_22 : f32 to vector<1x32xf32>
    %33 = arith.mulf %26, %32 : vector<1x32xf32>
    %cst_23 = arith.constant 7.812500e-03 : f32
    %34 = vector.broadcast %cst_23 : f32 to vector<1x32xf32>
    %35 = arith.mulf %31, %34 : vector<1x32xf32>
    %36 = arith.mulf %33, %33 : vector<1x32xf32>
    %37 = arith.subf %35, %36 : vector<1x32xf32>
    %cst_24 = arith.constant 9.99999974E-6 : f32
    %38 = vector.broadcast %cst_24 : f32 to vector<1x32xf32>
    %39 = arith.addf %37, %38 : vector<1x32xf32>
    %40 = math.rsqrt %39 : vector<1x32xf32>
    %c0_25 = arith.constant 0 : index
    %c0_26 = arith.constant 0 : index
    %41 = vector.load %arg5[%c0_25, %c0_26] : memref<1x32xf32, #tpu.memory_space<vmem>>, vector<1x32xf32>
    %42 = arith.mulf %40, %41 : vector<1x32xf32>
    %c0_27 = arith.constant 0 : index
    %c0_28 = arith.constant 0 : index
    %43 = vector.load %arg6[%c0_27, %c0_28] : memref<1x32xf32, #tpu.memory_space<vmem>>, vector<1x32xf32>
    %44 = arith.mulf %33, %42 : vector<1x32xf32>
    %45 = arith.subf %43, %44 : vector<1x32xf32>
    %c0_29 = arith.constant 0 : index
    %c0_30 = arith.constant 0 : index
    %46 = vector.load %arg8[%c0_29, %c0_30] : memref<32x128xf32, #tpu.memory_space<vmem>>, vector<32x128xf32>
    %cst_31 = arith.constant dense<0.000000e+00> : vector<1x128xf32>
    %47 = tpu.matmul %42, %46, %cst_31 {dimension_numbers = #tpu.dot_dimension_numbers<[1], [0], [0], [1], [0, 0, 1, 1], [], []>} : vector<1x32xf32>, vector<32x128xf32>, vector<1x128xf32> -> vector<1x128xf32>
    %c0_32 = arith.constant 0 : index
    %c0_33 = arith.constant 0 : index
    %48 = vector.load %arg8[%c0_32, %c0_33] : memref<32x128xf32, #tpu.memory_space<vmem>>, vector<32x128xf32>
    %cst_34 = arith.constant dense<0.000000e+00> : vector<1x128xf32>
    %49 = tpu.matmul %45, %48, %cst_34 {dimension_numbers = #tpu.dot_dimension_numbers<[1], [0], [0], [1], [0, 0, 1, 1], [], []>} : vector<1x32xf32>, vector<32x128xf32>, vector<1x128xf32> -> vector<1x128xf32>
    %50 = vector.broadcast %47 : vector<1x128xf32> to vector<32x128xf32>
    %51 = arith.mulf %22, %50 : vector<32x128xf32>
    %52 = vector.broadcast %49 : vector<1x128xf32> to vector<32x128xf32>
    %53 = arith.addf %51, %52 : vector<32x128xf32>
    %c0_35 = arith.constant 0 : index
    %c0_36 = arith.constant 0 : index
    %54 = vector.load %arg9[%c0_35, %c0_36] : memref<128x256xf32, #tpu.memory_space<vmem>>, vector<128x256xf32>
    %cst_37 = arith.constant dense<0.000000e+00> : vector<32x256xf32>
    %55 = tpu.matmul %53, %54, %cst_37 {dimension_numbers = #tpu.dot_dimension_numbers<[1], [0], [0], [1], [0, 0, 1, 1], [], []>} : vector<32x128xf32>, vector<128x256xf32>, vector<32x256xf32> -> vector<32x256xf32>
    %c0_38 = arith.constant 0 : index
    %c0_39 = arith.constant 0 : index
    %56 = vector.load %arg10[%c0_38, %c0_39] : memref<1x256xf32, #tpu.memory_space<vmem>>, vector<1x256xf32>
    %57 = vector.broadcast %56 : vector<1x256xf32> to vector<32x256xf32>
    %58 = arith.addf %55, %57 : vector<32x256xf32>
    %cst_40 = arith.constant 0.000000e+00 : f32
    %59 = vector.broadcast %cst_40 : f32 to vector<32x256xf32>
    %60 = arith.maximumf %58, %59 : vector<32x256xf32>
    %c0_41 = arith.constant 0 : index
    %c0_42 = arith.constant 0 : index
    %61 = vector.load %arg11[%c0_41, %c0_42] : memref<256x48xf32, #tpu.memory_space<vmem>>, vector<256x48xf32>
    %cst_43 = arith.constant dense<0.000000e+00> : vector<32x48xf32>
    %62 = tpu.matmul %60, %61, %cst_43 {dimension_numbers = #tpu.dot_dimension_numbers<[1], [0], [0], [1], [0, 0, 1, 1], [], []>} : vector<32x256xf32>, vector<256x48xf32>, vector<32x48xf32> -> vector<32x48xf32>
    %c0_44 = arith.constant 0 : index
    %c0_45 = arith.constant 0 : index
    %63 = vector.load %arg12[%c0_44, %c0_45] : memref<1x48xf32, #tpu.memory_space<vmem>>, vector<1x48xf32>
    %64 = vector.broadcast %63 : vector<1x48xf32> to vector<32x48xf32>
    %65 = arith.addf %62, %64 : vector<32x48xf32>
    %cst_46 = arith.constant 0.000000e+00 : f32
    %66 = vector.broadcast %cst_46 : f32 to vector<32x48xf32>
    %67 = arith.subf %66, %65 : vector<32x48xf32>
    %68 = math.exp %67 : vector<32x48xf32>
    %cst_47 = arith.constant 1.000000e+00 : f32
    %69 = vector.broadcast %cst_47 : f32 to vector<32x48xf32>
    %70 = arith.addf %69, %68 : vector<32x48xf32>
    %cst_48 = arith.constant 1.000000e+00 : f32
    %71 = vector.broadcast %cst_48 : f32 to vector<32x48xf32>
    %72 = arith.divf %71, %70 : vector<32x48xf32>
    %c0_49 = arith.constant 0 : index
    %c0_50 = arith.constant 0 : index
    %73 = vector.load %arg14[%c0_49, %c0_50] : memref<32x48xf32, #tpu.memory_space<vmem>>, vector<32x48xf32>
    tpu.vector_store %arg14[%c0_49, %c0_50], %72 {strides = array<i32>} : memref<32x48xf32, #tpu.memory_space<vmem>>, vector<32x48xf32>,
    return
  }
}

</mosaic_0001>

<llo_original>
// kernel: pallas_forward.3
$region0: #{pallas_forward.3}
  #allocation0 [shape = 'u32[]', space=smem, size = 0x4, offset = 0x4, fixed_abs, tag = 'smem constant byte address 0x4 - core index']
  #allocation1 [shape = 'u32[72,128]{1,0:T(1,128)}', space=vmem, size = 0x9000, scoped, tag = 'internal scratch']
  %s0 = inlined_call_operand.vmem [shape: f32[512,27], index: 0, kind: input, shape index: {}]
  %s1 = inlined_call_operand.vmem [shape: f32[27,16], index: 1, kind: input, shape index: {}]
  %s2 = inlined_call_operand.vmem [shape: f32[1,16], index: 2, kind: input, shape index: {}]
  %s3 = inlined_call_operand.vmem [shape: f32[512,16], index: 3, kind: output, shape index: {}]
  %s4 = sld [smem:[#allocation0]]
  $region22: #{pallas_forward.3} parent=0
    _
  %s6 = ssub.s32 1, %s4
  %s7 = scalar_select 0, %s6, %s4
  // Predicated region
  $region2: #{pallas_forward.3} parent=0 // pred_check
    _
  $region3: #{pallas_forward.3} parent=0 // pred_check_branch
    %9 = sbr.rel (0) target = $region5
  $region4: #{pallas_forward.3} parent=0 // pred_region
    _
  $region5: #{pallas_forward.3} parent=0 // pred_fallthru
    _
  // Predicated region
  $region6: #{pallas_forward.3} parent=0 // pred_check
    _
  $region7: #{pallas_forward.3} parent=0 // pred_check_branch
    %11 = sbr.rel (0) target = $region9
  $region8: #{pallas_forward.3} parent=0 // pred_region
    _
  $region9: #{pallas_forward.3} parent=0 // pred_fallthru
    _
  // Predicated region
  $region10: #{pallas_forward.3} parent=0 // pred_check
    _
  $region11: #{pallas_forward.3} parent=0 // pred_check_branch
    %13 = sbr.rel (0) target = $region13
  $region12: #{pallas_forward.3} parent=0 // pred_region
    _
  $region13: #{pallas_forward.3} parent=0 // pred_fallthru
    _
  %v14 = vld [vmem:[%s0] sm:$0xff]
  %v15 = vld [vmem:[%s0 + $0x8] sm:$0xff]
  %v16 = vld [vmem:[%s0 + $0x10] sm:$0xff]
  %v17 = vld [vmem:[%s0 + $0x18] sm:$0xff]
  %v18 = vld [vmem:[%s0 + $0x20] sm:$0xff]
  %v19 = vld [vmem:[%s0 + $0x28] sm:$0xff]
  %v20 = vld [vmem:[%s0 + $0x30] sm:$0xff]
  %v21 = vld [vmem:[%s0 + $0x38] sm:$0xff]
  %v22 = vld [vmem:[%s0 + $0x40] sm:$0xff]
  %v23 = vld [vmem:[%s0 + $0x48] sm:$0xff]
  %v24 = vld [vmem:[%s0 + $0x50] sm:$0xff]
  %v25 = vld [vmem:[%s0 + $0x58] sm:$0xff]
  %v26 = vld [vmem:[%s0 + $0x60] sm:$0xff]
  %v27 = vld [vmem:[%s0 + $0x68] sm:$0xff]
  %v28 = vld [vmem:[%s0 + $0x70] sm:$0xff]
  %v29 = vld [vmem:[%s0 + $0x78] sm:$0xff]
  %v30 = vld [vmem:[%s0 + $0x80] sm:$0xff]
  %v31 = vld [vmem:[%s0 + $0x88] sm:$0xff]
  %v32 = vld [vmem:[%s0 + $0x90] sm:$0xff]
  %v33 = vld [vmem:[%s0 + $0x98] sm:$0xff]
  %v34 = vld [vmem:[%s0 + $0xa0] sm:$0xff]
  %v35 = vld [vmem:[%s0 + $0xa8] sm:$0xff]
  %v36 = vld [vmem:[%s0 + $0xb0] sm:$0xff]
  %v37 = vld [vmem:[%s0 + $0xb8] sm:$0xff]
  %v38 = vld [vmem:[%s0 + $0xc0] sm:$0xff]
  %v39 = vld [vmem:[%s0 + $0xc8] sm:$0xff]
  %v40 = vld [vmem:[%s0 + $0xd0] sm:$0xff]
  %v41 = vld [vmem:[%s0 + $0xd8] sm:$0xff]
  %v42 = vld [vmem:[%s0 + $0xe0] sm:$0xff]
  %v43 = vld [vmem:[%s0 + $0xe8] sm:$0xff]
  %v44 = vld [vmem:[%s0 + $0xf0] sm:$0xff]
  %v45 = vld [vmem:[%s0 + $0xf8] sm:$0xff]
  %v46 = vld [vmem:[%s0 + $0x100] sm:$0xff]
  %v47 = vld [vmem:[%s0 + $0x108] sm:$0xff]
  %v48 = vld [vmem:[%s0 + $0x110] sm:$0xff]
  %v49 = vld [vmem:[%s0 + $0x118] sm:$0xff]
  %v50 = vld [vmem:[%s0 + $0x120] sm:$0xff]
  %v51 = vld [vmem:[%s0 + $0x128] sm:$0xff]
  %v52 = vld [vmem:[%s0 + $0x130] sm:$0xff]
  %v53 = vld [vmem:[%s0 + $0x138] sm:$0xff]
  %v54 = vld [vmem:[%s0 + $0x140] sm:$0xff]
  %v55 = vld [vmem:[%s0 + $0x148] sm:$0xff]
  %v56 = vld [vmem:[%s0 + $0x150] sm:$0xff]
  %v57 = vld [vmem:[%s0 + $0x158] sm:$0xff]
  %v58 = vld [vmem:[%s0 + $0x160] sm:$0xff]
  %v59 = vld [vmem:[%s0 + $0x168] sm:$0xff]
  %v60 = vld [vmem:[%s0 + $0x170] sm:$0xff]
  %v61 = vld [vmem:[%s0 + $0x178] sm:$0xff]
  %v62 = vld [vmem:[%s0 + $0x180] sm:$0xff]
  %v63 = vld [vmem:[%s0 + $0x188] sm:$0xff]
  %v64 = vld [vmem:[%s0 + $0x190] sm:$0xff]
  %v65 = vld [vmem:[%s0 + $0x198] sm:$0xff]
  %v66 = vld [vmem:[%s0 + $0x1a0] sm:$0xff]
  %v67 = vld [vmem:[%s0 + $0x1a8] sm:$0xff]
  %v68 = vld [vmem:[%s0 + $0x1b0] sm:$0xff]
  %v69 = vld [vmem:[%s0 + $0x1b8] sm:$0xff]
  %v70 = vld [vmem:[%s0 + $0x1c0] sm:$0xff]
  %v71 = vld [vmem:[%s0 + $0x1c8] sm:$0xff]
  %v72 = vld [vmem:[%s0 + $0x1d0] sm:$0xff]
  %v73 = vld [vmem:[%s0 + $0x1d8] sm:$0xff]
  %v74 = vld [vmem:[%s0 + $0x1e0] sm:$0xff]
  %v75 = vld [vmem:[%s0 + $0x1e8] sm:$0xff]
  %v76 = vld [vmem:[%s0 + $0x1f0] sm:$0xff]
  %v77 = vld [vmem:[%s0 + $0x1f8] sm:$0xff]
  %v78 = vld [vmem:[%s1] sm:$0xff]
  %v79 = vld [vmem:[%s1 + $0x8] sm:$0xff]
  %v80 = vld [vmem:[%s1 + $0x10] sm:$0xff]
  %v81 = vld [vmem:[%s1 + $0x18] sm:$0x7]
  %v82 = vld [vmem:[%s2] sm:$0x1]
  %v84 = vperm.slane %v82, 0
  %vm86 = vcmask 220160
  %v88 = vsel %vm86, %v14, 0
  %v91 = vsel %vm86, %v15, 0
  %v94 = vsel %vm86, %v16, 0
  %v97 = vsel %vm86, %v17, 0
  %v100 = vsel %vm86, %v18, 0
  %v103 = vsel %vm86, %v19, 0
  %v106 = vsel %vm86, %v20, 0
  %v109 = vsel %vm86, %v21, 0
  %v112 = vsel %vm86, %v22, 0
  %v115 = vsel %vm86, %v23, 0
  %v118 = vsel %vm86, %v24, 0
  %v121 = vsel %vm86, %v25, 0
  %v124 = vsel %vm86, %v26, 0
  %v127 = vsel %vm86, %v27, 0
  %v130 = vsel %vm86, %v28, 0
  %v133 = vsel %vm86, %v29, 0
  %v136 = vsel %vm86, %v30, 0
  %v139 = vsel %vm86, %v31, 0
  %v142 = vsel %vm86, %v32, 0
  %v145 = vsel %vm86, %v33, 0
  %v148 = vsel %vm86, %v34, 0
  %v151 = vsel %vm86, %v35, 0
  %v154 = vsel %vm86, %v36, 0
  %v157 = vsel %vm86, %v37, 0
  %v160 = vsel %vm86, %v38, 0
  %v163 = vsel %vm86, %v39, 0
  %v166 = vsel %vm86, %v40, 0
  %v169 = vsel %vm86, %v41, 0
  %v172 = vsel %vm86, %v42, 0
  %v175 = vsel %vm86, %v43, 0
  %v178 = vsel %vm86, %v44, 0
  %v181 = vsel %vm86, %v45, 0
  %v184 = vsel %vm86, %v46, 0
  %v187 = vsel %vm86, %v47, 0
  %v190 = vsel %vm86, %v48, 0
  %v193 = vsel %vm86, %v49, 0
  %v196 = vsel %vm86, %v50, 0
  %v199 = vsel %vm86, %v51, 0
  %v202 = vsel %vm86, %v52, 0
  %v205 = vsel %vm86, %v53, 0
  %v208 = vsel %vm86, %v54, 0
  %v211 = vsel %vm86, %v55, 0
  %v214 = vsel %vm86, %v56, 0
  %v217 = vsel %vm86, %v57, 0
  %v220 = vsel %vm86, %v58, 0
  %v223 = vsel %vm86, %v59, 0
  %v226 = vsel %vm86, %v60, 0
  %v229 = vsel %vm86, %v61, 0
  %v232 = vsel %vm86, %v62, 0
  %v235 = vsel %vm86, %v63, 0
  %v238 = vsel %vm86, %v64, 0
  %v241 = vsel %vm86, %v65, 0
  %v244 = vsel %vm86, %v66, 0
  %v247 = vsel %vm86, %v67, 0
  %v250 = vsel %vm86, %v68, 0
  %v253 = vsel %vm86, %v69, 0
  %v256 = vsel %vm86, %v70, 0
  %v259 = vsel %vm86, %v71, 0
  %v262 = vsel %vm86, %v72, 0
  %v265 = vsel %vm86, %v73, 0
  %v268 = vsel %vm86, %v74, 0
  %v271 = vsel %vm86, %v75, 0
  %v274 = vsel %vm86, %v76, 0
  %v277 = vsel %vm86, %v77, 0
  %vm279 = vcmask 1042432
  %v281 = vsel %vm279, %v81, 0
  %283 = vmatpush.msra.mxu0 0.0
  %284 = vmatpush.msra.mxu0 0.0
  %285 = vmatpush.msra.mxu0 0.0
  %286 = vmatpush.msra.mxu0 0.0
  %287 = vmatpush.msra.mxu0 0.0
  %288 = vmatpush.msra.mxu0 0.0
  %289 = vmatpush.msra.mxu0 0.0
  %290 = vmatpush.msra.mxu0 0.0
  %291 = vmatpush.msra.mxu0 0.0
  %292 = vmatpush.msra.mxu0 0.0
  %293 = vmatpush.msra.mxu0 0.0
  %294 = vmatpush.msra.mxu0 0.0
  %295 = vmatpush.msra.mxu0 %v281
  %296 = vmatpush.msra.mxu0 %v80
  %297 = vmatpush.msra.mxu0 %v79
  %298 = vmatpush.msra.mxu0 %v78
  %299 = vmatmul.f32.gmra.mxu0 %v88
  %v300 = vpop.f32.mrf.mxu0
  %v301 = vadd.f32 %v84, %v300
  %302 = vmatmul.f32.gmra.mxu0 %v91
  %v303 = vpop.f32.mrf.mxu0
  %v304 = vadd.f32 %v84, %v303
  %305 = vmatmul.f32.gmra.mxu0 %v94
  %v306 = vpop.f32.mrf.mxu0
  %v307 = vadd.f32 %v84, %v306
  %308 = vmatmul.f32.gmra.mxu0 %v97
  %v309 = vpop.f32.mrf.mxu0
  %v310 = vadd.f32 %v84, %v309
  %311 = vmatmul.f32.gmra.mxu0 %v100
  %v312 = vpop.f32.mrf.mxu0
  %v313 = vadd.f32 %v84, %v312
  %314 = vmatmul.f32.gmra.mxu0 %v103
  %v315 = vpop.f32.mrf.mxu0
  %v316 = vadd.f32 %v84, %v315
  %317 = vmatmul.f32.gmra.mxu0 %v106
  %v318 = vpop.f32.mrf.mxu0
  %v319 = vadd.f32 %v84, %v318
  %320 = vmatmul.f32.gmra.mxu0 %v109
  %v321 = vpop.f32.mrf.mxu0
  %v322 = vadd.f32 %v84, %v321
  %323 = vmatmul.f32.gmra.mxu0 %v112
  %v324 = vpop.f32.mrf.mxu0
  %v325 = vadd.f32 %v84, %v324
  %326 = vmatmul.f32.gmra.mxu0 %v115
  %v327 = vpop.f32.mrf.mxu0
  %v328 = vadd.f32 %v84, %v327
  %329 = vmatmul.f32.gmra.mxu0 %v118
  %v330 = vpop.f32.mrf.mxu0
  %v331 = vadd.f32 %v84, %v330
  %332 = vmatmul.f32.gmra.mxu0 %v121
  %v333 = vpop.f32.mrf.mxu0
  %v334 = vadd.f32 %v84, %v333
  %335 = vmatmul.f32.gmra.mxu0 %v124
  %v336 = vpop.f32.mrf.mxu0
  %v337 = vadd.f32 %v84, %v336
  %338 = vmatmul.f32.gmra.mxu0 %v127
  %v339 = vpop.f32.mrf.mxu0
  %v340 = vadd.f32 %v84, %v339
  %341 = vmatmul.f32.gmra.mxu0 %v130
  %v342 = vpop.f32.mrf.mxu0
  %v343 = vadd.f32 %v84, %v342
  %344 = vmatmul.f32.gmra.mxu0 %v133
  %v345 = vpop.f32.mrf.mxu0
  %v346 = vadd.f32 %v84, %v345
  %347 = vmatmul.f32.gmra.mxu0 %v136
  %v348 = vpop.f32.mrf.mxu0
  %v349 = vadd.f32 %v84, %v348
  %350 = vmatmul.f32.gmra.mxu0 %v139
  %v351 = vpop.f32.mrf.mxu0
  %v352 = vadd.f32 %v84, %v351
  %353 = vmatmul.f32.gmra.mxu0 %v142
  %v354 = vpop.f32.mrf.mxu0
  %v355 = vadd.f32 %v84, %v354
  %356 = vmatmul.f32.gmra.mxu0 %v145
  %v357 = vpop.f32.mrf.mxu0
  %v358 = vadd.f32 %v84, %v357
  %359 = vmatmul.f32.gmra.mxu0 %v148
  %v360 = vpop.f32.mrf.mxu0
  %v361 = vadd.f32 %v84, %v360
  %362 = vmatmul.f32.gmra.mxu0 %v151
  %v363 = vpop.f32.mrf.mxu0
  %v364 = vadd.f32 %v84, %v363
  %365 = vmatmul.f32.gmra.mxu0 %v154
  %v366 = vpop.f32.mrf.mxu0
  %v367 = vadd.f32 %v84, %v366
  %368 = vmatmul.f32.gmra.mxu0 %v157
  %v369 = vpop.f32.mrf.mxu0
  %v370 = vadd.f32 %v84, %v369
  %371 = vmatmul.f32.gmra.mxu0 %v160
  %v372 = vpop.f32.mrf.mxu0
  %v373 = vadd.f32 %v84, %v372
  %374 = vmatmul.f32.gmra.mxu0 %v163
  %v375 = vpop.f32.mrf.mxu0
  %v376 = vadd.f32 %v84, %v375
  %377 = vmatmul.f32.gmra.mxu0 %v166
  %v378 = vpop.f32.mrf.mxu0
  %v379 = vadd.f32 %v84, %v378
  %380 = vmatmul.f32.gmra.mxu0 %v169
  %v381 = vpop.f32.mrf.mxu0
  %v382 = vadd.f32 %v84, %v381
  %383 = vmatmul.f32.gmra.mxu0 %v172
  %v384 = vpop.f32.mrf.mxu0
  %v385 = vadd.f32 %v84, %v384
  %386 = vmatmul.f32.gmra.mxu0 %v175
  %v387 = vpop.f32.mrf.mxu0
  %v388 = vadd.f32 %v84, %v387
  %389 = vmatmul.f32.gmra.mxu0 %v178
  %v390 = vpop.f32.mrf.mxu0
  %v391 = vadd.f32 %v84, %v390
  %392 = vmatmul.f32.gmra.mxu0 %v181
  %v393 = vpop.f32.mrf.mxu0
  %v394 = vadd.f32 %v84, %v393
  %395 = vmatmul.f32.gmra.mxu0 %v184
  %v396 = vpop.f32.mrf.mxu0
  %v397 = vadd.f32 %v84, %v396
  %398 = vmatmul.f32.gmra.mxu0 %v187
  %v399 = vpop.f32.mrf.mxu0
  %v400 = vadd.f32 %v84, %v399
  %401 = vmatmul.f32.gmra.mxu0 %v190
  %v402 = vpop.f32.mrf.mxu0
  %v403 = vadd.f32 %v84, %v402
  %404 = vmatmul.f32.gmra.mxu0 %v193
  %v405 = vpop.f32.mrf.mxu0
  %v406 = vadd.f32 %v84, %v405
  %407 = vmatmul.f32.gmra.mxu0 %v196
  %v408 = vpop.f32.mrf.mxu0
  %v409 = vadd.f32 %v84, %v408
  %410 = vmatmul.f32.gmra.mxu0 %v199
  %v411 = vpop.f32.mrf.mxu0
  %v412 = vadd.f32 %v84, %v411
  %413 = vmatmul.f32.gmra.mxu0 %v202
  %v414 = vpop.f32.mrf.mxu0
  %v415 = vadd.f32 %v84, %v414
  %416 = vmatmul.f32.gmra.mxu0 %v205
  %v417 = vpop.f32.mrf.mxu0
  %v418 = vadd.f32 %v84, %v417
  %419 = vmatmul.f32.gmra.mxu0 %v208
  %v420 = vpop.f32.mrf.mxu0
  %v421 = vadd.f32 %v84, %v420
  %422 = vmatmul.f32.gmra.mxu0 %v211
  %v423 = vpop.f32.mrf.mxu0
  %v424 = vadd.f32 %v84, %v423
  %425 = vmatmul.f32.gmra.mxu0 %v214
  %v426 = vpop.f32.mrf.mxu0
  %v427 = vadd.f32 %v84, %v426
  %428 = vmatmul.f32.gmra.mxu0 %v217
  %v429 = vpop.f32.mrf.mxu0
  %v430 = vadd.f32 %v84, %v429
  %431 = vmatmul.f32.gmra.mxu0 %v220
  %v432 = vpop.f32.mrf.mxu0
  %v433 = vadd.f32 %v84, %v432
  %434 = vmatmul.f32.gmra.mxu0 %v223
  %v435 = vpop.f32.mrf.mxu0
  %v436 = vadd.f32 %v84, %v435
  %437 = vmatmul.f32.gmra.mxu0 %v226
  %v438 = vpop.f32.mrf.mxu0
  %v439 = vadd.f32 %v84, %v438
  %440 = vmatmul.f32.gmra.mxu0 %v229
  %v441 = vpop.f32.mrf.mxu0
  %v442 = vadd.f32 %v84, %v441
  %443 = vmatmul.f32.gmra.mxu0 %v232
  %v444 = vpop.f32.mrf.mxu0
  %v445 = vadd.f32 %v84, %v444
  %446 = vmatmul.f32.gmra.mxu0 %v235
  %v447 = vpop.f32.mrf.mxu0
  %v448 = vadd.f32 %v84, %v447
  %449 = vmatmul.f32.gmra.mxu0 %v238
  %v450 = vpop.f32.mrf.mxu0
  %v451 = vadd.f32 %v84, %v450
  %452 = vmatmul.f32.gmra.mxu0 %v241
  %v453 = vpop.f32.mrf.mxu0
  %v454 = vadd.f32 %v84, %v453
  %455 = vmatmul.f32.gmra.mxu0 %v244
  %v456 = vpop.f32.mrf.mxu0
  %v457 = vadd.f32 %v84, %v456
  %458 = vmatmul.f32.gmra.mxu0 %v247
  %v459 = vpop.f32.mrf.mxu0
  %v460 = vadd.f32 %v84, %v459
  %461 = vmatmul.f32.gmra.mxu0 %v250
  %v462 = vpop.f32.mrf.mxu0
  %v463 = vadd.f32 %v84, %v462
  %464 = vmatmul.f32.gmra.mxu0 %v253
  %v465 = vpop.f32.mrf.mxu0
  %v466 = vadd.f32 %v84, %v465
  %467 = vmatmul.f32.gmra.mxu0 %v256
  %v468 = vpop.f32.mrf.mxu0
  %v469 = vadd.f32 %v84, %v468
  %470 = vmatmul.f32.gmra.mxu0 %v259
  %v471 = vpop.f32.mrf.mxu0
  %v472 = vadd.f32 %v84, %v471
  %473 = vmatmul.f32.gmra.mxu0 %v262
  %v474 = vpop.f32.mrf.mxu0
  %v475 = vadd.f32 %v84, %v474
  %476 = vmatmul.f32.gmra.mxu0 %v265
  %v477 = vpop.f32.mrf.mxu0
  %v478 = vadd.f32 %v84, %v477
  %479 = vmatmul.f32.gmra.mxu0 %v268
  %v480 = vpop.f32.mrf.mxu0
  %v481 = vadd.f32 %v84, %v480
  %482 = vmatmul.f32.gmra.mxu0 %v271
  %v483 = vpop.f32.mrf.mxu0
  %v484 = vadd.f32 %v84, %v483
  %485 = vmatmul.f32.gmra.mxu0 %v274
  %v486 = vpop.f32.mrf.mxu0
  %v487 = vadd.f32 %v84, %v486
  %488 = vmatmul.f32.gmra.mxu0 %v277
  %v489 = vpop.f32.mrf.mxu0
  %v490 = vadd.f32 %v84, %v489
  %491 = vdwg.mxu0
  %v492 = vmax.f32 %v301, 0.0
  %v493 = vmax.f32 %v304, 0.0
  %v494 = vmax.f32 %v307, 0.0
  %v495 = vmax.f32 %v310, 0.0
  %v496 = vmax.f32 %v313, 0.0
  %v497 = vmax.f32 %v316, 0.0
  %v498 = vmax.f32 %v319, 0.0
  %v499 = vmax.f32 %v322, 0.0
  %v500 = vmax.f32 %v325, 0.0
  %v501 = vmax.f32 %v328, 0.0
  %v502 = vmax.f32 %v331, 0.0
  %v503 = vmax.f32 %v334, 0.0
  %v504 = vmax.f32 %v337, 0.0
  %v505 = vmax.f32 %v340, 0.0
  %v506 = vmax.f32 %v343, 0.0
  %v507 = vmax.f32 %v346, 0.0
  %v508 = vmax.f32 %v349, 0.0
  %v509 = vmax.f32 %v352, 0.0
  %v510 = vmax.f32 %v355, 0.0
  %v511 = vmax.f32 %v358, 0.0
  %v512 = vmax.f32 %v361, 0.0
  %v513 = vmax.f32 %v364, 0.0
  %v514 = vmax.f32 %v367, 0.0
  %v515 = vmax.f32 %v370, 0.0
  %v516 = vmax.f32 %v373, 0.0
  %v517 = vmax.f32 %v376, 0.0
  %v518 = vmax.f32 %v379, 0.0
  %v519 = vmax.f32 %v382, 0.0
  %v520 = vmax.f32 %v385, 0.0
  %v521 = vmax.f32 %v388, 0.0
  %v522 = vmax.f32 %v391, 0.0
  %v523 = vmax.f32 %v394, 0.0
  %v524 = vmax.f32 %v397, 0.0
  %v525 = vmax.f32 %v400, 0.0
  %v526 = vmax.f32 %v403, 0.0
  %v527 = vmax.f32 %v406, 0.0
  %v528 = vmax.f32 %v409, 0.0
  %v529 = vmax.f32 %v412, 0.0
  %v530 = vmax.f32 %v415, 0.0
  %v531 = vmax.f32 %v418, 0.0
  %v532 = vmax.f32 %v421, 0.0
  %v533 = vmax.f32 %v424, 0.0
  %v534 = vmax.f32 %v427, 0.0
  %v535 = vmax.f32 %v430, 0.0
  %v536 = vmax.f32 %v433, 0.0
  %v537 = vmax.f32 %v436, 0.0
  %v538 = vmax.f32 %v439, 0.0
  %v539 = vmax.f32 %v442, 0.0
  %v540 = vmax.f32 %v445, 0.0
  %v541 = vmax.f32 %v448, 0.0
  %v542 = vmax.f32 %v451, 0.0
  %v543 = vmax.f32 %v454, 0.0
  %v544 = vmax.f32 %v457, 0.0
  %v545 = vmax.f32 %v460, 0.0
  %v546 = vmax.f32 %v463, 0.0
  %v547 = vmax.f32 %v466, 0.0
  %v548 = vmax.f32 %v469, 0.0
  %v549 = vmax.f32 %v472, 0.0
  %v550 = vmax.f32 %v475, 0.0
  %v551 = vmax.f32 %v478, 0.0
  %v552 = vmax.f32 %v481, 0.0
  %v553 = vmax.f32 %v484, 0.0
  %v554 = vmax.f32 %v487, 0.0
  %v555 = vmax.f32 %v490, 0.0
  %vm556 = vcmask 130048
  %557 = vst.msk [vmem:[%s3] sm:$0xff] %vm556, %v492
  %558 = vst.msk [vmem:[%s3 + $0x8] sm:$0xff] %vm556, %v493
  %559 = vst.msk [vmem:[%s3 + $0x10] sm:$0xff] %vm556, %v494
  %560 = vst.msk [vmem:[%s3 + $0x18] sm:$0xff] %vm556, %v495
  %561 = vst.msk [vmem:[%s3 + $0x20] sm:$0xff] %vm556, %v496
  %562 = vst.msk [vmem:[%s3 + $0x28] sm:$0xff] %vm556, %v497
  %563 = vst.msk [vmem:[%s3 + $0x30] sm:$0xff] %vm556, %v498
  %564 = vst.msk [vmem:[%s3 + $0x38] sm:$0xff] %vm556, %v499
  %565 = vst.msk [vmem:[%s3 + $0x40] sm:$0xff] %vm556, %v500
  %566 = vst.msk [vmem:[%s3 + $0x48] sm:$0xff] %vm556, %v501
  %567 = vst.msk [vmem:[%s3 + $0x50] sm:$0xff] %vm556, %v502
  %568 = vst.msk [vmem:[%s3 + $0x58] sm:$0xff] %vm556, %v503
  %569 = vst.msk [vmem:[%s3 + $0x60] sm:$0xff] %vm556, %v504
  %570 = vst.msk [vmem:[%s3 + $0x68] sm:$0xff] %vm556, %v505
  %571 = vst.msk [vmem:[%s3 + $0x70] sm:$0xff] %vm556, %v506
  %572 = vst.msk [vmem:[%s3 + $0x78] sm:$0xff] %vm556, %v507
  %573 = vst.msk [vmem:[%s3 + $0x80] sm:$0xff] %vm556, %v508
  %574 = vst.msk [vmem:[%s3 + $0x88] sm:$0xff] %vm556, %v509
  %575 = vst.msk [vmem:[%s3 + $0x90] sm:$0xff] %vm556, %v510
  %576 = vst.msk [vmem:[%s3 + $0x98] sm:$0xff] %vm556, %v511
  %577 = vst.msk [vmem:[%s3 + $0xa0] sm:$0xff] %vm556, %v512
  %578 = vst.msk [vmem:[%s3 + $0xa8] sm:$0xff] %vm556, %v513
  %579 = vst.msk [vmem:[%s3 + $0xb0] sm:$0xff] %vm556, %v514
  %580 = vst.msk [vmem:[%s3 + $0xb8] sm:$0xff] %vm556, %v515
  %581 = vst.msk [vmem:[%s3 + $0xc0] sm:$0xff] %vm556, %v516
  %582 = vst.msk [vmem:[%s3 + $0xc8] sm:$0xff] %vm556, %v517
  %583 = vst.msk [vmem:[%s3 + $0xd0] sm:$0xff] %vm556, %v518
  %584 = vst.msk [vmem:[%s3 + $0xd8] sm:$0xff] %vm556, %v519
  %585 = vst.msk [vmem:[%s3 + $0xe0] sm:$0xff] %vm556, %v520
  %586 = vst.msk [vmem:[%s3 + $0xe8] sm:$0xff] %vm556, %v521
  %587 = vst.msk [vmem:[%s3 + $0xf0] sm:$0xff] %vm556, %v522
  %588 = vst.msk [vmem:[%s3 + $0xf8] sm:$0xff] %vm556, %v523
  %589 = vst.msk [vmem:[%s3 + $0x100] sm:$0xff] %vm556, %v524
  %590 = vst.msk [vmem:[%s3 + $0x108] sm:$0xff] %vm556, %v525
  %591 = vst.msk [vmem:[%s3 + $0x110] sm:$0xff] %vm556, %v526
  %592 = vst.msk [vmem:[%s3 + $0x118] sm:$0xff] %vm556, %v527
  %593 = vst.msk [vmem:[%s3 + $0x120] sm:$0xff] %vm556, %v528
  %594 = vst.msk [vmem:[%s3 + $0x128] sm:$0xff] %vm556, %v529
  %595 = vst.msk [vmem:[%s3 + $0x130] sm:$0xff] %vm556, %v530
  %596 = vst.msk [vmem:[%s3 + $0x138] sm:$0xff] %vm556, %v531
  %597 = vst.msk [vmem:[%s3 + $0x140] sm:$0xff] %vm556, %v532
  %598 = vst.msk [vmem:[%s3 + $0x148] sm:$0xff] %vm556, %v533
  %599 = vst.msk [vmem:[%s3 + $0x150] sm:$0xff] %vm556, %v534
  %600 = vst.msk [vmem:[%s3 + $0x158] sm:$0xff] %vm556, %v535
  %601 = vst.msk [vmem:[%s3 + $0x160] sm:$0xff] %vm556, %v536
  %602 = vst.msk [vmem:[%s3 + $0x168] sm:$0xff] %vm556, %v537
  %603 = vst.msk [vmem:[%s3 + $0x170] sm:$0xff] %vm556, %v538
  %604 = vst.msk [vmem:[%s3 + $0x178] sm:$0xff] %vm556, %v539
  %605 = vst.msk [vmem:[%s3 + $0x180] sm:$0xff] %vm556, %v540
  %606 = vst.msk [vmem:[%s3 + $0x188] sm:$0xff] %vm556, %v541
  %607 = vst.msk [vmem:[%s3 + $0x190] sm:$0xff] %vm556, %v542
  %608 = vst.msk [vmem:[%s3 + $0x198] sm:$0xff] %vm556, %v543
  %609 = vst.msk [vmem:[%s3 + $0x1a0] sm:$0xff] %vm556, %v544
  %610 = vst.msk [vmem:[%s3 + $0x1a8] sm:$0xff] %vm556, %v545
  %611 = vst.msk [vmem:[%s3 + $0x1b0] sm:$0xff] %vm556, %v546
  %612 = vst.msk [vmem:[%s3 + $0x1b8] sm:$0xff] %vm556, %v547
  %613 = vst.msk [vmem:[%s3 + $0x1c0] sm:$0xff] %vm556, %v548
  %614 = vst.msk [vmem:[%s3 + $0x1c8] sm:$0xff] %vm556, %v549
  %615 = vst.msk [vmem:[%s3 + $0x1d0] sm:$0xff] %vm556, %v550
  %616 = vst.msk [vmem:[%s3 + $0x1d8] sm:$0xff] %vm556, %v551
  %617 = vst.msk [vmem:[%s3 + $0x1e0] sm:$0xff] %vm556, %v552
  %618 = vst.msk [vmem:[%s3 + $0x1e8] sm:$0xff] %vm556, %v553
  %619 = vst.msk [vmem:[%s3 + $0x1f0] sm:$0xff] %vm556, %v554
  %620 = vst.msk [vmem:[%s3 + $0x1f8] sm:$0xff] %vm556, %v555
  // Predicated region
  $region14: #{pallas_forward.3} parent=0 // pred_check
    _
  $region15: #{pallas_forward.3} parent=0 // pred_check_branch
    %622 = sbr.rel (0) target = $region17
  $region16: #{pallas_forward.3} parent=0 // pred_region
    _
  $region17: #{pallas_forward.3} parent=0 // pred_fallthru
    _
  // Predicated region
  $region18: #{pallas_forward.3} parent=0 // pred_check
    _
  $region19: #{pallas_forward.3} parent=0 // pred_check_branch
    %624 = sbr.rel (0) target = $region21
  $region20: #{pallas_forward.3} parent=0 // pred_region
    _
  $region21: #{pallas_forward.3} parent=0 // pred_fallthru
    _

// kernel: pallas_forward.4
$region0: #{pallas_forward.4}
  #allocation0 [shape = 'u32[]', space=smem, size = 0x4, offset = 0x4, fixed_abs, tag = 'smem constant byte address 0x4 - core index']
  #allocation1 [shape = 'u32[72,128]{1,0:T(1,128)}', space=vmem, size = 0x9000, scoped, tag = 'internal scratch']
  %s0 = inlined_call_operand.vmem [shape: f32[512,144], index: 0, kind: input, shape index: {}]
  %s1 = inlined_call_operand.vmem [shape: f32[144,32], index: 1, kind: input, shape index: {}]
  %s2 = inlined_call_operand.vmem [shape: f32[1,32], index: 2, kind: input, shape index: {}]
  %s3 = inlined_call_operand.vmem [shape: f32[1,32], index: 3, kind: input, shape index: {}]
  %s4 = inlined_call_operand.vmem [shape: f32[1,32], index: 4, kind: input, shape index: {}]
  %s5 = inlined_call_operand.vmem [shape: f32[128,32], index: 5, kind: output, shape index: {}]
  %s6 = sld [smem:[#allocation0]]
  $region30: #{pallas_forward.4} parent=0
    _
  %s8 = ssub.s32 1, %s6
  %s9 = scalar_select 0, %s8, %s6
  // Predicated region
  $region2: #{pallas_forward.4} parent=0 // pred_check
    _
  $region3: #{pallas_forward.4} parent=0 // pred_check_branch
    %11 = sbr.rel (0) target = $region5
  $region4: #{pallas_forward.4} parent=0 // pred_region
    _
  $region5: #{pallas_forward.4} parent=0 // pred_fallthru
    _
  // Predicated region
  $region6: #{pallas_forward.4} parent=0 // pred_check
    _
  $region7: #{pallas_forward.4} parent=0 // pred_check_branch
    %13 = sbr.rel (0) target = $region9
  $region8: #{pallas_forward.4} parent=0 // pred_region
    _
  $region9: #{pallas_forward.4} parent=0 // pred_fallthru
    _
  // Predicated region
  $region10: #{pallas_forward.4} parent=0 // pred_check
    _
  $region11: #{pallas_forward.4} parent=0 // pred_check_branch
    %15 = sbr.rel (0) target = $region13
  $region12: #{pallas_forward.4} parent=0 // pred_region
    _
  $region13: #{pallas_forward.4} parent=0 // pred_fallthru
    _
  // Predicated region
  $region14: #{pallas_forward.4} parent=0 // pred_check
    _
  $region15: #{pallas_forward.4} parent=0 // pred_check_branch
    %17 = sbr.rel (0) target = $region17
  $region16: #{pallas_forward.4} parent=0 // pred_region
    _
  $region17: #{pallas_forward.4} parent=0 // pred_fallthru
    _
  // Predicated region
  $region18: #{pallas_forward.4} parent=0 // pred_check
    _
  $region19: #{pallas_forward.4} parent=0 // pred_check_branch
    %19 = sbr.rel (0) target = $region21
  $region20: #{pallas_forward.4} parent=0 // pred_region
    _
  $region21: #{pallas_forward.4} parent=0 // pred_fallthru
    _
  %v20 = vld [vmem:[%s0] sm:$0xff]
  %v21 = vld [vmem:[%s0 + $0x8] sm:$0xff]
  %v22 = vld [vmem:[%s0 + $0x10] sm:$0xff]
  %v23 = vld [vmem:[%s0 + $0x18] sm:$0xff]
  %v24 = vld [vmem:[%s0 + $0x20] sm:$0xff]
  %v25 = vld [vmem:[%s0 + $0x28] sm:$0xff]
  %v26 = vld [vmem:[%s0 + $0x30] sm:$0xff]
  %v27 = vld [vmem:[%s0 + $0x38] sm:$0xff]
  %v28 = vld [vmem:[%s0 + $0x40] sm:$0xff]
  %v29 = vld [vmem:[%s0 + $0x48] sm:$0xff]
  %v30 = vld [vmem:[%s0 + $0x50] sm:$0xff]
  %v31 = vld [vmem:[%s0 + $0x58] sm:$0xff]
  %v32 = vld [vmem:[%s0 + $0x60] sm:$0xff]
  %v33 = vld [vmem:[%s0 + $0x68] sm:$0xff]
  %v34 = vld [vmem:[%s0 + $0x70] sm:$0xff]
  %v35 = vld [vmem:[%s0 + $0x78] sm:$0xff]
  %v36 = vld [vmem:[%s0 + $0x80] sm:$0xff]
  %v37 = vld [vmem:[%s0 + $0x88] sm:$0xff]
  %v38 = vld [vmem:[%s0 + $0x90] sm:$0xff]
  %v39 = vld [vmem:[%s0 + $0x98] sm:$0xff]
  %v40 = vld [vmem:[%s0 + $0xa0] sm:$0xff]
  %v41 = vld [vmem:[%s0 + $0xa8] sm:$0xff]
  %v42 = vld [vmem:[%s0 + $0xb0] sm:$0xff]
  %v43 = vld [vmem:[%s0 + $0xb8] sm:$0xff]
  %v44 = vld [vmem:[%s0 + $0xc0] sm:$0xff]
  %v45 = vld [vmem:[%s0 + $0xc8] sm:$0xff]
  %v46 = vld [vmem:[%s0 + $0xd0] sm:$0xff]
  %v47 = vld [vmem:[%s0 + $0xd8] sm:$0xff]
  %v48 = vld [vmem:[%s0 + $0xe0] sm:$0xff]
  %v49 = vld [vmem:[%s0 + $0xe8] sm:$0xff]
  %v50 = vld [vmem:[%s0 + $0xf0] sm:$0xff]
  %v51 = vld [vmem:[%s0 + $0xf8] sm:$0xff]
  %v52 = vld [vmem:[%s0 + $0x100] sm:$0xff]
  %v53 = vld [vmem:[%s0 + $0x108] sm:$0xff]
  %v54 = vld [vmem:[%s0 + $0x110] sm:$0xff]
  %v55 = vld [vmem:[%s0 + $0x118] sm:$0xff]
  %v56 = vld [vmem:[%s0 + $0x120] sm:$0xff]
  %v57 = vld [vmem:[%s0 + $0x128] sm:$0xff]
  %v58 = vld [vmem:[%s0 + $0x130] sm:$0xff]
  %v59 = vld [vmem:[%s0 + $0x138] sm:$0xff]
  %v60 = vld [vmem:[%s0 + $0x140] sm:$0xff]
  %v61 = vld [vmem:[%s0 + $0x148] sm:$0xff]
  %v62 = vld [vmem:[%s0 + $0x150] sm:$0xff]
  %v63 = vld [vmem:[%s0 + $0x158] sm:$0xff]
  %v64 = vld [vmem:[%s0 + $0x160] sm:$0xff]
  %v65 = vld [vmem:[%s0 + $0x168] sm:$0xff]
  %v66 = vld [vmem:[%s0 + $0x170] sm:$0xff]
  %v67 = vld [vmem:[%s0 + $0x178] sm:$0xff]
  %v68 = vld [vmem:[%s0 + $0x180] sm:$0xff]
  %v69 = vld [vmem:[%s0 + $0x188] sm:$0xff]
  %v70 = vld [vmem:[%s0 + $0x190] sm:$0xff]
  %v71 = vld [vmem:[%s0 + $0x198] sm:$0xff]
  %v72 = vld [vmem:[%s0 + $0x1a0] sm:$0xff]
  %v73 = vld [vmem:[%s0 + $0x1a8] sm:$0xff]
  %v74 = vld [vmem:[%s0 + $0x1b0] sm:$0xff]
  %v75 = vld [vmem:[%s0 + $0x1b8] sm:$0xff]
  %v76 = vld [vmem:[%s0 + $0x1c0] sm:$0xff]
  %v77 = vld [vmem:[%s0 + $0x1c8] sm:$0xff]
  %v78 = vld [vmem:[%s0 + $0x1d0] sm:$0xff]
  %v79 = vld [vmem:[%s0 + $0x1d8] sm:$0xff]
  %v80 = vld [vmem:[%s0 + $0x1e0] sm:$0xff]
  %v81 = vld [vmem:[%s0 + $0x1e8] sm:$0xff]
  %v82 = vld [vmem:[%s0 + $0x1f0] sm:$0xff]
  %v83 = vld [vmem:[%s0 + $0x1f8] sm:$0xff]
  %v84 = vld [vmem:[%s0 + $0x200] sm:$0xff]
  %v85 = vld [vmem:[%s0 + $0x208] sm:$0xff]
  %v86 = vld [vmem:[%s0 + $0x210] sm:$0xff]
  %v87 = vld [vmem:[%s0 + $0x218] sm:$0xff]
  %v88 = vld [vmem:[%s0 + $0x220] sm:$0xff]
  %v89 = vld [vmem:[%s0 + $0x228] sm:$0xff]
  %v90 = vld [vmem:[%s0 + $0x230] sm:$0xff]
  %v91 = vld [vmem:[%s0 + $0x238] sm:$0xff]
  %v92 = vld [vmem:[%s0 + $0x240] sm:$0xff]
  %v93 = vld [vmem:[%s0 + $0x248] sm:$0xff]
  %v94 = vld [vmem:[%s0 + $0x250] sm:$0xff]
  %v95 = vld [vmem:[%s0 + $0x258] sm:$0xff]
  %v96 = vld [vmem:[%s0 + $0x260] sm:$0xff]
  %v97 = vld [vmem:[%s0 + $0x268] sm:$0xff]
  %v98 = vld [vmem:[%s0 + $0x270] sm:$0xff]
  %v99 = vld [vmem:[%s0 + $0x278] sm:$0xff]
  %v100 = vld [vmem:[%s0 + $0x280] sm:$0xff]
  %v101 = vld [vmem:[%s0 + $0x288] sm:$0xff]
  %v102 = vld [vmem:[%s0 + $0x290] sm:$0xff]
  %v103 = vld [vmem:[%s0 + $0x298] sm:$0xff]
  %v104 = vld [vmem:[%s0 + $0x2a0] sm:$0xff]
  %v105 = vld [vmem:[%s0 + $0x2a8] sm:$0xff]
  %v106 = vld [vmem:[%s0 + $0x2b0] sm:$0xff]
  %v107 = vld [vmem:[%s0 + $0x2b8] sm:$0xff]
  %v108 = vld [vmem:[%s0 + $0x2c0] sm:$0xff]
  %v109 = vld [vmem:[%s0 + $0x2c8] sm:$0xff]
  %v110 = vld [vmem:[%s0 + $0x2d0] sm:$0xff]
  %v111 = vld [vmem:[%s0 + $0x2d8] sm:$0xff]
  %v112 = vld [vmem:[%s0 + $0x2e0] sm:$0xff]
  %v113 = vld [vmem:[%s0 + $0x2e8] sm:$0xff]
  %v114 = vld [vmem:[%s0 + $0x2f0] sm:$0xff]
  %v115 = vld [vmem:[%s0 + $0x2f8] sm:$0xff]
  %v116 = vld [vmem:[%s0 + $0x300] sm:$0xff]
  %v117 = vld [vmem:[%s0 + $0x308] sm:$0xff]
  %v118 = vld [vmem:[%s0 + $0x310] sm:$0xff]
  %v119 = vld [vmem:[%s0 + $0x318] sm:$0xff]
  %v120 = vld [vmem:[%s0 + $0x320] sm:$0xff]
  %v121 = vld [vmem:[%s0 + $0x328] sm:$0xff]
  %v122 = vld [vmem:[%s0 + $0x330] sm:$0xff]
  %v123 = vld [vmem:[%s0 + $0x338] sm:$0xff]
  %v124 = vld [vmem:[%s0 + $0x340] sm:$0xff]
  %v125 = vld [vmem:[%s0 + $0x348] sm:$0xff]
  %v126 = vld [vmem:[%s0 + $0x350] sm:$0xff]
  %v127 = vld [vmem:[%s0 + $0x358] sm:$0xff]
  %v128 = vld [vmem:[%s0 + $0x360] sm:$0xff]
  %v129 = vld [vmem:[%s0 + $0x368] sm:$0xff]
  %v130 = vld [vmem:[%s0 + $0x370] sm:$0xff]
  %v131 = vld [vmem:[%s0 + $0x378] sm:$0xff]
  %v132 = vld [vmem:[%s0 + $0x380] sm:$0xff]
  %v133 = vld [vmem:[%s0 + $0x388] sm:$0xff]
  %v134 = vld [vmem:[%s0 + $0x390] sm:$0xff]
  %v135 = vld [vmem:[%s0 + $0x398] sm:$0xff]
  %v136 = vld [vmem:[%s0 + $0x3a0] sm:$0xff]
  %v137 = vld [vmem:[%s0 + $0x3a8] sm:$0xff]
  %v138 = vld [vmem:[%s0 + $0x3b0] sm:$0xff]
  %v139 = vld [vmem:[%s0 + $0x3b8] sm:$0xff]
  %v140 = vld [vmem:[%s0 + $0x3c0] sm:$0xff]
  %v141 = vld [vmem:[%s0 + $0x3c8] sm:$0xff]
  %v142 = vld [vmem:[%s0 + $0x3d0] sm:$0xff]
  %v143 = vld [vmem:[%s0 + $0x3d8] sm:$0xff]
  %v144 = vld [vmem:[%s0 + $0x3e0] sm:$0xff]
  %v145 = vld [vmem:[%s0 + $0x3e8] sm:$0xff]
  %v146 = vld [vmem:[%s0 + $0x3f0] sm:$0xff]
  %v147 = vld [vmem:[%s0 + $0x3f8] sm:$0xff]
  %v148 = vld [vmem:[%s1] sm:$0xff]
  %v149 = vld [vmem:[%s1 + $0x8] sm:$0xff]
  %v150 = vld [vmem:[%s1 + $0x10] sm:$0xff]
  %v151 = vld [vmem:[%s1 + $0x18] sm:$0xff]
  %v152 = vld [vmem:[%s1 + $0x20] sm:$0xff]
  %v153 = vld [vmem:[%s1 + $0x28] sm:$0xff]
  %v154 = vld [vmem:[%s1 + $0x30] sm:$0xff]
  %v155 = vld [vmem:[%s1 + $0x38] sm:$0xff]
  %v156 = vld [vmem:[%s1 + $0x40] sm:$0xff]
  %v157 = vld [vmem:[%s1 + $0x48] sm:$0xff]
  %v158 = vld [vmem:[%s1 + $0x50] sm:$0xff]
  %v159 = vld [vmem:[%s1 + $0x58] sm:$0xff]
  %v160 = vld [vmem:[%s1 + $0x60] sm:$0xff]
  %v161 = vld [vmem:[%s1 + $0x68] sm:$0xff]
  %v162 = vld [vmem:[%s1 + $0x70] sm:$0xff]
  %v163 = vld [vmem:[%s1 + $0x78] sm:$0xff]
  %v164 = vld [vmem:[%s1 + $0x80] sm:$0xff]
  %v165 = vld [vmem:[%s1 + $0x88] sm:$0xff]
  %v166 = vld [vmem:[%s2] sm:$0x1]
  %v168 = vperm.slane %v166, 0
  %vm170 = vcmask 130048
  %v172 = vsel %vm170, %v21, 0
  %v175 = vsel %vm170, %v23, 0
  %v178 = vsel %vm170, %v25, 0
  %v181 = vsel %vm170, %v27, 0
  %v184 = vsel %vm170, %v29, 0
  %v187 = vsel %vm170, %v31, 0
  %v190 = vsel %vm170, %v33, 0
  %v193 = vsel %vm170, %v35, 0
  %v196 = vsel %vm170, %v37, 0
  %v199 = vsel %vm170, %v39, 0
  %v202 = vsel %vm170, %v41, 0
  %v205 = vsel %vm170, %v43, 0
  %v208 = vsel %vm170, %v45, 0
  %v211 = vsel %vm170, %v47, 0
  %v214 = vsel %vm170, %v49, 0
  %v217 = vsel %vm170, %v51, 0
  %v220 = vsel %vm170, %v53, 0
  %v223 = vsel %vm170, %v55, 0
  %v226 = vsel %vm170, %v57, 0
  %v229 = vsel %vm170, %v59, 0
  %v232 = vsel %vm170, %v61, 0
  %v235 = vsel %vm170, %v63, 0
  %v238 = vsel %vm170, %v65, 0
  %v241 = vsel %vm170, %v67, 0
  %v244 = vsel %vm170, %v69, 0
  %v247 = vsel %vm170, %v71, 0
  %v250 = vsel %vm170, %v73, 0
  %v253 = vsel %vm170, %v75, 0
  %v256 = vsel %vm170, %v77, 0
  %v259 = vsel %vm170, %v79, 0
  %v262 = vsel %vm170, %v81, 0
  %v265 = vsel %vm170, %v83, 0
  %v268 = vsel %vm170, %v85, 0
  %v271 = vsel %vm170, %v87, 0
  %v274 = vsel %vm170, %v89, 0
  %v277 = vsel %vm170, %v91, 0
  %v280 = vsel %vm170, %v93, 0
  %v283 = vsel %vm170, %v95, 0
  %v286 = vsel %vm170, %v97, 0
  %v289 = vsel %vm170, %v99, 0
  %v292 = vsel %vm170, %v101, 0
  %v295 = vsel %vm170, %v103, 0
  %v298 = vsel %vm170, %v105, 0
  %v301 = vsel %vm170, %v107, 0
  %v304 = vsel %vm170, %v109, 0
  %v307 = vsel %vm170, %v111, 0
  %v310 = vsel %vm170, %v113, 0
  %v313 = vsel %vm170, %v115, 0
  %v316 = vsel %vm170, %v117, 0
  %v319 = vsel %vm170, %v119, 0
  %v322 = vsel %vm170, %v121, 0
  %v325 = vsel %vm170, %v123, 0
  %v328 = vsel %vm170, %v125, 0
  %v331 = vsel %vm170, %v127, 0
  %v334 = vsel %vm170, %v129, 0
  %v337 = vsel %vm170, %v131, 0
  %v340 = vsel %vm170, %v133, 0
  %v343 = vsel %vm170, %v135, 0
  %v346 = vsel %vm170, %v137, 0
  %v349 = vsel %vm170, %v139, 0
  %v352 = vsel %vm170, %v141, 0
  %v355 = vsel %vm170, %v143, 0
  %v358 = vsel %vm170, %v145, 0
  %v361 = vsel %vm170, %v147, 0
  %363 = vmatpush.msra.mxu0 %v163
  %364 = vmatpush.msra.mxu0 %v162
  %365 = vmatpush.msra.mxu0 %v161
  %366 = vmatpush.msra.mxu0 %v160
  %367 = vmatpush.msra.mxu0 %v159
  %368 = vmatpush.msra.mxu0 %v158
  %369 = vmatpush.msra.mxu0 %v157
  %370 = vmatpush.msra.mxu0 %v156
  %371 = vmatpush.msra.mxu0 %v155
  %372 = vmatpush.msra.mxu0 %v154
  %373 = vmatpush.msra.mxu0 %v153
  %374 = vmatpush.msra.mxu0 %v152
  %375 = vmatpush.msra.mxu0 %v151
  %376 = vmatpush.msra.mxu0 %v150
  %377 = vmatpush.msra.mxu0 %v149
  %378 = vmatpush.msra.mxu0 %v148
  %379 = vmatmul.f32.gmra.mxu0 %v20
  %v380 = vpop.f32.mrf.mxu0
  %v381 = vadd.f32 %v168, %v380
  %382 = vmatmul.f32.gmra.mxu0 %v22
  %v383 = vpop.f32.mrf.mxu0
  %v384 = vadd.f32 %v168, %v383
  %385 = vmatmul.f32.gmra.mxu0 %v24
  %v386 = vpop.f32.mrf.mxu0
  %v387 = vadd.f32 %v168, %v386
  %388 = vmatmul.f32.gmra.mxu0 %v26
  %v389 = vpop.f32.mrf.mxu0
  %v390 = vadd.f32 %v168, %v389
  %391 = vmatmul.f32.gmra.mxu0 %v28
  %v392 = vpop.f32.mrf.mxu0
  %v393 = vadd.f32 %v168, %v392
  %394 = vmatmul.f32.gmra.mxu0 %v30
  %v395 = vpop.f32.mrf.mxu0
  %v396 = vadd.f32 %v168, %v395
  %397 = vmatmul.f32.gmra.mxu0 %v32
  %v398 = vpop.f32.mrf.mxu0
  %v399 = vadd.f32 %v168, %v398
  %400 = vmatmul.f32.gmra.mxu0 %v34
  %v401 = vpop.f32.mrf.mxu0
  %v402 = vadd.f32 %v168, %v401
  %403 = vmatmul.f32.gmra.mxu0 %v36
  %v404 = vpop.f32.mrf.mxu0
  %v405 = vadd.f32 %v168, %v404
  %406 = vmatmul.f32.gmra.mxu0 %v38
  %v407 = vpop.f32.mrf.mxu0
  %v408 = vadd.f32 %v168, %v407
  %409 = vmatmul.f32.gmra.mxu0 %v40
  %v410 = vpop.f32.mrf.mxu0
  %v411 = vadd.f32 %v168, %v410
  %412 = vmatmul.f32.gmra.mxu0 %v42
  %v413 = vpop.f32.mrf.mxu0
  %v414 = vadd.f32 %v168, %v413
  %415 = vmatmul.f32.gmra.mxu0 %v44
  %v416 = vpop.f32.mrf.mxu0
  %v417 = vadd.f32 %v168, %v416
  %418 = vmatmul.f32.gmra.mxu0 %v46
  %v419 = vpop.f32.mrf.mxu0
  %v420 = vadd.f32 %v168, %v419
  %421 = vmatmul.f32.gmra.mxu0 %v48
  %v422 = vpop.f32.mrf.mxu0
  %v423 = vadd.f32 %v168, %v422
  %424 = vmatmul.f32.gmra.mxu0 %v50
  %v425 = vpop.f32.mrf.mxu0
  %v426 = vadd.f32 %v168, %v425
  %427 = vmatmul.f32.gmra.mxu0 %v52
  %v428 = vpop.f32.mrf.mxu0
  %v429 = vadd.f32 %v168, %v428
  %430 = vmatmul.f32.gmra.mxu0 %v54
  %v431 = vpop.f32.mrf.mxu0
  %v432 = vadd.f32 %v168, %v431
  %433 = vmatmul.f32.gmra.mxu0 %v56
  %v434 = vpop.f32.mrf.mxu0
  %v435 = vadd.f32 %v168, %v434
  %436 = vmatmul.f32.gmra.mxu0 %v58
  %v437 = vpop.f32.mrf.mxu0
  %v438 = vadd.f32 %v168, %v437
  %439 = vmatmul.f32.gmra.mxu0 %v60
  %v440 = vpop.f32.mrf.mxu0
  %v441 = vadd.f32 %v168, %v440
  %442 = vmatmul.f32.gmra.mxu0 %v62
  %v443 = vpop.f32.mrf.mxu0
  %v444 = vadd.f32 %v168, %v443
  %445 = vmatmul.f32.gmra.mxu0 %v64
  %v446 = vpop.f32.mrf.mxu0
  %v447 = vadd.f32 %v168, %v446
  %448 = vmatmul.f32.gmra.mxu0 %v66
  %v449 = vpop.f32.mrf.mxu0
  %v450 = vadd.f32 %v168, %v449
  %451 = vmatmul.f32.gmra.mxu0 %v68
  %v452 = vpop.f32.mrf.mxu0
  %v453 = vadd.f32 %v168, %v452
  %454 = vmatmul.f32.gmra.mxu0 %v70
  %v455 = vpop.f32.mrf.mxu0
  %v456 = vadd.f32 %v168, %v455
  %457 = vmatmul.f32.gmra.mxu0 %v72
  %v458 = vpop.f32.mrf.mxu0
  %v459 = vadd.f32 %v168, %v458
  %460 = vmatmul.f32.gmra.mxu0 %v74
  %v461 = vpop.f32.mrf.mxu0
  %v462 = vadd.f32 %v168, %v461
  %463 = vmatmul.f32.gmra.mxu0 %v76
  %v464 = vpop.f32.mrf.mxu0
  %v465 = vadd.f32 %v168, %v464
  %466 = vmatmul.f32.gmra.mxu0 %v78
  %v467 = vpop.f32.mrf.mxu0
  %v468 = vadd.f32 %v168, %v467
  %469 = vmatmul.f32.gmra.mxu0 %v80
  %v470 = vpop.f32.mrf.mxu0
  %v471 = vadd.f32 %v168, %v470
  %472 = vmatmul.f32.gmra.mxu0 %v82
  %v473 = vpop.f32.mrf.mxu0
  %v474 = vadd.f32 %v168, %v473
  %475 = vmatmul.f32.gmra.mxu0 %v84
  %v476 = vpop.f32.mrf.mxu0
  %v477 = vadd.f32 %v168, %v476
  %478 = vmatmul.f32.gmra.mxu0 %v86
  %v479 = vpop.f32.mrf.mxu0
  %v480 = vadd.f32 %v168, %v479
  %481 = vmatmul.f32.gmra.mxu0 %v88
  %v482 = vpop.f32.mrf.mxu0
  %v483 = vadd.f32 %v168, %v482
  %484 = vmatmul.f32.gmra.mxu0 %v90
  %v485 = vpop.f32.mrf.mxu0
  %v486 = vadd.f32 %v168, %v485
  %487 = vmatmul.f32.gmra.mxu0 %v92
  %v488 = vpop.f32.mrf.mxu0
  %v489 = vadd.f32 %v168, %v488
  %490 = vmatmul.f32.gmra.mxu0 %v94
  %v491 = vpop.f32.mrf.mxu0
  %v492 = vadd.f32 %v168, %v491
  %493 = vmatmul.f32.gmra.mxu0 %v96
  %v494 = vpop.f32.mrf.mxu0
  %v495 = vadd.f32 %v168, %v494
  %496 = vmatmul.f32.gmra.mxu0 %v98
  %v497 = vpop.f32.mrf.mxu0
  %v498 = vadd.f32 %v168, %v497
  %499 = vmatmul.f32.gmra.mxu0 %v100
  %v500 = vpop.f32.mrf.mxu0
  %v501 = vadd.f32 %v168, %v500
  %502 = vmatmul.f32.gmra.mxu0 %v102
  %v503 = vpop.f32.mrf.mxu0
  %v504 = vadd.f32 %v168, %v503
  %505 = vmatmul.f32.gmra.mxu0 %v104
  %v506 = vpop.f32.mrf.mxu0
  %v507 = vadd.f32 %v168, %v506
  %508 = vmatmul.f32.gmra.mxu0 %v106
  %v509 = vpop.f32.mrf.mxu0
  %v510 = vadd.f32 %v168, %v509
  %511 = vmatmul.f32.gmra.mxu0 %v108
  %v512 = vpop.f32.mrf.mxu0
  %v513 = vadd.f32 %v168, %v512
  %514 = vmatmul.f32.gmra.mxu0 %v110
  %v515 = vpop.f32.mrf.mxu0
  %v516 = vadd.f32 %v168, %v515
  %517 = vmatmul.f32.gmra.mxu0 %v112
  %v518 = vpop.f32.mrf.mxu0
  %v519 = vadd.f32 %v168, %v518
  %520 = vmatmul.f32.gmra.mxu0 %v114
  %v521 = vpop.f32.mrf.mxu0
  %v522 = vadd.f32 %v168, %v521
  %523 = vmatmul.f32.gmra.mxu0 %v116
  %v524 = vpop.f32.mrf.mxu0
  %v525 = vadd.f32 %v168, %v524
  %526 = vmatmul.f32.gmra.mxu0 %v118
  %v527 = vpop.f32.mrf.mxu0
  %v528 = vadd.f32 %v168, %v527
  %529 = vmatmul.f32.gmra.mxu0 %v120
  %v530 = vpop.f32.mrf.mxu0
  %v531 = vadd.f32 %v168, %v530
  %532 = vmatmul.f32.gmra.mxu0 %v122
  %v533 = vpop.f32.mrf.mxu0
  %v534 = vadd.f32 %v168, %v533
  %535 = vmatmul.f32.gmra.mxu0 %v124
  %v536 = vpop.f32.mrf.mxu0
  %v537 = vadd.f32 %v168, %v536
  %538 = vmatmul.f32.gmra.mxu0 %v126
  %v539 = vpop.f32.mrf.mxu0
  %v540 = vadd.f32 %v168, %v539
  %541 = vmatmul.f32.gmra.mxu0 %v128
  %v542 = vpop.f32.mrf.mxu0
  %v543 = vadd.f32 %v168, %v542
  %544 = vmatmul.f32.gmra.mxu0 %v130
  %v545 = vpop.f32.mrf.mxu0
  %v546 = vadd.f32 %v168, %v545
  %547 = vmatmul.f32.gmra.mxu0 %v132
  %v548 = vpop.f32.mrf.mxu0
  %v549 = vadd.f32 %v168, %v548
  %550 = vmatmul.f32.gmra.mxu0 %v134
  %v551 = vpop.f32.mrf.mxu0
  %v552 = vadd.f32 %v168, %v551
  %553 = vmatmul.f32.gmra.mxu0 %v136
  %v554 = vpop.f32.mrf.mxu0
  %v555 = vadd.f32 %v168, %v554
  %556 = vmatmul.f32.gmra.mxu0 %v138
  %v557 = vpop.f32.mrf.mxu0
  %v558 = vadd.f32 %v168, %v557
  %559 = vmatmul.f32.gmra.mxu0 %v140
  %v560 = vpop.f32.mrf.mxu0
  %v561 = vadd.f32 %v168, %v560
  %562 = vmatmul.f32.gmra.mxu0 %v142
  %v563 = vpop.f32.mrf.mxu0
  %v564 = vadd.f32 %v168, %v563
  %565 = vmatmul.f32.gmra.mxu0 %v144
  %v566 = vpop.f32.mrf.mxu0
  %v567 = vadd.f32 %v168, %v566
  %568 = vmatmul.f32.gmra.mxu0 %v146
  %v569 = vpop.f32.mrf.mxu0
  %v570 = vadd.f32 %v168, %v569
  %571 = vdwg.mxu0
  %572 = vmatpush.msra.mxu0 0.0
  %573 = vmatpush.msra.mxu0 0.0
  %574 = vmatpush.msra.mxu0 0.0
  %575 = vmatpush.msra.mxu0 0.0
  %576 = vmatpush.msra.mxu0 0.0
  %577 = vmatpush.msra.mxu0 0.0
  %578 = vmatpush.msra.mxu0 0.0
  %579 = vmatpush.msra.mxu0 0.0
  %580 = vmatpush.msra.mxu0 0.0
  %581 = vmatpush.msra.mxu0 0.0
  %582 = vmatpush.msra.mxu0 0.0
  %583 = vmatpush.msra.mxu0 0.0
  %584 = vmatpush.msra.mxu0 0.0
  %585 = vmatpush.msra.mxu0 0.0
  %586 = vmatpush.msra.mxu0 %v165
  %587 = vmatpush.msra.mxu0 %v164
  %588 = vmatmul.f32.gmra.mxu0 %v172
  %v589 = vpop.f32.mrf.mxu0
  %v590 = vadd.f32 %v381, %v589
  %591 = vmatmul.f32.gmra.mxu0 %v175
  %v592 = vpop.f32.mrf.mxu0
  %v593 = vadd.f32 %v384, %v592
  %594 = vmatmul.f32.gmra.mxu0 %v178
  %v595 = vpop.f32.mrf.mxu0
  %v596 = vadd.f32 %v387, %v595
  %597 = vmatmul.f32.gmra.mxu0 %v181
  %v598 = vpop.f32.mrf.mxu0
  %v599 = vadd.f32 %v390, %v598
  %600 = vmatmul.f32.gmra.mxu0 %v184
  %v601 = vpop.f32.mrf.mxu0
  %v602 = vadd.f32 %v393, %v601
  %603 = vmatmul.f32.gmra.mxu0 %v187
  %v604 = vpop.f32.mrf.mxu0
  %v605 = vadd.f32 %v396, %v604
  %606 = vmatmul.f32.gmra.mxu0 %v190
  %v607 = vpop.f32.mrf.mxu0
  %v608 = vadd.f32 %v399, %v607
  %609 = vmatmul.f32.gmra.mxu0 %v193
  %v610 = vpop.f32.mrf.mxu0
  %v611 = vadd.f32 %v402, %v610
  %612 = vmatmul.f32.gmra.mxu0 %v196
  %v613 = vpop.f32.mrf.mxu0
  %v614 = vadd.f32 %v405, %v613
  %615 = vmatmul.f32.gmra.mxu0 %v199
  %v616 = vpop.f32.mrf.mxu0
  %v617 = vadd.f32 %v408, %v616
  %618 = vmatmul.f32.gmra.mxu0 %v202
  %v619 = vpop.f32.mrf.mxu0
  %v620 = vadd.f32 %v411, %v619
  %621 = vmatmul.f32.gmra.mxu0 %v205
  %v622 = vpop.f32.mrf.mxu0
  %v623 = vadd.f32 %v414, %v622
  %624 = vmatmul.f32.gmra.mxu0 %v208
  %v625 = vpop.f32.mrf.mxu0
  %v626 = vadd.f32 %v417, %v625
  %627 = vmatmul.f32.gmra.mxu0 %v211
  %v628 = vpop.f32.mrf.mxu0
  %v629 = vadd.f32 %v420, %v628
  %630 = vmatmul.f32.gmra.mxu0 %v214
  %v631 = vpop.f32.mrf.mxu0
  %v632 = vadd.f32 %v423, %v631
  %633 = vmatmul.f32.gmra.mxu0 %v217
  %v634 = vpop.f32.mrf.mxu0
  %v635 = vadd.f32 %v426, %v634
  %636 = vmatmul.f32.gmra.mxu0 %v220
  %v637 = vpop.f32.mrf.mxu0
  %v638 = vadd.f32 %v429, %v637
  %639 = vmatmul.f32.gmra.mxu0 %v223
  %v640 = vpop.f32.mrf.mxu0
  %v641 = vadd.f32 %v432, %v640
  %642 = vmatmul.f32.gmra.mxu0 %v226
  %v643 = vpop.f32.mrf.mxu0
  %v644 = vadd.f32 %v435, %v643
  %645 = vmatmul.f32.gmra.mxu0 %v229
  %v646 = vpop.f32.mrf.mxu0
  %v647 = vadd.f32 %v438, %v646
  %648 = vmatmul.f32.gmra.mxu0 %v232
  %v649 = vpop.f32.mrf.mxu0
  %v650 = vadd.f32 %v441, %v649
  %651 = vmatmul.f32.gmra.mxu0 %v235
  %v652 = vpop.f32.mrf.mxu0
  %v653 = vadd.f32 %v444, %v652
  %654 = vmatmul.f32.gmra.mxu0 %v238
  %v655 = vpop.f32.mrf.mxu0
  %v656 = vadd.f32 %v447, %v655
  %657 = vmatmul.f32.gmra.mxu0 %v241
  %v658 = vpop.f32.mrf.mxu0
  %v659 = vadd.f32 %v450, %v658
  %660 = vmatmul.f32.gmra.mxu0 %v244
  %v661 = vpop.f32.mrf.mxu0
  %v662 = vadd.f32 %v453, %v661
  %663 = vmatmul.f32.gmra.mxu0 %v247
  %v664 = vpop.f32.mrf.mxu0
  %v665 = vadd.f32 %v456, %v664
  %666 = vmatmul.f32.gmra.mxu0 %v250
  %v667 = vpop.f32.mrf.mxu0
  %v668 = vadd.f32 %v459, %v667
  %669 = vmatmul.f32.gmra.mxu0 %v253
  %v670 = vpop.f32.mrf.mxu0
  %v671 = vadd.f32 %v462, %v670
  %672 = vmatmul.f32.gmra.mxu0 %v256
  %v673 = vpop.f32.mrf.mxu0
  %v674 = vadd.f32 %v465, %v673
  %675 = vmatmul.f32.gmra.mxu0 %v259
  %v676 = vpop.f32.mrf.mxu0
  %v677 = vadd.f32 %v468, %v676
  %678 = vmatmul.f32.gmra.mxu0 %v262
  %v679 = vpop.f32.mrf.mxu0
  %v680 = vadd.f32 %v471, %v679
  %681 = vmatmul.f32.gmra.mxu0 %v265
  %v682 = vpop.f32.mrf.mxu0
  %v683 = vadd.f32 %v474, %v682
  %684 = vmatmul.f32.gmra.mxu0 %v268
  %v685 = vpop.f32.mrf.mxu0
  %v686 = vadd.f32 %v477, %v685
  %687 = vmatmul.f32.gmra.mxu0 %v271
  %v688 = vpop.f32.mrf.mxu0
  %v689 = vadd.f32 %v480, %v688
  %690 = vmatmul.f32.gmra.mxu0 %v274
  %v691 = vpop.f32.mrf.mxu0
  %v692 = vadd.f32 %v483, %v691
  %693 = vmatmul.f32.gmra.mxu0 %v277
  %v694 = vpop.f32.mrf.mxu0
  %v695 = vadd.f32 %v486, %v694
  %696 = vmatmul.f32.gmra.mxu0 %v280
  %v697 = vpop.f32.mrf.mxu0
  %v698 = vadd.f32 %v489, %v697
  %699 = vmatmul.f32.gmra.mxu0 %v283
  %v700 = vpop.f32.mrf.mxu0
  %v701 = vadd.f32 %v492, %v700
  %702 = vmatmul.f32.gmra.mxu0 %v286
  %v703 = vpop.f32.mrf.mxu0
  %v704 = vadd.f32 %v495, %v703
  %705 = vmatmul.f32.gmra.mxu0 %v289
  %v706 = vpop.f32.mrf.mxu0
  %v707 = vadd.f32 %v498, %v706
  %708 = vmatmul.f32.gmra.mxu0 %v292
  %v709 = vpop.f32.mrf.mxu0
  %v710 = vadd.f32 %v501, %v709
  %711 = vmatmul.f32.gmra.mxu0 %v295
  %v712 = vpop.f32.mrf.mxu0
  %v713 = vadd.f32 %v504, %v712
  %714 = vmatmul.f32.gmra.mxu0 %v298
  %v715 = vpop.f32.mrf.mxu0
  %v716 = vadd.f32 %v507, %v715
  %717 = vmatmul.f32.gmra.mxu0 %v301
  %v718 = vpop.f32.mrf.mxu0
  %v719 = vadd.f32 %v510, %v718
  %720 = vmatmul.f32.gmra.mxu0 %v304
  %v721 = vpop.f32.mrf.mxu0
  %v722 = vadd.f32 %v513, %v721
  %723 = vmatmul.f32.gmra.mxu0 %v307
  %v724 = vpop.f32.mrf.mxu0
  %v725 = vadd.f32 %v516, %v724
  %726 = vmatmul.f32.gmra.mxu0 %v310
  %v727 = vpop.f32.mrf.mxu0
  %v728 = vadd.f32 %v519, %v727
  %729 = vmatmul.f32.gmra.mxu0 %v313
  %v730 = vpop.f32.mrf.mxu0
  %v731 = vadd.f32 %v522, %v730
  %732 = vmatmul.f32.gmra.mxu0 %v316
  %v733 = vpop.f32.mrf.mxu0
  %v734 = vadd.f32 %v525, %v733
  %735 = vmatmul.f32.gmra.mxu0 %v319
  %v736 = vpop.f32.mrf.mxu0
  %v737 = vadd.f32 %v528, %v736
  %738 = vmatmul.f32.gmra.mxu0 %v322
  %v739 = vpop.f32.mrf.mxu0
  %v740 = vadd.f32 %v531, %v739
  %741 = vmatmul.f32.gmra.mxu0 %v325
  %v742 = vpop.f32.mrf.mxu0
  %v743 = vadd.f32 %v534, %v742
  %744 = vmatmul.f32.gmra.mxu0 %v328
  %v745 = vpop.f32.mrf.mxu0
  %v746 = vadd.f32 %v537, %v745
  %747 = vmatmul.f32.gmra.mxu0 %v331
  %v748 = vpop.f32.mrf.mxu0
  %v749 = vadd.f32 %v540, %v748
  %750 = vmatmul.f32.gmra.mxu0 %v334
  %v751 = vpop.f32.mrf.mxu0
  %v752 = vadd.f32 %v543, %v751
  %753 = vmatmul.f32.gmra.mxu0 %v337
  %v754 = vpop.f32.mrf.mxu0
  %v755 = vadd.f32 %v546, %v754
  %756 = vmatmul.f32.gmra.mxu0 %v340
  %v757 = vpop.f32.mrf.mxu0
  %v758 = vadd.f32 %v549, %v757
  %759 = vmatmul.f32.gmra.mxu0 %v343
  %v760 = vpop.f32.mrf.mxu0
  %v761 = vadd.f32 %v552, %v760
  %762 = vmatmul.f32.gmra.mxu0 %v346
  %v763 = vpop.f32.mrf.mxu0
  %v764 = vadd.f32 %v555, %v763
  %765 = vmatmul.f32.gmra.mxu0 %v349
  %v766 = vpop.f32.mrf.mxu0
  %v767 = vadd.f32 %v558, %v766
  %768 = vmatmul.f32.gmra.mxu0 %v352
  %v769 = vpop.f32.mrf.mxu0
  %v770 = vadd.f32 %v561, %v769
  %771 = vmatmul.f32.gmra.mxu0 %v355
  %v772 = vpop.f32.mrf.mxu0
  %v773 = vadd.f32 %v564, %v772
  %774 = vmatmul.f32.gmra.mxu0 %v358
  %v775 = vpop.f32.mrf.mxu0
  %v776 = vadd.f32 %v567, %v775
  %777 = vmatmul.f32.gmra.mxu0 %v361
  %v778 = vpop.f32.mrf.mxu0
  %v779 = vadd.f32 %v570, %v778
  %780 = vdwg.mxu0
  %v781 = vmax.f32 %v590, 0.0
  %v782 = vmax.f32 %v593, 0.0
  %v783 = vmax.f32 %v596, 0.0
  %v784 = vmax.f32 %v599, 0.0
  %v785 = vmax.f32 %v602, 0.0
  %v786 = vmax.f32 %v605, 0.0
  %v787 = vmax.f32 %v608, 0.0
  %v788 = vmax.f32 %v611, 0.0
  %v789 = vmax.f32 %v614, 0.0
  %v790 = vmax.f32 %v617, 0.0
  %v791 = vmax.f32 %v620, 0.0
  %v792 = vmax.f32 %v623, 0.0
  %v793 = vmax.f32 %v626, 0.0
  %v794 = vmax.f32 %v629, 0.0
  %v795 = vmax.f32 %v632, 0.0
  %v796 = vmax.f32 %v635, 0.0
  %v797 = vmax.f32 %v638, 0.0
  %v798 = vmax.f32 %v641, 0.0
  %v799 = vmax.f32 %v644, 0.0
  %v800 = vmax.f32 %v647, 0.0
  %v801 = vmax.f32 %v650, 0.0
  %v802 = vmax.f32 %v653, 0.0
  %v803 = vmax.f32 %v656, 0.0
  %v804 = vmax.f32 %v659, 0.0
  %v805 = vmax.f32 %v662, 0.0
  %v806 = vmax.f32 %v665, 0.0
  %v807 = vmax.f32 %v668, 0.0
  %v808 = vmax.f32 %v671, 0.0
  %v809 = vmax.f32 %v674, 0.0
  %v810 = vmax.f32 %v677, 0.0
  %v811 = vmax.f32 %v680, 0.0
  %v812 = vmax.f32 %v683, 0.0
  %v813 = vmax.f32 %v686, 0.0
  %v814 = vmax.f32 %v689, 0.0
  %v815 = vmax.f32 %v692, 0.0
  %v816 = vmax.f32 %v695, 0.0
  %v817 = vmax.f32 %v698, 0.0
  %v818 = vmax.f32 %v701, 0.0
  %v819 = vmax.f32 %v704, 0.0
  %v820 = vmax.f32 %v707, 0.0
  %v821 = vmax.f32 %v710, 0.0
  %v822 = vmax.f32 %v713, 0.0
  %v823 = vmax.f32 %v716, 0.0
  %v824 = vmax.f32 %v719, 0.0
  %v825 = vmax.f32 %v722, 0.0
  %v826 = vmax.f32 %v725, 0.0
  %v827 = vmax.f32 %v728, 0.0
  %v828 = vmax.f32 %v731, 0.0
  %v829 = vmax.f32 %v734, 0.0
  %v830 = vmax.f32 %v737, 0.0
  %v831 = vmax.f32 %v740, 0.0
  %v832 = vmax.f32 %v743, 0.0
  %v833 = vmax.f32 %v746, 0.0
  %v834 = vmax.f32 %v749, 0.0
  %v835 = vmax.f32 %v752, 0.0
  %v836 = vmax.f32 %v755, 0.0
  %v837 = vmax.f32 %v758, 0.0
  %v838 = vmax.f32 %v761, 0.0
  %v839 = vmax.f32 %v764, 0.0
  %v840 = vmax.f32 %v767, 0.0
  %v841 = vmax.f32 %v770, 0.0
  %v842 = vmax.f32 %v773, 0.0
  %v843 = vmax.f32 %v776, 0.0
  %v844 = vmax.f32 %v779, 0.0
  %v845 = vmax.f32 %v781, %v797
  %v846 = vmax.f32 %v782, %v798
  %v847 = vmax.f32 %v783, %v799
  %v848 = vmax.f32 %v784, %v800
  %v849 = vmax.f32 %v785, %v801
  %v850 = vmax.f32 %v786, %v802
  %v851 = vmax.f32 %v787, %v803
  %v852 = vmax.f32 %v788, %v804
  %v853 = vmax.f32 %v789, %v805
  %v854 = vmax.f32 %v790, %v806
  %v855 = vmax.f32 %v791, %v807
  %v856 = vmax.f32 %v792, %v808
  %v857 = vmax.f32 %v793, %v809
  %v858 = vmax.f32 %v794, %v810
  %v859 = vmax.f32 %v795, %v811
  %v860 = vmax.f32 %v796, %v812
  %v861 = vmax.f32 %v813, %v829
  %v862 = vmax.f32 %v814, %v830
  %v863 = vmax.f32 %v815, %v831
  %v864 = vmax.f32 %v816, %v832
  %v865 = vmax.f32 %v817, %v833
  %v866 = vmax.f32 %v818, %v834
  %v867 = vmax.f32 %v819, %v835
  %v868 = vmax.f32 %v820, %v836
  %v869 = vmax.f32 %v821, %v837
  %v870 = vmax.f32 %v822, %v838
  %v871 = vmax.f32 %v823, %v839
  %v872 = vmax.f32 %v824, %v840
  %v873 = vmax.f32 %v825, %v841
  %v874 = vmax.f32 %v826, %v842
  %v875 = vmax.f32 %v827, %v843
  %v876 = vmax.f32 %v828, %v844
  %v877 = vmax.f32 %v845, %v861
  %v878 = vmax.f32 %v846, %v862
  %v879 = vmax.f32 %v847, %v863
  %v880 = vmax.f32 %v848, %v864
  %v881 = vmax.f32 %v849, %v865
  %v882 = vmax.f32 %v850, %v866
  %v883 = vmax.f32 %v851, %v867
  %v884 = vmax.f32 %v852, %v868
  %v885 = vmax.f32 %v853, %v869
  %v886 = vmax.f32 %v854, %v870
  %v887 = vmax.f32 %v855, %v871
  %v888 = vmax.f32 %v856, %v872
  %v889 = vmax.f32 %v857, %v873
  %v890 = vmax.f32 %v858, %v874
  %v891 = vmax.f32 %v859, %v875
  %v892 = vmax.f32 %v860, %v876
  %vm893 = vcmask 261120
  %v894 = vsel %vm893, %v877, 0.0
  %v895 = vsel %vm893, %v878, 0.0
  %v896 = vadd.f32 %v894, %v895
  %v897 = vsel %vm893, %v879, 0.0
  %v898 = vadd.f32 %v896, %v897
  %v899 = vsel %vm893, %v880, 0.0
  %v900 = vadd.f32 %v898, %v899
  %v901 = vsel %vm893, %v881, 0.0
  %v902 = vadd.f32 %v900, %v901
  %v903 = vsel %vm893, %v882, 0.0
  %v904 = vadd.f32 %v902, %v903
  %v905 = vsel %vm893, %v883, 0.0
  %v906 = vadd.f32 %v904, %v905
  %v907 = vsel %vm893, %v884, 0.0
  %v908 = vadd.f32 %v906, %v907
  %v909 = vsel %vm893, %v885, 0.0
  %v910 = vadd.f32 %v908, %v909
  %v911 = vsel %vm893, %v886, 0.0
  %v912 = vadd.f32 %v910, %v911
  %v913 = vsel %vm893, %v887, 0.0
  %v914 = vadd.f32 %v912, %v913
  %v915 = vsel %vm893, %v888, 0.0
  %v916 = vadd.f32 %v914, %v915
  %v917 = vsel %vm893, %v889, 0.0
  %v918 = vadd.f32 %v916, %v917
  %v919 = vsel %vm893, %v890, 0.0
  %v920 = vadd.f32 %v918, %v919
  %v921 = vsel %vm893, %v891, 0.0
  %v922 = vadd.f32 %v920, %v921
  %v923 = vsel %vm893, %v892, 0.0
  %v924 = vadd.f32 %v922, %v923
  %v925 = vrot.slane %v924, 4
  %v926 = vadd.f32 %v924, %v925
  %v927 = vrot.slane %v926, 2
  %v928 = vadd.f32 %v926, %v927
  %v929 = vrot.slane %v928, 1
  %v930 = vadd.f32 %v928, %v929
  %v931 = vmul.f32 %v930, 0.0078125
  %v932 = vmul.f32 %v877, %v877
  %v933 = vmul.f32 %v878, %v878
  %v934 = vmul.f32 %v879, %v879
  %v935 = vmul.f32 %v880, %v880
  %v936 = vmul.f32 %v881, %v881
  %v937 = vmul.f32 %v882, %v882
  %v938 = vmul.f32 %v883, %v883
  %v939 = vmul.f32 %v884, %v884
  %v940 = vmul.f32 %v885, %v885
  %v941 = vmul.f32 %v886, %v886
  %v942 = vmul.f32 %v887, %v887
  %v943 = vmul.f32 %v888, %v888
  %v944 = vmul.f32 %v889, %v889
  %v945 = vmul.f32 %v890, %v890
  %v946 = vmul.f32 %v891, %v891
  %v947 = vmul.f32 %v892, %v892
  %v948 = vsel %vm893, %v932, 0.0
  %v949 = vsel %vm893, %v933, 0.0
  %v950 = vadd.f32 %v948, %v949
  %v951 = vsel %vm893, %v934, 0.0
  %v952 = vadd.f32 %v950, %v951
  %v953 = vsel %vm893, %v935, 0.0
  %v954 = vadd.f32 %v952, %v953
  %v955 = vsel %vm893, %v936, 0.0
  %v956 = vadd.f32 %v954, %v955
  %v957 = vsel %vm893, %v937, 0.0
  %v958 = vadd.f32 %v956, %v957
  %v959 = vsel %vm893, %v938, 0.0
  %v960 = vadd.f32 %v958, %v959
  %v961 = vsel %vm893, %v939, 0.0
  %v962 = vadd.f32 %v960, %v961
  %v963 = vsel %vm893, %v940, 0.0
  %v964 = vadd.f32 %v962, %v963
  %v965 = vsel %vm893, %v941, 0.0
  %v966 = vadd.f32 %v964, %v965
  %v967 = vsel %vm893, %v942, 0.0
  %v968 = vadd.f32 %v966, %v967
  %v969 = vsel %vm893, %v943, 0.0
  %v970 = vadd.f32 %v968, %v969
  %v971 = vsel %vm893, %v944, 0.0
  %v972 = vadd.f32 %v970, %v971
  %v973 = vsel %vm893, %v945, 0.0
  %v974 = vadd.f32 %v972, %v973
  %v975 = vsel %vm893, %v946, 0.0
  %v976 = vadd.f32 %v974, %v975
  %v977 = vsel %vm893, %v947, 0.0
  %v978 = vadd.f32 %v976, %v977
  %v979 = vrot.slane %v978, 4
  %v980 = vadd.f32 %v978, %v979
  %v981 = vrot.slane %v980, 2
  %v982 = vadd.f32 %v980, %v981
  %v983 = vrot.slane %v982, 1
  %v984 = vadd.f32 %v982, %v983
  %v985 = vmul.f32 %v984, 0.0078125
  %v986 = vmul.f32 %v931, %v931
  %v987 = vsub.f32 %v985, %v986
  %v988 = vadd.f32 %v987, 1e-05
  %v989 = vrsqrt.pop %v988
  %v990 = vmul.f32 %v989, %v988
  %v991 = vmul.f32 %v990, %v989
  %v992 = vmul.f32 0.5, %v991
  %v993 = vsub.f32 1.5, %v992
  %v994 = vmul.f32 %v989, %v993
  %vm995 = vweird.f32 %v988
  %vm996 = vweird.f32 %v989
  %vm997 = vmor %vm995, %vm996
  %v998 = vsel %vm997, %v989, %v994
  %v999 = vld [vmem:[%s3] sm:$0x1]
  %v1000 = vmul.f32 %v998, %v999
  %v1001 = vsub.f32 %v877, %v931
  %v1002 = vsub.f32 %v878, %v931
  %v1003 = vsub.f32 %v879, %v931
  %v1004 = vsub.f32 %v880, %v931
  %v1005 = vsub.f32 %v881, %v931
  %v1006 = vsub.f32 %v882, %v931
  %v1007 = vsub.f32 %v883, %v931
  %v1008 = vsub.f32 %v884, %v931
  %v1009 = vsub.f32 %v885, %v931
  %v1010 = vsub.f32 %v886, %v931
  %v1011 = vsub.f32 %v887, %v931
  %v1012 = vsub.f32 %v888, %v931
  %v1013 = vsub.f32 %v889, %v931
  %v1014 = vsub.f32 %v890, %v931
  %v1015 = vsub.f32 %v891, %v931
  %v1016 = vsub.f32 %v892, %v931
  %v1017 = vperm.slane %v1000, 0
  %v1018 = vmul.f32 %v1001, %v1017
  %v1019 = vmul.f32 %v1002, %v1017
  %v1020 = vmul.f32 %v1003, %v1017
  %v1021 = vmul.f32 %v1004, %v1017
  %v1022 = vmul.f32 %v1005, %v1017
  %v1023 = vmul.f32 %v1006, %v1017
  %v1024 = vmul.f32 %v1007, %v1017
  %v1025 = vmul.f32 %v1008, %v1017
  %v1026 = vmul.f32 %v1009, %v1017
  %v1027 = vmul.f32 %v1010, %v1017
  %v1028 = vmul.f32 %v1011, %v1017
  %v1029 = vmul.f32 %v1012, %v1017
  %v1030 = vmul.f32 %v1013, %v1017
  %v1031 = vmul.f32 %v1014, %v1017
  %v1032 = vmul.f32 %v1015, %v1017
  %v1033 = vmul.f32 %v1016, %v1017
  %v1034 = vld [vmem:[%s4] sm:$0x1]
  %v1036 = vperm.slane %v1034, 0
  %v1038 = vadd.f32 %v1018, %v1036
  %v1039 = vadd.f32 %v1019, %v1036
  %v1040 = vadd.f32 %v1020, %v1036
  %v1041 = vadd.f32 %v1021, %v1036
  %v1042 = vadd.f32 %v1022, %v1036
  %v1043 = vadd.f32 %v1023, %v1036
  %v1044 = vadd.f32 %v1024, %v1036
  %v1045 = vadd.f32 %v1025, %v1036
  %v1046 = vadd.f32 %v1026, %v1036
  %v1047 = vadd.f32 %v1027, %v1036
  %v1048 = vadd.f32 %v1028, %v1036
  %v1049 = vadd.f32 %v1029, %v1036
  %v1050 = vadd.f32 %v1030, %v1036
  %v1051 = vadd.f32 %v1031, %v1036
  %v1052 = vadd.f32 %v1032, %v1036
  %v1053 = vadd.f32 %v1033, %v1036
  %1054 = vst.msk [vmem:[%s5] sm:$0xff] %vm893, %v1038
  %1055 = vst.msk [vmem:[%s5 + $0x8] sm:$0xff] %vm893, %v1039
  %1056 = vst.msk [vmem:[%s5 + $0x10] sm:$0xff] %vm893, %v1040
  %1057 = vst.msk [vmem:[%s5 + $0x18] sm:$0xff] %vm893, %v1041
  %1058 = vst.msk [vmem:[%s5 + $0x20] sm:$0xff] %vm893, %v1042
  %1059 = vst.msk [vmem:[%s5 + $0x28] sm:$0xff] %vm893, %v1043
  %1060 = vst.msk [vmem:[%s5 + $0x30] sm:$0xff] %vm893, %v1044
  %1061 = vst.msk [vmem:[%s5 + $0x38] sm:$0xff] %vm893, %v1045
  %1062 = vst.msk [vmem:[%s5 + $0x40] sm:$0xff] %vm893, %v1046
  %1063 = vst.msk [vmem:[%s5 + $0x48] sm:$0xff] %vm893, %v1047
  %1064 = vst.msk [vmem:[%s5 + $0x50] sm:$0xff] %vm893, %v1048
  %1065 = vst.msk [vmem:[%s5 + $0x58] sm:$0xff] %vm893, %v1049
  %1066 = vst.msk [vmem:[%s5 + $0x60] sm:$0xff] %vm893, %v1050
  %1067 = vst.msk [vmem:[%s5 + $0x68] sm:$0xff] %vm893, %v1051
  %1068 = vst.msk [vmem:[%s5 + $0x70] sm:$0xff] %vm893, %v1052
  %1069 = vst.msk [vmem:[%s5 + $0x78] sm:$0xff] %vm893, %v1053
  // Predicated region
  $region22: #{pallas_forward.4} parent=0 // pred_check
    _
  $region23: #{pallas_forward.4} parent=0 // pred_check_branch
    %1071 = sbr.rel (0) target = $region25
  $region24: #{pallas_forward.4} parent=0 // pred_region
    _
  $region25: #{pallas_forward.4} parent=0 // pred_fallthru
    _
  // Predicated region
  $region26: #{pallas_forward.4} parent=0 // pred_check
    _
  $region27: #{pallas_forward.4} parent=0 // pred_check_branch
    %1073 = sbr.rel (0) target = $region29
  $region28: #{pallas_forward.4} parent=0 // pred_region
    _
  $region29: #{pallas_forward.4} parent=0 // pred_fallthru
    _

// kernel: tile.39
$region0: #{tile.39}
  %s0 = inlined_call_operand.vmem [shape: f32[32,4,32], index: 0, kind: input, shape index: {}]
  %s1 = inlined_call_operand.vmem [shape: f32[32,128], index: 1, kind: output, shape index: {}]
  $region1: #{tile.39} parent=0
    #allocation0 [shape = 'u8[131072]{0}', space=vmem, size = 0x20000, scoped, tag = 'scoped mem for input reshape']
    %s3 = ssub.s32 16, 1
    %s4 = scalar_lea.vmem %s0, 124
    %v5 = vld [vmem:[%s4] sm:%s3]
    %s6 = scalar_lea.vmem [#allocation0], 248
    %7 = vst [vmem:[%s6] sm:%s3] %v5
    %s8 = scalar_lea.vmem %s0, 120
    %v9 = vld [vmem:[%s8] sm:%s3]
    %s10 = scalar_lea.vmem [#allocation0], 240
    %11 = vst [vmem:[%s10] sm:%s3] %v9
    %s12 = scalar_lea.vmem %s0, 116
    %v13 = vld [vmem:[%s12] sm:%s3]
    %s14 = scalar_lea.vmem [#allocation0], 232
    %15 = vst [vmem:[%s14] sm:%s3] %v13
    %s16 = scalar_lea.vmem %s0, 112
    %v17 = vld [vmem:[%s16] sm:%s3]
    %s18 = scalar_lea.vmem [#allocation0], 224
    %19 = vst [vmem:[%s18] sm:%s3] %v17
    %s20 = scalar_lea.vmem %s0, 108
    %v21 = vld [vmem:[%s20] sm:%s3]
    %s22 = scalar_lea.vmem [#allocation0], 216
    %23 = vst [vmem:[%s22] sm:%s3] %v21
    %s24 = scalar_lea.vmem %s0, 104
    %v25 = vld [vmem:[%s24] sm:%s3]
    %s26 = scalar_lea.vmem [#allocation0], 208
    %27 = vst [vmem:[%s26] sm:%s3] %v25
    %s28 = scalar_lea.vmem %s0, 100
    %v29 = vld [vmem:[%s28] sm:%s3]
    %s30 = scalar_lea.vmem [#allocation0], 200
    %31 = vst [vmem:[%s30] sm:%s3] %v29
    %s32 = scalar_lea.vmem %s0, 96
    %v33 = vld [vmem:[%s32] sm:%s3]
    %s34 = scalar_lea.vmem [#allocation0], 192
    %35 = vst [vmem:[%s34] sm:%s3] %v33
    %s36 = scalar_lea.vmem %s0, 92
    %v37 = vld [vmem:[%s36] sm:%s3]
    %s38 = scalar_lea.vmem [#allocation0], 184
    %39 = vst [vmem:[%s38] sm:%s3] %v37
    %s40 = scalar_lea.vmem %s0, 88
    %v41 = vld [vmem:[%s40] sm:%s3]
    %s42 = scalar_lea.vmem [#allocation0], 176
    %43 = vst [vmem:[%s42] sm:%s3] %v41
    %s44 = scalar_lea.vmem %s0, 84
    %v45 = vld [vmem:[%s44] sm:%s3]
    %s46 = scalar_lea.vmem [#allocation0], 168
    %47 = vst [vmem:[%s46] sm:%s3] %v45
    %s48 = scalar_lea.vmem %s0, 80
    %v49 = vld [vmem:[%s48] sm:%s3]
    %s50 = scalar_lea.vmem [#allocation0], 160
    %51 = vst [vmem:[%s50] sm:%s3] %v49
    %s52 = scalar_lea.vmem %s0, 76
    %v53 = vld [vmem:[%s52] sm:%s3]
    %s54 = scalar_lea.vmem [#allocation0], 152
    %55 = vst [vmem:[%s54] sm:%s3] %v53
    %s56 = scalar_lea.vmem %s0, 72
    %v57 = vld [vmem:[%s56] sm:%s3]
    %s58 = scalar_lea.vmem [#allocation0], 144
    %59 = vst [vmem:[%s58] sm:%s3] %v57
    %s60 = scalar_lea.vmem %s0, 68
    %v61 = vld [vmem:[%s60] sm:%s3]
    %s62 = scalar_lea.vmem [#allocation0], 136
    %63 = vst [vmem:[%s62] sm:%s3] %v61
    %s64 = scalar_lea.vmem %s0, 64
    %v65 = vld [vmem:[%s64] sm:%s3]
    %s66 = scalar_lea.vmem [#allocation0], 128
    %67 = vst [vmem:[%s66] sm:%s3] %v65
    %s68 = scalar_lea.vmem %s0, 60
    %v69 = vld [vmem:[%s68] sm:%s3]
    %s70 = scalar_lea.vmem [#allocation0], 120
    %71 = vst [vmem:[%s70] sm:%s3] %v69
    %s72 = scalar_lea.vmem %s0, 56
    %v73 = vld [vmem:[%s72] sm:%s3]
    %s74 = scalar_lea.vmem [#allocation0], 112
    %75 = vst [vmem:[%s74] sm:%s3] %v73
    %s76 = scalar_lea.vmem %s0, 52
    %v77 = vld [vmem:[%s76] sm:%s3]
    %s78 = scalar_lea.vmem [#allocation0], 104
    %79 = vst [vmem:[%s78] sm:%s3] %v77
    %s80 = scalar_lea.vmem %s0, 48
    %v81 = vld [vmem:[%s80] sm:%s3]
    %s82 = scalar_lea.vmem [#allocation0], 96
    %83 = vst [vmem:[%s82] sm:%s3] %v81
    %s84 = scalar_lea.vmem %s0, 44
    %v85 = vld [vmem:[%s84] sm:%s3]
    %s86 = scalar_lea.vmem [#allocation0], 88
    %87 = vst [vmem:[%s86] sm:%s3] %v85
    %s88 = scalar_lea.vmem %s0, 40
    %v89 = vld [vmem:[%s88] sm:%s3]
    %s90 = scalar_lea.vmem [#allocation0], 80
    %91 = vst [vmem:[%s90] sm:%s3] %v89
    %s92 = scalar_lea.vmem %s0, 36
    %v93 = vld [vmem:[%s92] sm:%s3]
    %s94 = scalar_lea.vmem [#allocation0], 72
    %95 = vst [vmem:[%s94] sm:%s3] %v93
    %s96 = scalar_lea.vmem %s0, 32
    %v97 = vld [vmem:[%s96] sm:%s3]
    %s98 = scalar_lea.vmem [#allocation0], 64
    %99 = vst [vmem:[%s98] sm:%s3] %v97
    %s100 = scalar_lea.vmem %s0, 28
    %v101 = vld [vmem:[%s100] sm:%s3]
    %s102 = scalar_lea.vmem [#allocation0], 56
    %103 = vst [vmem:[%s102] sm:%s3] %v101
    %s104 = scalar_lea.vmem %s0, 24
    %v105 = vld [vmem:[%s104] sm:%s3]
    %s106 = scalar_lea.vmem [#allocation0], 48
    %107 = vst [vmem:[%s106] sm:%s3] %v105
    %s108 = scalar_lea.vmem %s0, 20
    %v109 = vld [vmem:[%s108] sm:%s3]
    %s110 = scalar_lea.vmem [#allocation0], 40
    %111 = vst [vmem:[%s110] sm:%s3] %v109
    %s112 = scalar_lea.vmem %s0, 16
    %v113 = vld [vmem:[%s112] sm:%s3]
    %s114 = scalar_lea.vmem [#allocation0], 32
    %115 = vst [vmem:[%s114] sm:%s3] %v113
    %s116 = scalar_lea.vmem %s0, 12
    %v117 = vld [vmem:[%s116] sm:%s3]
    %s118 = scalar_lea.vmem [#allocation0], 24
    %119 = vst [vmem:[%s118] sm:%s3] %v117
    %s120 = scalar_lea.vmem %s0, 8
    %v121 = vld [vmem:[%s120] sm:%s3]
    %s122 = scalar_lea.vmem [#allocation0], 16
    %123 = vst [vmem:[%s122] sm:%s3] %v121
    %s124 = scalar_lea.vmem %s0, 4
    %v125 = vld [vmem:[%s124] sm:%s3]
    %s126 = scalar_lea.vmem [#allocation0], 8
    %127 = vst [vmem:[%s126] sm:%s3] %v125
    %v128 = vld [vmem:[%s0] sm:%s3]
    %129 = vst [vmem:[#allocation0] sm:%s3] %v128
    %v130 = vld [vmem:[#allocation0] ss:$8 sm:$0xf]
    %v131 = vld [vmem:[#allocation0] ss:$8 sm:$0xf0]
    %vm132 = vcmask 1047556
    %v133 = vsel %vm132, %v131, %v130
    %vm134 = vcmask 261120
    %135 = vst.msk [vmem:[%s1] sm:$0xff] %vm134, %v133
    %s136 = scalar_lea.vmem [#allocation0], 64
    %v137 = vld [vmem:[%s136] ss:$8 sm:$0xf]
    %s138 = scalar_lea.vmem [#allocation0], 64
    %v139 = vld [vmem:[%s138] ss:$8 sm:$0xf0]
    %vm140 = vcmask 1047556
    %v141 = vsel %vm140, %v139, %v137
    %vm142 = vcmask 261120
    %s143 = scalar_lea.vmem %s1, 8
    %144 = vst.msk [vmem:[%s143] sm:$0xff] %vm142, %v141
    %s145 = scalar_lea.vmem [#allocation0], 128
    %v146 = vld [vmem:[%s145] ss:$8 sm:$0xf]
    %s147 = scalar_lea.vmem [#allocation0], 128
    %v148 = vld [vmem:[%s147] ss:$8 sm:$0xf0]
    %vm149 = vcmask 1047556
    %v150 = vsel %vm149, %v148, %v146
    %vm151 = vcmask 261120
    %s152 = scalar_lea.vmem %s1, 16
    %153 = vst.msk [vmem:[%s152] sm:$0xff] %vm151, %v150
    %s154 = scalar_lea.vmem [#allocation0], 192
    %v155 = vld [vmem:[%s154] ss:$8 sm:$0xf]
    %s156 = scalar_lea.vmem [#allocation0], 192
    %v157 = vld [vmem:[%s156] ss:$8 sm:$0xf0]
    %vm158 = vcmask 1047556
    %v159 = vsel %vm158, %v157, %v155
    %vm160 = vcmask 261120
    %s161 = scalar_lea.vmem %s1, 24
    %162 = vst.msk [vmem:[%s161] sm:$0xff] %vm160, %v159
    %s163 = scalar_lea.vmem [#allocation0], 3
    %v164 = vld [vmem:[%s163] ss:$8 sm:$0xf]
    %s165 = scalar_lea.vmem [#allocation0], 3
    %v166 = vld [vmem:[%s165] ss:$8 sm:$0xf0]
    %vm167 = vcmask 1047556
    %v168 = vsel %vm167, %v166, %v164
    %169 = vrot.lane.b32.xlu0 %v168, 96
    %v170 = vpop.permute.xlu0 %169
    %vm171 = vcmask 1048320
    %172 = vst.msk [vmem:[%s1] sm:$0xff] %vm171, %v170
    %s173 = scalar_lea.vmem [#allocation0], 67
    %v174 = vld [vmem:[%s173] ss:$8 sm:$0xf]
    %s175 = scalar_lea.vmem [#allocation0], 67
    %v176 = vld [vmem:[%s175] ss:$8 sm:$0xf0]
    %vm177 = vcmask 1047556
    %v178 = vsel %vm177, %v176, %v174
    %179 = vrot.lane.b32.xlu0 %v178, 96
    %v180 = vpop.permute.xlu0 %179
    %vm181 = vcmask 1048320
    %s182 = scalar_lea.vmem %s1, 8
    %183 = vst.msk [vmem:[%s182] sm:$0xff] %vm181, %v180
    %s184 = scalar_lea.vmem [#allocation0], 131
    %v185 = vld [vmem:[%s184] ss:$8 sm:$0xf]
    %s186 = scalar_lea.vmem [#allocation0], 131
    %v187 = vld [vmem:[%s186] ss:$8 sm:$0xf0]
    %vm188 = vcmask 1047556
    %v189 = vsel %vm188, %v187, %v185
    %190 = vrot.lane.b32.xlu0 %v189, 96
    %v191 = vpop.permute.xlu0 %190
    %vm192 = vcmask 1048320
    %s193 = scalar_lea.vmem %s1, 16
    %194 = vst.msk [vmem:[%s193] sm:$0xff] %vm192, %v191
    %s195 = scalar_lea.vmem [#allocation0], 195
    %v196 = vld [vmem:[%s195] ss:$8 sm:$0xf]
    %s197 = scalar_lea.vmem [#allocation0], 195
    %v198 = vld [vmem:[%s197] ss:$8 sm:$0xf0]
    %vm199 = vcmask 1047556
    %v200 = vsel %vm199, %v198, %v196
    %201 = vrot.lane.b32.xlu0 %v200, 96
    %v202 = vpop.permute.xlu0 %201
    %vm203 = vcmask 1048320
    %s204 = scalar_lea.vmem %s1, 24
    %205 = vst.msk [vmem:[%s204] sm:$0xff] %vm203, %v202
    %s206 = scalar_lea.vmem [#allocation0], 2
    %v207 = vld [vmem:[%s206] ss:$8 sm:$0xf]
    %s208 = scalar_lea.vmem [#allocation0], 2
    %v209 = vld [vmem:[%s208] ss:$8 sm:$0xf0]
    %vm210 = vcmask 1047556
    %v211 = vsel %vm210, %v209, %v207
    %212 = vrot.lane.b32.xlu0 %v211, 64
    %v213 = vpop.permute.xlu0 %212
    %vm214 = vcmask 785920
    %215 = vst.msk [vmem:[%s1] sm:$0xff] %vm214, %v213
    %s216 = scalar_lea.vmem [#allocation0], 66
    %v217 = vld [vmem:[%s216] ss:$8 sm:$0xf]
    %s218 = scalar_lea.vmem [#allocation0], 66
    %v219 = vld [vmem:[%s218] ss:$8 sm:$0xf0]
    %vm220 = vcmask 1047556
    %v221 = vsel %vm220, %v219, %v217
    %222 = vrot.lane.b32.xlu0 %v221, 64
    %v223 = vpop.permute.xlu0 %222
    %vm224 = vcmask 785920
    %s225 = scalar_lea.vmem %s1, 8
    %226 = vst.msk [vmem:[%s225] sm:$0xff] %vm224, %v223
    %s227 = scalar_lea.vmem [#allocation0], 130
    %v228 = vld [vmem:[%s227] ss:$8 sm:$0xf]
    %s229 = scalar_lea.vmem [#allocation0], 130
    %v230 = vld [vmem:[%s229] ss:$8 sm:$0xf0]
    %vm231 = vcmask 1047556
    %v232 = vsel %vm231, %v230, %v228
    %233 = vrot.lane.b32.xlu0 %v232, 64
    %v234 = vpop.permute.xlu0 %233
    %vm235 = vcmask 785920
    %s236 = scalar_lea.vmem %s1, 16
    %237 = vst.msk [vmem:[%s236] sm:$0xff] %vm235, %v234
    %s238 = scalar_lea.vmem [#allocation0], 194
    %v239 = vld [vmem:[%s238] ss:$8 sm:$0xf]
    %s240 = scalar_lea.vmem [#allocation0], 194
    %v241 = vld [vmem:[%s240] ss:$8 sm:$0xf0]
    %vm242 = vcmask 1047556
    %v243 = vsel %vm242, %v241, %v239
    %244 = vrot.lane.b32.xlu0 %v243, 64
    %v245 = vpop.permute.xlu0 %244
    %vm246 = vcmask 785920
    %s247 = scalar_lea.vmem %s1, 24
    %248 = vst.msk [vmem:[%s247] sm:$0xff] %vm246, %v245
    %s249 = scalar_lea.vmem [#allocation0], 1
    %v250 = vld [vmem:[%s249] ss:$8 sm:$0xf]
    %s251 = scalar_lea.vmem [#allocation0], 1
    %v252 = vld [vmem:[%s251] ss:$8 sm:$0xf0]
    %vm253 = vcmask 1047556
    %v254 = vsel %vm253, %v252, %v250
    %255 = vrot.lane.b32.xlu0 %v254, 32
    %v256 = vpop.permute.xlu0 %255
    %vm257 = vcmask 523520
    %258 = vst.msk [vmem:[%s1] sm:$0xff] %vm257, %v256
    %s259 = scalar_lea.vmem [#allocation0], 65
    %v260 = vld [vmem:[%s259] ss:$8 sm:$0xf]
    %s261 = scalar_lea.vmem [#allocation0], 65
    %v262 = vld [vmem:[%s261] ss:$8 sm:$0xf0]
    %vm263 = vcmask 1047556
    %v264 = vsel %vm263, %v262, %v260
    %265 = vrot.lane.b32.xlu0 %v264, 32
    %v266 = vpop.permute.xlu0 %265
    %vm267 = vcmask 523520
    %s268 = scalar_lea.vmem %s1, 8
    %269 = vst.msk [vmem:[%s268] sm:$0xff] %vm267, %v266
    %s270 = scalar_lea.vmem [#allocation0], 129
    %v271 = vld [vmem:[%s270] ss:$8 sm:$0xf]
    %s272 = scalar_lea.vmem [#allocation0], 129
    %v273 = vld [vmem:[%s272] ss:$8 sm:$0xf0]
    %vm274 = vcmask 1047556
    %v275 = vsel %vm274, %v273, %v271
    %276 = vrot.lane.b32.xlu0 %v275, 32
    %v277 = vpop.permute.xlu0 %276
    %vm278 = vcmask 523520
    %s279 = scalar_lea.vmem %s1, 16
    %280 = vst.msk [vmem:[%s279] sm:$0xff] %vm278, %v277
    %s281 = scalar_lea.vmem [#allocation0], 193
    %v282 = vld [vmem:[%s281] ss:$8 sm:$0xf]
    %s283 = scalar_lea.vmem [#allocation0], 193
    %v284 = vld [vmem:[%s283] ss:$8 sm:$0xf0]
    %vm285 = vcmask 1047556
    %v286 = vsel %vm285, %v284, %v282
    %287 = vrot.lane.b32.xlu0 %v286, 32
    %v288 = vpop.permute.xlu0 %287
    %vm289 = vcmask 523520
    %s290 = scalar_lea.vmem %s1, 24
    %291 = vst.msk [vmem:[%s290] sm:$0xff] %vm289, %v288

// kernel: tile.28
$region0: #{tile.28}
  #allocation0 [shape = 's32[1]{0}', space=sflag, size = 0x4, scoped, tag = 'scoped memory for tile.28']
  %s0 = inlined_call_operand.vmem [shape: f32[16], index: 0, kind: input, shape index: {}]
  %s1 = inlined_call_operand.vmem [shape: f32[16,16], index: 1, kind: output, shape index: {}]
  // Predicated region
  $region2: #{tile.28} parent=0 // pred_check
    _
  $region3: #{tile.28} parent=0 // pred_check_branch
    %3 = sbr.rel (0) target = $region5
  $region4: #{tile.28} parent=0 // pred_region
    _
  $region5: #{tile.28} parent=0 // pred_fallthru
    _
  %v4 = vld [vmem:[%s0] ss:$0 sm:$0xff]
  %5 = vst [vmem:[%s1] sm:$0xff] %v4
  %s6 = scalar_lea.vmem %s1, 8
  %7 = vst [vmem:[%s6] sm:$0xff] %v4

// kernel: tile.29
$region0: #{tile.29}
  %s0 = inlined_call_operand.vmem [shape: f32[16,16], index: 0, kind: input, shape index: {}]
  %s1 = inlined_call_operand.vmem [shape: f32[1,256], index: 1, kind: output, shape index: {}]
  $region1: #{tile.29} parent=0
    #allocation0 [shape = 'u8[8192]{0}', space=vmem, size = 0x2000, scoped, tag = 'scoped mem for output reshape']
    %s2 = smov 3
    %v3 = vld [vmem:[%s0] ss:$8 sm:%s2]
    %vm4 = vcmask 130048
    %5 = vst.msk [vmem:[#allocation0] ss:$8 sm:$0x3] %vm4, %v3
    %s6 = scalar_lea.vmem %s0, 7
    %s7 = smov 3
    %v8 = vld [vmem:[%s6] ss:$8 sm:%s7]
    %9 = vrot.lane.b32.xlu0 %v8, 112
    %v10 = vpop.permute.xlu0 %9
    %vm11 = vcmask 1048448
    %12 = vst.msk [vmem:[#allocation0] ss:$8 sm:$0x3] %vm11, %v10
    %s13 = scalar_lea.vmem %s0, 6
    %s14 = smov 3
    %v15 = vld [vmem:[%s13] ss:$8 sm:%s14]
    %16 = vrot.lane.b32.xlu0 %v15, 96
    %v17 = vpop.permute.xlu0 %16
    %vm18 = vcmask 917248
    %19 = vst.msk [vmem:[#allocation0] ss:$8 sm:$0x3] %vm18, %v17
    %s20 = scalar_lea.vmem %s0, 5
    %s21 = smov 3
    %v22 = vld [vmem:[%s20] ss:$8 sm:%s21]
    %23 = vrot.lane.b32.xlu0 %v22, 80
    %v24 = vpop.permute.xlu0 %23
    %vm25 = vcmask 786048
    %26 = vst.msk [vmem:[#allocation0] ss:$8 sm:$0x3] %vm25, %v24
    %s27 = scalar_lea.vmem %s0, 4
    %s28 = smov 3
    %v29 = vld [vmem:[%s27] ss:$8 sm:%s28]
    %30 = vrot.lane.b32.xlu0 %v29, 64
    %v31 = vpop.permute.xlu0 %30
    %vm32 = vcmask 654848
    %33 = vst.msk [vmem:[#allocation0] ss:$8 sm:$0x3] %vm32, %v31
    %s34 = scalar_lea.vmem %s0, 3
    %s35 = smov 3
    %v36 = vld [vmem:[%s34] ss:$8 sm:%s35]
    %37 = vrot.lane.b32.xlu0 %v36, 48
    %v38 = vpop.permute.xlu0 %37
    %vm39 = vcmask 523648
    %40 = vst.msk [vmem:[#allocation0] ss:$8 sm:$0x3] %vm39, %v38
    %s41 = scalar_lea.vmem %s0, 2
    %s42 = smov 3
    %v43 = vld [vmem:[%s41] ss:$8 sm:%s42]
    %44 = vrot.lane.b32.xlu0 %v43, 32
    %v45 = vpop.permute.xlu0 %44
    %vm46 = vcmask 392448
    %47 = vst.msk [vmem:[#allocation0] ss:$8 sm:$0x3] %vm46, %v45
    %s48 = scalar_lea.vmem %s0, 1
    %s49 = smov 3
    %v50 = vld [vmem:[%s48] ss:$8 sm:%s49]
    %51 = vrot.lane.b32.xlu0 %v50, 16
    %v52 = vpop.permute.xlu0 %51
    %vm53 = vcmask 261248
    %54 = vst.msk [vmem:[#allocation0] ss:$8 sm:$0x3] %vm53, %v52
    %s56 = ssub.s32 2, 1
    %v57 = vld [vmem:[#allocation0] sm:%s56]
    %s59 = ssub.s32 2, 1
    %60 = vst [vmem:[%s1] sm:%s59] %v57
    %s61 = scalar_lea.vmem [#allocation0], 8
    %v62 = vld [vmem:[%s61] sm:%s56]
    %s64 = ssub.s32 2, 1
    %s65 = scalar_lea.vmem %s1, 1
    %66 = vst [vmem:[%s65] sm:%s64] %v62

// kernel: tile.33
$region0: #{tile.33}
  #allocation0 [shape = 's32[1]{0}', space=sflag, size = 0x4, scoped, tag = 'scoped memory for tile.33']
  %s0 = inlined_call_operand.vmem [shape: f32[3], index: 0, kind: input, shape index: {}]
  %s1 = inlined_call_operand.vmem [shape: f32[16,3], index: 1, kind: output, shape index: {}]
  // Predicated region
  $region2: #{tile.33} parent=0 // pred_check
    _
  $region3: #{tile.33} parent=0 // pred_check_branch
    %3 = sbr.rel (0) target = $region5
  $region4: #{tile.33} parent=0 // pred_region
    _
  $region5: #{tile.33} parent=0 // pred_fallthru
    _
  %v4 = vld [vmem:[%s0] ss:$0 sm:$0xff]
  %5 = vst [vmem:[%s1] sm:$0xff] %v4
  %s6 = scalar_lea.vmem %s1, 8
  %7 = vst [vmem:[%s6] sm:$0xff] %v4

// kernel: tile.34
$region0: #{tile.34}
  %s0 = inlined_call_operand.vmem [shape: f32[16,3], index: 0, kind: input, shape index: {}]
  %s1 = inlined_call_operand.vmem [shape: f32[1,48], index: 1, kind: output, shape index: {}]
  $region1: #{tile.34} parent=0
    #allocation0 [shape = 'u8[4096]{0}', space=vmem, size = 0x1000, scoped, tag = 'scoped mem for output reshape']
    %v2 = vld [vmem:[%s0] sm:$0x1]
    %vm3 = vcmask 23552
    %4 = vst.msk [vmem:[#allocation0] sm:$0x1] %vm3, %v2
    %s5 = scalar_lea.vmem %s0, 15
    %v6 = vld [vmem:[%s5] sm:$0x1]
    %7 = vrot.lane.b32.xlu0 %v6, 45
    %v8 = vpop.permute.xlu0 %7
    %vm9 = vcmask 392552
    %10 = vst.msk [vmem:[#allocation0] sm:$0x1] %vm9, %v8
    %s11 = scalar_lea.vmem %s0, 14
    %v12 = vld [vmem:[%s11] sm:$0x1]
    %13 = vrot.lane.b32.xlu0 %v12, 42
    %v14 = vpop.permute.xlu0 %13
    %vm15 = vcmask 367952
    %16 = vst.msk [vmem:[#allocation0] sm:$0x1] %vm15, %v14
    %s17 = scalar_lea.vmem %s0, 13
    %v18 = vld [vmem:[%s17] sm:$0x1]
    %19 = vrot.lane.b32.xlu0 %v18, 39
    %v20 = vpop.permute.xlu0 %19
    %vm21 = vcmask 343352
    %22 = vst.msk [vmem:[#allocation0] sm:$0x1] %vm21, %v20
    %s23 = scalar_lea.vmem %s0, 12
    %v24 = vld [vmem:[%s23] sm:$0x1]
    %25 = vrot.lane.b32.xlu0 %v24, 36
    %v26 = vpop.permute.xlu0 %25
    %vm27 = vcmask 318752
    %28 = vst.msk [vmem:[#allocation0] sm:$0x1] %vm27, %v26
    %s29 = scalar_lea.vmem %s0, 11
    %v30 = vld [vmem:[%s29] sm:$0x1]
    %31 = vrot.lane.b32.xlu0 %v30, 33
    %v32 = vpop.permute.xlu0 %31
    %vm33 = vcmask 294152
    %34 = vst.msk [vmem:[#allocation0] sm:$0x1] %vm33, %v32
    %s35 = scalar_lea.vmem %s0, 10
    %v36 = vld [vmem:[%s35] sm:$0x1]
    %37 = vrot.lane.b32.xlu0 %v36, 30
    %v38 = vpop.permute.xlu0 %37
    %vm39 = vcmask 269552
    %40 = vst.msk [vmem:[#allocation0] sm:$0x1] %vm39, %v38
    %s41 = scalar_lea.vmem %s0, 9
    %v42 = vld [vmem:[%s41] sm:$0x1]
    %43 = vrot.lane.b32.xlu0 %v42, 27
    %v44 = vpop.permute.xlu0 %43
    %vm45 = vcmask 244952
    %46 = vst.msk [vmem:[#allocation0] sm:$0x1] %vm45, %v44
    %s47 = scalar_lea.vmem %s0, 8
    %v48 = vld [vmem:[%s47] sm:$0x1]
    %49 = vrot.lane.b32.xlu0 %v48, 24
    %v50 = vpop.permute.xlu0 %49
    %vm51 = vcmask 220352
    %52 = vst.msk [vmem:[#allocation0] sm:$0x1] %vm51, %v50
    %s53 = scalar_lea.vmem %s0, 7
    %v54 = vld [vmem:[%s53] sm:$0x1]
    %55 = vrot.lane.b32.xlu0 %v54, 21
    %v56 = vpop.permute.xlu0 %55
    %vm57 = vcmask 195752
    %58 = vst.msk [vmem:[#allocation0] sm:$0x1] %vm57, %v56
    %s59 = scalar_lea.vmem %s0, 6
    %v60 = vld [vmem:[%s59] sm:$0x1]
    %61 = vrot.lane.b32.xlu0 %v60, 18
    %v62 = vpop.permute.xlu0 %61
    %vm63 = vcmask 171152
    %64 = vst.msk [vmem:[#allocation0] sm:$0x1] %vm63, %v62
    %s65 = scalar_lea.vmem %s0, 5
    %v66 = vld [vmem:[%s65] sm:$0x1]
    %67 = vrot.lane.b32.xlu0 %v66, 15
    %v68 = vpop.permute.xlu0 %67
    %vm69 = vcmask 146552
    %70 = vst.msk [vmem:[#allocation0] sm:$0x1] %vm69, %v68
    %s71 = scalar_lea.vmem %s0, 4
    %v72 = vld [vmem:[%s71] sm:$0x1]
    %73 = vrot.lane.b32.xlu0 %v72, 12
    %v74 = vpop.permute.xlu0 %73
    %vm75 = vcmask 121952
    %76 = vst.msk [vmem:[#allocation0] sm:$0x1] %vm75, %v74
    %s77 = scalar_lea.vmem %s0, 3
    %v78 = vld [vmem:[%s77] sm:$0x1]
    %79 = vrot.lane.b32.xlu0 %v78, 9
    %v80 = vpop.permute.xlu0 %79
    %vm81 = vcmask 97352
    %82 = vst.msk [vmem:[#allocation0] sm:$0x1] %vm81, %v80
    %s83 = scalar_lea.vmem %s0, 2
    %v84 = vld [vmem:[%s83] sm:$0x1]
    %85 = vrot.lane.b32.xlu0 %v84, 6
    %v86 = vpop.permute.xlu0 %85
    %vm87 = vcmask 72752
    %88 = vst.msk [vmem:[#allocation0] sm:$0x1] %vm87, %v86
    %s89 = scalar_lea.vmem %s0, 1
    %v90 = vld [vmem:[%s89] sm:$0x1]
    %91 = vrot.lane.b32.xlu0 %v90, 3
    %v92 = vpop.permute.xlu0 %91
    %vm93 = vcmask 48152
    %94 = vst.msk [vmem:[#allocation0] sm:$0x1] %vm93, %v92
    %s96 = ssub.s32 2, 1
    %v97 = vld [vmem:[#allocation0] sm:%s96]
    %s99 = ssub.s32 2, 1
    %100 = vst [vmem:[%s1] sm:%s99] %v97

// kernel: tile.23
$region0: #{tile.23}
  #allocation0 [shape = 's32[1]{0}', space=sflag, size = 0x4, scoped, tag = 'scoped memory for tile.23']
  %s0 = inlined_call_operand.vmem [shape: f32[32], index: 0, kind: input, shape index: {}]
  %s1 = inlined_call_operand.vmem [shape: f32[4,32], index: 1, kind: output, shape index: {}]
  // Predicated region
  $region2: #{tile.23} parent=0 // pred_check
    _
  $region3: #{tile.23} parent=0 // pred_check_branch
    %3 = sbr.rel (0) target = $region5
  $region4: #{tile.23} parent=0 // pred_region
    _
  $region5: #{tile.23} parent=0 // pred_fallthru
    _
  %v4 = vld [vmem:[%s0] ss:$0 sm:$0xff]
  %5 = vst [vmem:[%s1] sm:$0xf] %v4

// kernel: tile.24
$region0: #{tile.24}
  %s0 = inlined_call_operand.vmem [shape: f32[4,32], index: 0, kind: input, shape index: {}]
  %s1 = inlined_call_operand.vmem [shape: f32[1,128], index: 1, kind: output, shape index: {}]
  $region1: #{tile.24} parent=0
    #allocation0 [shape = 'u8[4096]{0}', space=vmem, size = 0x1000, scoped, tag = 'scoped mem for output reshape']
    #allocation1 [shape = 'u8[4096]{0}', space=vmem, size = 0x1000, scoped, tag = 'scoped mem for input reshape']
    %s3 = ssub.s32 16, 1
    %v4 = vld [vmem:[%s0] sm:%s3]
    %5 = vst [vmem:[#allocation1] sm:%s3] %v4
    %v6 = vld [vmem:[#allocation1] sm:$0x1]
    %vm7 = vcmask 261120
    %8 = vst.msk [vmem:[#allocation0] sm:$0x1] %vm7, %v6
    %s9 = scalar_lea.vmem [#allocation1], 3
    %v10 = vld [vmem:[%s9] sm:$0x1]
    %11 = vrot.lane.b32.xlu0 %v10, 96
    %v12 = vpop.permute.xlu0 %11
    %vm13 = vcmask 1048320
    %14 = vst.msk [vmem:[#allocation0] sm:$0x1] %vm13, %v12
    %s15 = scalar_lea.vmem [#allocation1], 2
    %v16 = vld [vmem:[%s15] sm:$0x1]
    %17 = vrot.lane.b32.xlu0 %v16, 64
    %v18 = vpop.permute.xlu0 %17
    %vm19 = vcmask 785920
    %20 = vst.msk [vmem:[#allocation0] sm:$0x1] %vm19, %v18
    %s21 = scalar_lea.vmem [#allocation1], 1
    %v22 = vld [vmem:[%s21] sm:$0x1]
    %23 = vrot.lane.b32.xlu0 %v22, 32
    %v24 = vpop.permute.xlu0 %23
    %vm25 = vcmask 523520
    %26 = vst.msk [vmem:[#allocation0] sm:$0x1] %vm25, %v24
    %s28 = ssub.s32 2, 1
    %v29 = vld [vmem:[#allocation0] sm:%s28]
    %s31 = ssub.s32 2, 1
    %32 = vst [vmem:[%s1] sm:%s31] %v29

// kernel: pallas_forward.5
$region0: #{pallas_forward.5}
  #allocation0 [shape = 'u32[]', space=smem, size = 0x4, offset = 0x4, fixed_abs, tag = 'smem constant byte address 0x4 - core index']
  #allocation1 [shape = 'u32[72,128]{1,0:T(1,128)}', space=vmem, size = 0x9000, scoped, tag = 'internal scratch']
  %s0 = inlined_call_operand.vmem [shape: f32[128,288], index: 0, kind: input, shape index: {}]
  %s1 = inlined_call_operand.vmem [shape: f32[288,3], index: 1, kind: input, shape index: {}]
  %s2 = inlined_call_operand.vmem [shape: f32[1,3], index: 2, kind: input, shape index: {}]
  %s3 = inlined_call_operand.vmem [shape: f32[3,128], index: 3, kind: input, shape index: {}]
  %s4 = inlined_call_operand.vmem [shape: f32[1,128], index: 4, kind: input, shape index: {}]
  %s5 = inlined_call_operand.vmem [shape: f32[1,32], index: 5, kind: input, shape index: {}]
  %s6 = inlined_call_operand.vmem [shape: f32[1,32], index: 6, kind: input, shape index: {}]
  %s7 = inlined_call_operand.vmem [shape: f32[128,32], index: 7, kind: input, shape index: {}]
  %s8 = inlined_call_operand.vmem [shape: f32[32,128], index: 8, kind: input, shape index: {}]
  %s9 = inlined_call_operand.vmem [shape: f32[128,256], index: 9, kind: input, shape index: {}]
  %s10 = inlined_call_operand.vmem [shape: f32[1,256], index: 10, kind: input, shape index: {}]
  %s11 = inlined_call_operand.vmem [shape: f32[256,48], index: 11, kind: input, shape index: {}]
  %s12 = inlined_call_operand.vmem [shape: f32[1,48], index: 12, kind: input, shape index: {}]
  %s13 = inlined_call_operand.vmem [shape: f32[32,3], index: 13, kind: output, shape index: {0}]
  %s14 = inlined_call_operand.vmem [shape: f32[32,48], index: 14, kind: output, shape index: {1}]
  %15 = xla_tuple %s13, %s14
  %s16 = sld [smem:[#allocation0]]
  $region70: #{pallas_forward.5} parent=0
    _
  %s18 = ssub.s32 1, %s16
  %s19 = scalar_select 0, %s18, %s16
  // Predicated region
  $region2: #{pallas_forward.5} parent=0 // pred_check
    _
  $region3: #{pallas_forward.5} parent=0 // pred_check_branch
    %21 = sbr.rel (0) target = $region5
  $region4: #{pallas_forward.5} parent=0 // pred_region
    _
  $region5: #{pallas_forward.5} parent=0 // pred_fallthru
    _
  // Predicated region
  $region6: #{pallas_forward.5} parent=0 // pred_check
    _
  $region7: #{pallas_forward.5} parent=0 // pred_check_branch
    %23 = sbr.rel (0) target = $region9
  $region8: #{pallas_forward.5} parent=0 // pred_region
    _
  $region9: #{pallas_forward.5} parent=0 // pred_fallthru
    _
  // Predicated region
  $region10: #{pallas_forward.5} parent=0 // pred_check
    _
  $region11: #{pallas_forward.5} parent=0 // pred_check_branch
    %25 = sbr.rel (0) target = $region13
  $region12: #{pallas_forward.5} parent=0 // pred_region
    _
  $region13: #{pallas_forward.5} parent=0 // pred_fallthru
    _
  // Predicated region
  $region14: #{pallas_forward.5} parent=0 // pred_check
    _
  $region15: #{pallas_forward.5} parent=0 // pred_check_branch
    %27 = sbr.rel (0) target = $region17
  $region16: #{pallas_forward.5} parent=0 // pred_region
    _
  $region17: #{pallas_forward.5} parent=0 // pred_fallthru
    _
  // Predicated region
  $region18: #{pallas_forward.5} parent=0 // pred_check
    _
  $region19: #{pallas_forward.5} parent=0 // pred_check_branch
    %29 = sbr.rel (0) target = $region21
  $region20: #{pallas_forward.5} parent=0 // pred_region
    _
  $region21: #{pallas_forward.5} parent=0 // pred_fallthru
    _
  // Predicated region
  $region22: #{pallas_forward.5} parent=0 // pred_check
    _
  $region23: #{pallas_forward.5} parent=0 // pred_check_branch
    %31 = sbr.rel (0) target = $region25
  $region24: #{pallas_forward.5} parent=0 // pred_region
    _
  $region25: #{pallas_forward.5} parent=0 // pred_fallthru
    _
  // Predicated region
  $region26: #{pallas_forward.5} parent=0 // pred_check
    _
  $region27: #{pallas_forward.5} parent=0 // pred_check_branch
    %33 = sbr.rel (0) target = $region29
  $region28: #{pallas_forward.5} parent=0 // pred_region
    _
  $region29: #{pallas_forward.5} parent=0 // pred_fallthru
    _
  // Predicated region
  $region30: #{pallas_forward.5} parent=0 // pred_check
    _
  $region31: #{pallas_forward.5} parent=0 // pred_check_branch
    %35 = sbr.rel (0) target = $region33
  $region32: #{pallas_forward.5} parent=0 // pred_region
    _
  $region33: #{pallas_forward.5} parent=0 // pred_fallthru
    _
  // Predicated region
  $region34: #{pallas_forward.5} parent=0 // pred_check
    _
  $region35: #{pallas_forward.5} parent=0 // pred_check_branch
    %37 = sbr.rel (0) target = $region37
  $region36: #{pallas_forward.5} parent=0 // pred_region
    _
  $region37: #{pallas_forward.5} parent=0 // pred_fallthru
    _
  // Predicated region
  $region38: #{pallas_forward.5} parent=0 // pred_check
    _
  $region39: #{pallas_forward.5} parent=0 // pred_check_branch
    %39 = sbr.rel (0) target = $region41
  $region40: #{pallas_forward.5} parent=0 // pred_region
    _
  $region41: #{pallas_forward.5} parent=0 // pred_fallthru
    _
  // Predicated region
  $region42: #{pallas_forward.5} parent=0 // pred_check
    _
  $region43: #{pallas_forward.5} parent=0 // pred_check_branch
    %41 = sbr.rel (0) target = $region45
  $region44: #{pallas_forward.5} parent=0 // pred_region
    _
  $region45: #{pallas_forward.5} parent=0 // pred_fallthru
    _
  // Predicated region
  $region46: #{pallas_forward.5} parent=0 // pred_check
    _
  $region47: #{pallas_forward.5} parent=0 // pred_check_branch
    %43 = sbr.rel (0) target = $region49
  $region48: #{pallas_forward.5} parent=0 // pred_region
    _
  $region49: #{pallas_forward.5} parent=0 // pred_fallthru
    _
  // Predicated region
  $region50: #{pallas_forward.5} parent=0 // pred_check
    _
  $region51: #{pallas_forward.5} parent=0 // pred_check_branch
    %45 = sbr.rel (0) target = $region53
  $region52: #{pallas_forward.5} parent=0 // pred_region
    _
  $region53: #{pallas_forward.5} parent=0 // pred_fallthru
    _
  %v46 = vld [vmem:[%s0] sm:$0xff]
  %v47 = vld [vmem:[%s0 + $0x8] sm:$0xff]
  %v48 = vld [vmem:[%s0 + $0x10] sm:$0xff]
  %v49 = vld [vmem:[%s0 + $0x18] sm:$0xff]
  %v50 = vld [vmem:[%s0 + $0x20] sm:$0xff]
  %v51 = vld [vmem:[%s0 + $0x28] sm:$0xff]
  %v52 = vld [vmem:[%s0 + $0x30] sm:$0xff]
  %v53 = vld [vmem:[%s0 + $0x38] sm:$0xff]
  %v54 = vld [vmem:[%s0 + $0x40] sm:$0xff]
  %v55 = vld [vmem:[%s0 + $0x48] sm:$0xff]
  %v56 = vld [vmem:[%s0 + $0x50] sm:$0xff]
  %v57 = vld [vmem:[%s0 + $0x58] sm:$0xff]
  %v58 = vld [vmem:[%s0 + $0x60] sm:$0xff]
  %v59 = vld [vmem:[%s0 + $0x68] sm:$0xff]
  %v60 = vld [vmem:[%s0 + $0x70] sm:$0xff]
  %v61 = vld [vmem:[%s0 + $0x78] sm:$0xff]
  %v62 = vld [vmem:[%s0 + $0x80] sm:$0xff]
  %v63 = vld [vmem:[%s0 + $0x88] sm:$0xff]
  %v64 = vld [vmem:[%s0 + $0x90] sm:$0xff]
  %v65 = vld [vmem:[%s0 + $0x98] sm:$0xff]
  %v66 = vld [vmem:[%s0 + $0xa0] sm:$0xff]
  %v67 = vld [vmem:[%s0 + $0xa8] sm:$0xff]
  %v68 = vld [vmem:[%s0 + $0xb0] sm:$0xff]
  %v69 = vld [vmem:[%s0 + $0xb8] sm:$0xff]
  %v70 = vld [vmem:[%s0 + $0xc0] sm:$0xff]
  %v71 = vld [vmem:[%s0 + $0xc8] sm:$0xff]
  %v72 = vld [vmem:[%s0 + $0xd0] sm:$0xff]
  %v73 = vld [vmem:[%s0 + $0xd8] sm:$0xff]
  %v74 = vld [vmem:[%s0 + $0xe0] sm:$0xff]
  %v75 = vld [vmem:[%s0 + $0xe8] sm:$0xff]
  %v76 = vld [vmem:[%s0 + $0xf0] sm:$0xff]
  %v77 = vld [vmem:[%s0 + $0xf8] sm:$0xff]
  %v78 = vld [vmem:[%s0 + $0x100] sm:$0xff]
  %v79 = vld [vmem:[%s0 + $0x108] sm:$0xff]
  %v80 = vld [vmem:[%s0 + $0x110] sm:$0xff]
  %v81 = vld [vmem:[%s0 + $0x118] sm:$0xff]
  %v82 = vld [vmem:[%s0 + $0x120] sm:$0xff]
  %v83 = vld [vmem:[%s0 + $0x128] sm:$0xff]
  %v84 = vld [vmem:[%s0 + $0x130] sm:$0xff]
  %v85 = vld [vmem:[%s0 + $0x138] sm:$0xff]
  %v86 = vld [vmem:[%s0 + $0x140] sm:$0xff]
  %v87 = vld [vmem:[%s0 + $0x148] sm:$0xff]
  %v88 = vld [vmem:[%s0 + $0x150] sm:$0xff]
  %v89 = vld [vmem:[%s0 + $0x158] sm:$0xff]
  %v90 = vld [vmem:[%s0 + $0x160] sm:$0xff]
  %v91 = vld [vmem:[%s0 + $0x168] sm:$0xff]
  %v92 = vld [vmem:[%s0 + $0x170] sm:$0xff]
  %v93 = vld [vmem:[%s0 + $0x178] sm:$0xff]
  %v94 = vld [vmem:[%s1] sm:$0xff]
  %v95 = vld [vmem:[%s1 + $0x8] sm:$0xff]
  %v96 = vld [vmem:[%s1 + $0x10] sm:$0xff]
  %v97 = vld [vmem:[%s1 + $0x18] sm:$0xff]
  %v98 = vld [vmem:[%s1 + $0x20] sm:$0xff]
  %v99 = vld [vmem:[%s1 + $0x28] sm:$0xff]
  %v100 = vld [vmem:[%s1 + $0x30] sm:$0xff]
  %v101 = vld [vmem:[%s1 + $0x38] sm:$0xff]
  %v102 = vld [vmem:[%s1 + $0x40] sm:$0xff]
  %v103 = vld [vmem:[%s1 + $0x48] sm:$0xff]
  %v104 = vld [vmem:[%s1 + $0x50] sm:$0xff]
  %v105 = vld [vmem:[%s1 + $0x58] sm:$0xff]
  %v106 = vld [vmem:[%s1 + $0x60] sm:$0xff]
  %v107 = vld [vmem:[%s1 + $0x68] sm:$0xff]
  %v108 = vld [vmem:[%s1 + $0x70] sm:$0xff]
  %v109 = vld [vmem:[%s1 + $0x78] sm:$0xff]
  %v110 = vld [vmem:[%s1 + $0x80] sm:$0xff]
  %v111 = vld [vmem:[%s1 + $0x88] sm:$0xff]
  %v112 = vld [vmem:[%s1 + $0x90] sm:$0xff]
  %v113 = vld [vmem:[%s1 + $0x98] sm:$0xff]
  %v114 = vld [vmem:[%s1 + $0xa0] sm:$0xff]
  %v115 = vld [vmem:[%s1 + $0xa8] sm:$0xff]
  %v116 = vld [vmem:[%s1 + $0xb0] sm:$0xff]
  %v117 = vld [vmem:[%s1 + $0xb8] sm:$0xff]
  %v118 = vld [vmem:[%s1 + $0xc0] sm:$0xff]
  %v119 = vld [vmem:[%s1 + $0xc8] sm:$0xff]
  %v120 = vld [vmem:[%s1 + $0xd0] sm:$0xff]
  %v121 = vld [vmem:[%s1 + $0xd8] sm:$0xff]
  %v122 = vld [vmem:[%s1 + $0xe0] sm:$0xff]
  %v123 = vld [vmem:[%s1 + $0xe8] sm:$0xff]
  %v124 = vld [vmem:[%s1 + $0xf0] sm:$0xff]
  %v125 = vld [vmem:[%s1 + $0xf8] sm:$0xff]
  %v126 = vld [vmem:[%s1 + $0x100] sm:$0xff]
  %v127 = vld [vmem:[%s1 + $0x108] sm:$0xff]
  %v128 = vld [vmem:[%s1 + $0x110] sm:$0xff]
  %v129 = vld [vmem:[%s1 + $0x118] sm:$0xff]
  %v130 = vld [vmem:[%s2] sm:$0x1]
  %v132 = vperm.slane %v130, 0
  %vm134 = vcmask 261120
  %v136 = vsel %vm134, %v48, 0
  %v139 = vsel %vm134, %v51, 0
  %v142 = vsel %vm134, %v54, 0
  %v145 = vsel %vm134, %v57, 0
  %v148 = vsel %vm134, %v60, 0
  %v151 = vsel %vm134, %v63, 0
  %v154 = vsel %vm134, %v66, 0
  %v157 = vsel %vm134, %v69, 0
  %v160 = vsel %vm134, %v72, 0
  %v163 = vsel %vm134, %v75, 0
  %v166 = vsel %vm134, %v78, 0
  %v169 = vsel %vm134, %v81, 0
  %v172 = vsel %vm134, %v84, 0
  %v175 = vsel %vm134, %v87, 0
  %v178 = vsel %vm134, %v90, 0
  %v181 = vsel %vm134, %v93, 0
  %183 = vmatpush.msra.mxu0 %v109
  %184 = vmatpush.msra.mxu0 %v108
  %185 = vmatpush.msra.mxu0 %v107
  %186 = vmatpush.msra.mxu0 %v106
  %187 = vmatpush.msra.mxu0 %v105
  %188 = vmatpush.msra.mxu0 %v104
  %189 = vmatpush.msra.mxu0 %v103
  %190 = vmatpush.msra.mxu0 %v102
  %191 = vmatpush.msra.mxu0 %v101
  %192 = vmatpush.msra.mxu0 %v100
  %193 = vmatpush.msra.mxu0 %v99
  %194 = vmatpush.msra.mxu0 %v98
  %195 = vmatpush.msra.mxu0 %v97
  %196 = vmatpush.msra.mxu0 %v96
  %197 = vmatpush.msra.mxu0 %v95
  %198 = vmatpush.msra.mxu0 %v94
  %199 = vmatmul.f32.gmra.mxu0 %v46
  %v200 = vpop.f32.mrf.mxu0
  %v201 = vadd.f32 %v132, %v200
  %202 = vmatmul.f32.gmra.mxu0 %v49
  %v203 = vpop.f32.mrf.mxu0
  %v204 = vadd.f32 %v132, %v203
  %205 = vmatmul.f32.gmra.mxu0 %v52
  %v206 = vpop.f32.mrf.mxu0
  %v207 = vadd.f32 %v132, %v206
  %208 = vmatmul.f32.gmra.mxu0 %v55
  %v209 = vpop.f32.mrf.mxu0
  %v210 = vadd.f32 %v132, %v209
  %211 = vmatmul.f32.gmra.mxu0 %v58
  %v212 = vpop.f32.mrf.mxu0
  %v213 = vadd.f32 %v132, %v212
  %214 = vmatmul.f32.gmra.mxu0 %v61
  %v215 = vpop.f32.mrf.mxu0
  %v216 = vadd.f32 %v132, %v215
  %217 = vmatmul.f32.gmra.mxu0 %v64
  %v218 = vpop.f32.mrf.mxu0
  %v219 = vadd.f32 %v132, %v218
  %220 = vmatmul.f32.gmra.mxu0 %v67
  %v221 = vpop.f32.mrf.mxu0
  %v222 = vadd.f32 %v132, %v221
  %223 = vmatmul.f32.gmra.mxu0 %v70
  %v224 = vpop.f32.mrf.mxu0
  %v225 = vadd.f32 %v132, %v224
  %226 = vmatmul.f32.gmra.mxu0 %v73
  %v227 = vpop.f32.mrf.mxu0
  %v228 = vadd.f32 %v132, %v227
  %229 = vmatmul.f32.gmra.mxu0 %v76
  %v230 = vpop.f32.mrf.mxu0
  %v231 = vadd.f32 %v132, %v230
  %232 = vmatmul.f32.gmra.mxu0 %v79
  %v233 = vpop.f32.mrf.mxu0
  %v234 = vadd.f32 %v132, %v233
  %235 = vmatmul.f32.gmra.mxu0 %v82
  %v236 = vpop.f32.mrf.mxu0
  %v237 = vadd.f32 %v132, %v236
  %238 = vmatmul.f32.gmra.mxu0 %v85
  %v239 = vpop.f32.mrf.mxu0
  %v240 = vadd.f32 %v132, %v239
  %241 = vmatmul.f32.gmra.mxu0 %v88
  %v242 = vpop.f32.mrf.mxu0
  %v243 = vadd.f32 %v132, %v242
  %244 = vmatmul.f32.gmra.mxu0 %v91
  %v245 = vpop.f32.mrf.mxu0
  %v246 = vadd.f32 %v132, %v245
  %247 = vdwg.mxu0
  %248 = vmatpush.msra.mxu0 %v125
  %249 = vmatpush.msra.mxu0 %v124
  %250 = vmatpush.msra.mxu0 %v123
  %251 = vmatpush.msra.mxu0 %v122
  %252 = vmatpush.msra.mxu0 %v121
  %253 = vmatpush.msra.mxu0 %v120
  %254 = vmatpush.msra.mxu0 %v119
  %255 = vmatpush.msra.mxu0 %v118
  %256 = vmatpush.msra.mxu0 %v117
  %257 = vmatpush.msra.mxu0 %v116
  %258 = vmatpush.msra.mxu0 %v115
  %259 = vmatpush.msra.mxu0 %v114
  %260 = vmatpush.msra.mxu0 %v113
  %261 = vmatpush.msra.mxu0 %v112
  %262 = vmatpush.msra.mxu0 %v111
  %263 = vmatpush.msra.mxu0 %v110
  %264 = vmatmul.f32.gmra.mxu0 %v47
  %v265 = vpop.f32.mrf.mxu0
  %v266 = vadd.f32 %v201, %v265
  %267 = vmatmul.f32.gmra.mxu0 %v50
  %v268 = vpop.f32.mrf.mxu0
  %v269 = vadd.f32 %v204, %v268
  %270 = vmatmul.f32.gmra.mxu0 %v53
  %v271 = vpop.f32.mrf.mxu0
  %v272 = vadd.f32 %v207, %v271
  %273 = vmatmul.f32.gmra.mxu0 %v56
  %v274 = vpop.f32.mrf.mxu0
  %v275 = vadd.f32 %v210, %v274
  %276 = vmatmul.f32.gmra.mxu0 %v59
  %v277 = vpop.f32.mrf.mxu0
  %v278 = vadd.f32 %v213, %v277
  %279 = vmatmul.f32.gmra.mxu0 %v62
  %v280 = vpop.f32.mrf.mxu0
  %v281 = vadd.f32 %v216, %v280
  %282 = vmatmul.f32.gmra.mxu0 %v65
  %v283 = vpop.f32.mrf.mxu0
  %v284 = vadd.f32 %v219, %v283
  %285 = vmatmul.f32.gmra.mxu0 %v68
  %v286 = vpop.f32.mrf.mxu0
  %v287 = vadd.f32 %v222, %v286
  %288 = vmatmul.f32.gmra.mxu0 %v71
  %v289 = vpop.f32.mrf.mxu0
  %v290 = vadd.f32 %v225, %v289
  %291 = vmatmul.f32.gmra.mxu0 %v74
  %v292 = vpop.f32.mrf.mxu0
  %v293 = vadd.f32 %v228, %v292
  %294 = vmatmul.f32.gmra.mxu0 %v77
  %v295 = vpop.f32.mrf.mxu0
  %v296 = vadd.f32 %v231, %v295
  %297 = vmatmul.f32.gmra.mxu0 %v80
  %v298 = vpop.f32.mrf.mxu0
  %v299 = vadd.f32 %v234, %v298
  %300 = vmatmul.f32.gmra.mxu0 %v83
  %v301 = vpop.f32.mrf.mxu0
  %v302 = vadd.f32 %v237, %v301
  %303 = vmatmul.f32.gmra.mxu0 %v86
  %v304 = vpop.f32.mrf.mxu0
  %v305 = vadd.f32 %v240, %v304
  %306 = vmatmul.f32.gmra.mxu0 %v89
  %v307 = vpop.f32.mrf.mxu0
  %v308 = vadd.f32 %v243, %v307
  %309 = vmatmul.f32.gmra.mxu0 %v92
  %v310 = vpop.f32.mrf.mxu0
  %v311 = vadd.f32 %v246, %v310
  %312 = vdwg.mxu0
  %313 = vmatpush.msra.mxu0 0.0
  %314 = vmatpush.msra.mxu0 0.0
  %315 = vmatpush.msra.mxu0 0.0
  %316 = vmatpush.msra.mxu0 0.0
  %317 = vmatpush.msra.mxu0 0.0
  %318 = vmatpush.msra.mxu0 0.0
  %319 = vmatpush.msra.mxu0 0.0
  %320 = vmatpush.msra.mxu0 0.0
  %321 = vmatpush.msra.mxu0 0.0
  %322 = vmatpush.msra.mxu0 0.0
  %323 = vmatpush.msra.mxu0 0.0
  %324 = vmatpush.msra.mxu0 0.0
  %325 = vmatpush.msra.mxu0 %v129
  %326 = vmatpush.msra.mxu0 %v128
  %327 = vmatpush.msra.mxu0 %v127
  %328 = vmatpush.msra.mxu0 %v126
  %329 = vmatmul.f32.gmra.mxu0 %v136
  %v330 = vpop.f32.mrf.mxu0
  %v331 = vadd.f32 %v266, %v330
  %332 = vmatmul.f32.gmra.mxu0 %v139
  %v333 = vpop.f32.mrf.mxu0
  %v334 = vadd.f32 %v269, %v333
  %335 = vmatmul.f32.gmra.mxu0 %v142
  %v336 = vpop.f32.mrf.mxu0
  %v337 = vadd.f32 %v272, %v336
  %338 = vmatmul.f32.gmra.mxu0 %v145
  %v339 = vpop.f32.mrf.mxu0
  %v340 = vadd.f32 %v275, %v339
  %341 = vmatmul.f32.gmra.mxu0 %v148
  %v342 = vpop.f32.mrf.mxu0
  %v343 = vadd.f32 %v278, %v342
  %344 = vmatmul.f32.gmra.mxu0 %v151
  %v345 = vpop.f32.mrf.mxu0
  %v346 = vadd.f32 %v281, %v345
  %347 = vmatmul.f32.gmra.mxu0 %v154
  %v348 = vpop.f32.mrf.mxu0
  %v349 = vadd.f32 %v284, %v348
  %350 = vmatmul.f32.gmra.mxu0 %v157
  %v351 = vpop.f32.mrf.mxu0
  %v352 = vadd.f32 %v287, %v351
  %353 = vmatmul.f32.gmra.mxu0 %v160
  %v354 = vpop.f32.mrf.mxu0
  %v355 = vadd.f32 %v290, %v354
  %356 = vmatmul.f32.gmra.mxu0 %v163
  %v357 = vpop.f32.mrf.mxu0
  %v358 = vadd.f32 %v293, %v357
  %359 = vmatmul.f32.gmra.mxu0 %v166
  %v360 = vpop.f32.mrf.mxu0
  %v361 = vadd.f32 %v296, %v360
  %362 = vmatmul.f32.gmra.mxu0 %v169
  %v363 = vpop.f32.mrf.mxu0
  %v364 = vadd.f32 %v299, %v363
  %365 = vmatmul.f32.gmra.mxu0 %v172
  %v366 = vpop.f32.mrf.mxu0
  %v367 = vadd.f32 %v302, %v366
  %368 = vmatmul.f32.gmra.mxu0 %v175
  %v369 = vpop.f32.mrf.mxu0
  %v370 = vadd.f32 %v305, %v369
  %371 = vmatmul.f32.gmra.mxu0 %v178
  %v372 = vpop.f32.mrf.mxu0
  %v373 = vadd.f32 %v308, %v372
  %374 = vmatmul.f32.gmra.mxu0 %v181
  %v375 = vpop.f32.mrf.mxu0
  %v376 = vadd.f32 %v311, %v375
  %377 = vdwg.mxu0
  %v378 = vmax.f32 %v331, 0.0
  %v379 = vmax.f32 %v334, 0.0
  %v380 = vmax.f32 %v337, 0.0
  %v381 = vmax.f32 %v340, 0.0
  %v382 = vmax.f32 %v343, 0.0
  %v383 = vmax.f32 %v346, 0.0
  %v384 = vmax.f32 %v349, 0.0
  %v385 = vmax.f32 %v352, 0.0
  %v386 = vmax.f32 %v355, 0.0
  %v387 = vmax.f32 %v358, 0.0
  %v388 = vmax.f32 %v361, 0.0
  %v389 = vmax.f32 %v364, 0.0
  %v390 = vmax.f32 %v367, 0.0
  %v391 = vmax.f32 %v370, 0.0
  %v392 = vmax.f32 %v373, 0.0
  %v393 = vmax.f32 %v376, 0.0
  %v394 = vmax.f32 %v378, %v382
  %v395 = vmax.f32 %v379, %v383
  %v396 = vmax.f32 %v380, %v384
  %v397 = vmax.f32 %v381, %v385
  %v398 = vmax.f32 %v386, %v390
  %v399 = vmax.f32 %v387, %v391
  %v400 = vmax.f32 %v388, %v392
  %v401 = vmax.f32 %v389, %v393
  %v402 = vmax.f32 %v394, %v398
  %v403 = vmax.f32 %v395, %v399
  %v404 = vmax.f32 %v396, %v400
  %v405 = vmax.f32 %v397, %v401
  %vm406 = vcmask 23552
  %407 = vst.msk [vmem:[%s13] sm:$0xff] %vm406, %v402
  %408 = vst.msk [vmem:[%s13 + $0x8] sm:$0xff] %vm406, %v403
  %409 = vst.msk [vmem:[%s13 + $0x10] sm:$0xff] %vm406, %v404
  %410 = vst.msk [vmem:[%s13 + $0x18] sm:$0xff] %vm406, %v405
  %v411 = vld [vmem:[%s3] sm:$0x7]
  %v412 = vld [vmem:[%s4] sm:$0x1]
  %v414 = vperm.slane %v412, 0
  %v417 = vsel %vm406, %v402, 0
  %v420 = vsel %vm406, %v403, 0
  %v423 = vsel %vm406, %v404, 0
  %v426 = vsel %vm406, %v405, 0
  %vm428 = vcmask 1042432
  %v430 = vsel %vm428, %v411, 0
  %432 = vmatpush.msra.mxu0 0.0
  %433 = vmatpush.msra.mxu0 0.0
  %434 = vmatpush.msra.mxu0 0.0
  %435 = vmatpush.msra.mxu0 0.0
  %436 = vmatpush.msra.mxu0 0.0
  %437 = vmatpush.msra.mxu0 0.0
  %438 = vmatpush.msra.mxu0 0.0
  %439 = vmatpush.msra.mxu0 0.0
  %440 = vmatpush.msra.mxu0 0.0
  %441 = vmatpush.msra.mxu0 0.0
  %442 = vmatpush.msra.mxu0 0.0
  %443 = vmatpush.msra.mxu0 0.0
  %444 = vmatpush.msra.mxu0 0.0
  %445 = vmatpush.msra.mxu0 0.0
  %446 = vmatpush.msra.mxu0 0.0
  %447 = vmatpush.msra.mxu0 %v430
  %448 = vmatmul.f32.gmra.mxu0 %v417
  %v449 = vpop.f32.mrf.mxu0
  %v450 = vadd.f32 %v414, %v449
  %451 = vmatmul.f32.gmra.mxu0 %v420
  %v452 = vpop.f32.mrf.mxu0
  %v453 = vadd.f32 %v414, %v452
  %454 = vmatmul.f32.gmra.mxu0 %v423
  %v455 = vpop.f32.mrf.mxu0
  %v456 = vadd.f32 %v414, %v455
  %457 = vmatmul.f32.gmra.mxu0 %v426
  %v458 = vpop.f32.mrf.mxu0
  %v459 = vadd.f32 %v414, %v458
  %460 = vdwg.mxu0
  %v461 = vmax.f32 %v450, 0.0
  %v462 = vmax.f32 %v453, 0.0
  %v463 = vmax.f32 %v456, 0.0
  %v464 = vmax.f32 %v459, 0.0
  %v465 = vld [vmem:[%s7] sm:$0xff]
  %v466 = vld [vmem:[%s7 + $0x8] sm:$0xff]
  %v467 = vld [vmem:[%s7 + $0x10] sm:$0xff]
  %v468 = vld [vmem:[%s7 + $0x18] sm:$0xff]
  %v469 = vld [vmem:[%s7 + $0x20] sm:$0xff]
  %v470 = vld [vmem:[%s7 + $0x28] sm:$0xff]
  %v471 = vld [vmem:[%s7 + $0x30] sm:$0xff]
  %v472 = vld [vmem:[%s7 + $0x38] sm:$0xff]
  %v473 = vld [vmem:[%s7 + $0x40] sm:$0xff]
  %v474 = vld [vmem:[%s7 + $0x48] sm:$0xff]
  %v475 = vld [vmem:[%s7 + $0x50] sm:$0xff]
  %v476 = vld [vmem:[%s7 + $0x58] sm:$0xff]
  %v477 = vld [vmem:[%s7 + $0x60] sm:$0xff]
  %v478 = vld [vmem:[%s7 + $0x68] sm:$0xff]
  %v479 = vld [vmem:[%s7 + $0x70] sm:$0xff]
  %v480 = vld [vmem:[%s7 + $0x78] sm:$0xff]
  %481 = vmatpush.msra.mxu0 %v480
  %482 = vmatpush.msra.mxu0 %v479
  %483 = vmatpush.msra.mxu0 %v478
  %484 = vmatpush.msra.mxu0 %v477
  %485 = vmatpush.msra.mxu0 %v476
  %486 = vmatpush.msra.mxu0 %v475
  %487 = vmatpush.msra.mxu0 %v474
  %488 = vmatpush.msra.mxu0 %v473
  %489 = vmatpush.msra.mxu0 %v472
  %490 = vmatpush.msra.mxu0 %v471
  %491 = vmatpush.msra.mxu0 %v470
  %492 = vmatpush.msra.mxu0 %v469
  %493 = vmatpush.msra.mxu0 %v468
  %494 = vmatpush.msra.mxu0 %v467
  %495 = vmatpush.msra.mxu0 %v466
  %496 = vmatpush.msra.mxu0 %v465
  %497 = vmatmul.f32.gmra.mxu0 %v461
  %v498 = vpop.f32.mrf.mxu0
  %v499 = vadd.f32 0.0, %v498
  %500 = vmatmul.f32.gmra.mxu0 %v462
  %v501 = vpop.f32.mrf.mxu0
  %v502 = vadd.f32 0.0, %v501
  %503 = vmatmul.f32.gmra.mxu0 %v463
  %v504 = vpop.f32.mrf.mxu0
  %v505 = vadd.f32 0.0, %v504
  %506 = vmatmul.f32.gmra.mxu0 %v464
  %v507 = vpop.f32.mrf.mxu0
  %v508 = vadd.f32 0.0, %v507
  %509 = vdwg.mxu0
  %v510 = vsel %vm134, %v499, 0.0
  %v511 = vsel %vm134, %v502, 0.0
  %v512 = vadd.f32 %v510, %v511
  %v513 = vsel %vm134, %v505, 0.0
  %v514 = vadd.f32 %v512, %v513
  %v515 = vsel %vm134, %v508, 0.0
  %v516 = vadd.f32 %v514, %v515
  %v517 = vrot.slane %v516, 4
  %v518 = vadd.f32 %v516, %v517
  %v519 = vrot.slane %v518, 2
  %v520 = vadd.f32 %v518, %v519
  %v521 = vrot.slane %v520, 1
  %v522 = vadd.f32 %v520, %v521
  %v523 = vmul.f32 %v461, %v461
  %v524 = vmul.f32 %v462, %v462
  %v525 = vmul.f32 %v463, %v463
  %v526 = vmul.f32 %v464, %v464
  %527 = vmatpush.msra.mxu0 %v480
  %528 = vmatpush.msra.mxu0 %v479
  %529 = vmatpush.msra.mxu0 %v478
  %530 = vmatpush.msra.mxu0 %v477
  %531 = vmatpush.msra.mxu0 %v476
  %532 = vmatpush.msra.mxu0 %v475
  %533 = vmatpush.msra.mxu0 %v474
  %534 = vmatpush.msra.mxu0 %v473
  %535 = vmatpush.msra.mxu0 %v472
  %536 = vmatpush.msra.mxu0 %v471
  %537 = vmatpush.msra.mxu0 %v470
  %538 = vmatpush.msra.mxu0 %v469
  %539 = vmatpush.msra.mxu0 %v468
  %540 = vmatpush.msra.mxu0 %v467
  %541 = vmatpush.msra.mxu0 %v466
  %542 = vmatpush.msra.mxu0 %v465
  %543 = vmatmul.f32.gmra.mxu0 %v523
  %v544 = vpop.f32.mrf.mxu0
  %v545 = vadd.f32 0.0, %v544
  %546 = vmatmul.f32.gmra.mxu0 %v524
  %v547 = vpop.f32.mrf.mxu0
  %v548 = vadd.f32 0.0, %v547
  %549 = vmatmul.f32.gmra.mxu0 %v525
  %v550 = vpop.f32.mrf.mxu0
  %v551 = vadd.f32 0.0, %v550
  %552 = vmatmul.f32.gmra.mxu0 %v526
  %v553 = vpop.f32.mrf.mxu0
  %v554 = vadd.f32 0.0, %v553
  %555 = vdwg.mxu0
  %v556 = vsel %vm134, %v545, 0.0
  %v557 = vsel %vm134, %v548, 0.0
  %v558 = vadd.f32 %v556, %v557
  %v559 = vsel %vm134, %v551, 0.0
  %v560 = vadd.f32 %v558, %v559
  %v561 = vsel %vm134, %v554, 0.0
  %v562 = vadd.f32 %v560, %v561
  %v563 = vrot.slane %v562, 4
  %v564 = vadd.f32 %v562, %v563
  %v565 = vrot.slane %v564, 2
  %v566 = vadd.f32 %v564, %v565
  %v567 = vrot.slane %v566, 1
  %v568 = vadd.f32 %v566, %v567
  %v569 = vmul.f32 %v522, 0.0078125
  %v570 = vmul.f32 %v568, 0.0078125
  %v571 = vmul.f32 %v569, %v569
  %v572 = vsub.f32 %v570, %v571
  %v573 = vadd.f32 %v572, 1e-05
  %v574 = vrsqrt.pop %v573
  %v575 = vmul.f32 %v574, %v573
  %v576 = vmul.f32 %v575, %v574
  %v577 = vmul.f32 0.5, %v576
  %v578 = vsub.f32 1.5, %v577
  %v579 = vmul.f32 %v574, %v578
  %vm580 = vweird.f32 %v573
  %vm581 = vweird.f32 %v574
  %vm582 = vmor %vm580, %vm581
  %v583 = vsel %vm582, %v574, %v579
  %v584 = vld [vmem:[%s5] sm:$0x1]
  %v585 = vmul.f32 %v583, %v584
  %v586 = vld [vmem:[%s6] sm:$0x1]
  %v587 = vmul.f32 %v569, %v585
  %v588 = vsub.f32 %v586, %v587
  %v589 = vld [vmem:[%s8] sm:$0xff]
  %v590 = vld [vmem:[%s8 + $0x8] sm:$0xff]
  %v591 = vld [vmem:[%s8 + $0x10] sm:$0xff]
  %v592 = vld [vmem:[%s8 + $0x18] sm:$0xff]
  %v594 = vsel %vm134, %v585, 0
  %596 = vmatpush.msra.mxu0 0.0
  %597 = vmatpush.msra.mxu0 0.0
  %598 = vmatpush.msra.mxu0 0.0
  %599 = vmatpush.msra.mxu0 0.0
  %600 = vmatpush.msra.mxu0 0.0
  %601 = vmatpush.msra.mxu0 0.0
  %602 = vmatpush.msra.mxu0 0.0
  %603 = vmatpush.msra.mxu0 0.0
  %604 = vmatpush.msra.mxu0 0.0
  %605 = vmatpush.msra.mxu0 0.0
  %606 = vmatpush.msra.mxu0 0.0
  %607 = vmatpush.msra.mxu0 0.0
  %608 = vmatpush.msra.mxu0 %v592
  %609 = vmatpush.msra.mxu0 %v591
  %610 = vmatpush.msra.mxu0 %v590
  %611 = vmatpush.msra.mxu0 %v589
  %612 = vmatmul.f32.gmra.mxu0 %v594
  %v613 = vpop.f32.mrf.mxu0
  %v614 = vadd.f32 0.0, %v613
  %615 = vdwg.mxu0
  %v617 = vsel %vm134, %v588, 0
  %619 = vmatpush.msra.mxu0 0.0
  %620 = vmatpush.msra.mxu0 0.0
  %621 = vmatpush.msra.mxu0 0.0
  %622 = vmatpush.msra.mxu0 0.0
  %623 = vmatpush.msra.mxu0 0.0
  %624 = vmatpush.msra.mxu0 0.0
  %625 = vmatpush.msra.mxu0 0.0
  %626 = vmatpush.msra.mxu0 0.0
  %627 = vmatpush.msra.mxu0 0.0
  %628 = vmatpush.msra.mxu0 0.0
  %629 = vmatpush.msra.mxu0 0.0
  %630 = vmatpush.msra.mxu0 0.0
  %631 = vmatpush.msra.mxu0 %v592
  %632 = vmatpush.msra.mxu0 %v591
  %633 = vmatpush.msra.mxu0 %v590
  %634 = vmatpush.msra.mxu0 %v589
  %635 = vmatmul.f32.gmra.mxu0 %v617
  %v636 = vpop.f32.mrf.mxu0
  %v637 = vadd.f32 0.0, %v636
  %638 = vdwg.mxu0
  %v639 = vperm.slane %v614, 0
  %v640 = vmul.f32 %v461, %v639
  %v641 = vmul.f32 %v462, %v639
  %v642 = vmul.f32 %v463, %v639
  %v643 = vmul.f32 %v464, %v639
  %v644 = vperm.slane %v637, 0
  %v645 = vadd.f32 %v640, %v644
  %v646 = vadd.f32 %v641, %v644
  %v647 = vadd.f32 %v642, %v644
  %v648 = vadd.f32 %v643, %v644
  %v649 = vld [vmem:[%s9] sm:$0xff]
  %v650 = vld [vmem:[%s9 + $0x8] sm:$0xff]
  %v651 = vld [vmem:[%s9 + $0x10] sm:$0xff]
  %v652 = vld [vmem:[%s9 + $0x18] sm:$0xff]
  %v653 = vld [vmem:[%s9 + $0x20] sm:$0xff]
  %v654 = vld [vmem:[%s9 + $0x28] sm:$0xff]
  %v655 = vld [vmem:[%s9 + $0x30] sm:$0xff]
  %v656 = vld [vmem:[%s9 + $0x38] sm:$0xff]
  %v657 = vld [vmem:[%s9 + $0x40] sm:$0xff]
  %v658 = vld [vmem:[%s9 + $0x48] sm:$0xff]
  %v659 = vld [vmem:[%s9 + $0x50] sm:$0xff]
  %v660 = vld [vmem:[%s9 + $0x58] sm:$0xff]
  %v661 = vld [vmem:[%s9 + $0x60] sm:$0xff]
  %v662 = vld [vmem:[%s9 + $0x68] sm:$0xff]
  %v663 = vld [vmem:[%s9 + $0x70] sm:$0xff]
  %v664 = vld [vmem:[%s9 + $0x78] sm:$0xff]
  %v665 = vld [vmem:[%s9 + $0x80] sm:$0xff]
  %v666 = vld [vmem:[%s9 + $0x88] sm:$0xff]
  %v667 = vld [vmem:[%s9 + $0x90] sm:$0xff]
  %v668 = vld [vmem:[%s9 + $0x98] sm:$0xff]
  %v669 = vld [vmem:[%s9 + $0xa0] sm:$0xff]
  %v670 = vld [vmem:[%s9 + $0xa8] sm:$0xff]
  %v671 = vld [vmem:[%s9 + $0xb0] sm:$0xff]
  %v672 = vld [vmem:[%s9 + $0xb8] sm:$0xff]
  %v673 = vld [vmem:[%s9 + $0xc0] sm:$0xff]
  %v674 = vld [vmem:[%s9 + $0xc8] sm:$0xff]
  %v675 = vld [vmem:[%s9 + $0xd0] sm:$0xff]
  %v676 = vld [vmem:[%s9 + $0xd8] sm:$0xff]
  %v677 = vld [vmem:[%s9 + $0xe0] sm:$0xff]
  %v678 = vld [vmem:[%s9 + $0xe8] sm:$0xff]
  %v679 = vld [vmem:[%s9 + $0xf0] sm:$0xff]
  %v680 = vld [vmem:[%s9 + $0xf8] sm:$0xff]
  %v681 = vld [vmem:[%s10] sm:$0x3]
  %v683 = vperm.slane %v681, 0
  %v684 = vperm.slane %v681, 1
  %687 = vmatpush.msra.mxu0 %v679
  %688 = vmatpush.msra.mxu0 %v677
  %689 = vmatpush.msra.mxu0 %v675
  %690 = vmatpush.msra.mxu0 %v673
  %691 = vmatpush.msra.mxu0 %v671
  %692 = vmatpush.msra.mxu0 %v669
  %693 = vmatpush.msra.mxu0 %v667
  %694 = vmatpush.msra.mxu0 %v665
  %695 = vmatpush.msra.mxu0 %v663
  %696 = vmatpush.msra.mxu0 %v661
  %697 = vmatpush.msra.mxu0 %v659
  %698 = vmatpush.msra.mxu0 %v657
  %699 = vmatpush.msra.mxu0 %v655
  %700 = vmatpush.msra.mxu0 %v653
  %701 = vmatpush.msra.mxu0 %v651
  %702 = vmatpush.msra.mxu0 %v649
  %703 = vmatmul.f32.gmra.mxu0 %v645
  %v704 = vpop.f32.mrf.mxu0
  %v705 = vadd.f32 %v683, %v704
  %706 = vmatmul.f32.gmra.mxu0 %v646
  %v707 = vpop.f32.mrf.mxu0
  %v708 = vadd.f32 %v683, %v707
  %709 = vmatmul.f32.gmra.mxu0 %v647
  %v710 = vpop.f32.mrf.mxu0
  %v711 = vadd.f32 %v683, %v710
  %712 = vmatmul.f32.gmra.mxu0 %v648
  %v713 = vpop.f32.mrf.mxu0
  %v714 = vadd.f32 %v683, %v713
  %715 = vdwg.mxu0
  %716 = vmatpush.msra.mxu0 %v680
  %717 = vmatpush.msra.mxu0 %v678
  %718 = vmatpush.msra.mxu0 %v676
  %719 = vmatpush.msra.mxu0 %v674
  %720 = vmatpush.msra.mxu0 %v672
  %721 = vmatpush.msra.mxu0 %v670
  %722 = vmatpush.msra.mxu0 %v668
  %723 = vmatpush.msra.mxu0 %v666
  %724 = vmatpush.msra.mxu0 %v664
  %725 = vmatpush.msra.mxu0 %v662
  %726 = vmatpush.msra.mxu0 %v660
  %727 = vmatpush.msra.mxu0 %v658
  %728 = vmatpush.msra.mxu0 %v656
  %729 = vmatpush.msra.mxu0 %v654
  %730 = vmatpush.msra.mxu0 %v652
  %731 = vmatpush.msra.mxu0 %v650
  %732 = vmatmul.f32.gmra.mxu0 %v645
  %v733 = vpop.f32.mrf.mxu0
  %v734 = vadd.f32 %v684, %v733
  %735 = vmatmul.f32.gmra.mxu0 %v646
  %v736 = vpop.f32.mrf.mxu0
  %v737 = vadd.f32 %v684, %v736
  %738 = vmatmul.f32.gmra.mxu0 %v647
  %v739 = vpop.f32.mrf.mxu0
  %v740 = vadd.f32 %v684, %v739
  %741 = vmatmul.f32.gmra.mxu0 %v648
  %v742 = vpop.f32.mrf.mxu0
  %v743 = vadd.f32 %v684, %v742
  %744 = vdwg.mxu0
  %v745 = vmax.f32 %v705, 0.0
  %v746 = vmax.f32 %v734, 0.0
  %v747 = vmax.f32 %v708, 0.0
  %v748 = vmax.f32 %v737, 0.0
  %v749 = vmax.f32 %v711, 0.0
  %v750 = vmax.f32 %v740, 0.0
  %v751 = vmax.f32 %v714, 0.0
  %v752 = vmax.f32 %v743, 0.0
  %v753 = vld [vmem:[%s11] sm:$0xff]
  %v754 = vld [vmem:[%s11 + $0x8] sm:$0xff]
  %v755 = vld [vmem:[%s11 + $0x10] sm:$0xff]
  %v756 = vld [vmem:[%s11 + $0x18] sm:$0xff]
  %v757 = vld [vmem:[%s11 + $0x20] sm:$0xff]
  %v758 = vld [vmem:[%s11 + $0x28] sm:$0xff]
  %v759 = vld [vmem:[%s11 + $0x30] sm:$0xff]
  %v760 = vld [vmem:[%s11 + $0x38] sm:$0xff]
  %v761 = vld [vmem:[%s11 + $0x40] sm:$0xff]
  %v762 = vld [vmem:[%s11 + $0x48] sm:$0xff]
  %v763 = vld [vmem:[%s11 + $0x50] sm:$0xff]
  %v764 = vld [vmem:[%s11 + $0x58] sm:$0xff]
  %v765 = vld [vmem:[%s11 + $0x60] sm:$0xff]
  %v766 = vld [vmem:[%s11 + $0x68] sm:$0xff]
  %v767 = vld [vmem:[%s11 + $0x70] sm:$0xff]
  %v768 = vld [vmem:[%s11 + $0x78] sm:$0xff]
  %v769 = vld [vmem:[%s11 + $0x80] sm:$0xff]
  %v770 = vld [vmem:[%s11 + $0x88] sm:$0xff]
  %v771 = vld [vmem:[%s11 + $0x90] sm:$0xff]
  %v772 = vld [vmem:[%s11 + $0x98] sm:$0xff]
  %v773 = vld [vmem:[%s11 + $0xa0] sm:$0xff]
  %v774 = vld [vmem:[%s11 + $0xa8] sm:$0xff]
  %v775 = vld [vmem:[%s11 + $0xb0] sm:$0xff]
  %v776 = vld [vmem:[%s11 + $0xb8] sm:$0xff]
  %v777 = vld [vmem:[%s11 + $0xc0] sm:$0xff]
  %v778 = vld [vmem:[%s11 + $0xc8] sm:$0xff]
  %v779 = vld [vmem:[%s11 + $0xd0] sm:$0xff]
  %v780 = vld [vmem:[%s11 + $0xd8] sm:$0xff]
  %v781 = vld [vmem:[%s11 + $0xe0] sm:$0xff]
  %v782 = vld [vmem:[%s11 + $0xe8] sm:$0xff]
  %v783 = vld [vmem:[%s11 + $0xf0] sm:$0xff]
  %v784 = vld [vmem:[%s11 + $0xf8] sm:$0xff]
  %v785 = vld [vmem:[%s12] sm:$0x1]
  %v787 = vperm.slane %v785, 0
  %789 = vmatpush.msra.mxu0 %v768
  %790 = vmatpush.msra.mxu0 %v767
  %791 = vmatpush.msra.mxu0 %v766
  %792 = vmatpush.msra.mxu0 %v765
  %793 = vmatpush.msra.mxu0 %v764
  %794 = vmatpush.msra.mxu0 %v763
  %795 = vmatpush.msra.mxu0 %v762
  %796 = vmatpush.msra.mxu0 %v761
  %797 = vmatpush.msra.mxu0 %v760
  %798 = vmatpush.msra.mxu0 %v759
  %799 = vmatpush.msra.mxu0 %v758
  %800 = vmatpush.msra.mxu0 %v757
  %801 = vmatpush.msra.mxu0 %v756
  %802 = vmatpush.msra.mxu0 %v755
  %803 = vmatpush.msra.mxu0 %v754
  %804 = vmatpush.msra.mxu0 %v753
  %805 = vmatmul.f32.gmra.mxu0 %v745
  %v806 = vpop.f32.mrf.mxu0
  %v807 = vadd.f32 %v787, %v806
  %808 = vmatmul.f32.gmra.mxu0 %v747
  %v809 = vpop.f32.mrf.mxu0
  %v810 = vadd.f32 %v787, %v809
  %811 = vmatmul.f32.gmra.mxu0 %v749
  %v812 = vpop.f32.mrf.mxu0
  %v813 = vadd.f32 %v787, %v812
  %814 = vmatmul.f32.gmra.mxu0 %v751
  %v815 = vpop.f32.mrf.mxu0
  %v816 = vadd.f32 %v787, %v815
  %817 = vdwg.mxu0
  %818 = vmatpush.msra.mxu0 %v784
  %819 = vmatpush.msra.mxu0 %v783
  %820 = vmatpush.msra.mxu0 %v782
  %821 = vmatpush.msra.mxu0 %v781
  %822 = vmatpush.msra.mxu0 %v780
  %823 = vmatpush.msra.mxu0 %v779
  %824 = vmatpush.msra.mxu0 %v778
  %825 = vmatpush.msra.mxu0 %v777
  %826 = vmatpush.msra.mxu0 %v776
  %827 = vmatpush.msra.mxu0 %v775
  %828 = vmatpush.msra.mxu0 %v774
  %829 = vmatpush.msra.mxu0 %v773
  %830 = vmatpush.msra.mxu0 %v772
  %831 = vmatpush.msra.mxu0 %v771
  %832 = vmatpush.msra.mxu0 %v770
  %833 = vmatpush.msra.mxu0 %v769
  %834 = vmatmul.f32.gmra.mxu0 %v746
  %v835 = vpop.f32.mrf.mxu0
  %v836 = vadd.f32 %v807, %v835
  %837 = vmatmul.f32.gmra.mxu0 %v748
  %v838 = vpop.f32.mrf.mxu0
  %v839 = vadd.f32 %v810, %v838
  %840 = vmatmul.f32.gmra.mxu0 %v750
  %v841 = vpop.f32.mrf.mxu0
  %v842 = vadd.f32 %v813, %v841
  %843 = vmatmul.f32.gmra.mxu0 %v752
  %v844 = vpop.f32.mrf.mxu0
  %v845 = vadd.f32 %v816, %v844
  %846 = vdwg.mxu0
  %v847 = vsub.f32 0.0, %v836
  %v848 = vsub.f32 0.0, %v839
  %v849 = vsub.f32 0.0, %v842
  %v850 = vsub.f32 0.0, %v845
  %v851 = vmul.f32 %v847, 1.442695
  %v852 = vpow.pop %v851
  %v853 = vmul.f32 %v848, 1.442695
  %v854 = vpow.pop %v853
  %v855 = vmul.f32 %v849, 1.442695
  %v856 = vpow.pop %v855
  %v857 = vmul.f32 %v850, 1.442695
  %v858 = vpow.pop %v857
  %v859 = vadd.f32 %v852, 1.0
  %v860 = vadd.f32 %v854, 1.0
  %v861 = vadd.f32 %v856, 1.0
  %v862 = vadd.f32 %v858, 1.0
  %v863 = vrcp.pop %v859
  %v864 = vmul.f32 %v859, %v863
  %v865 = vsub.f32 1.0, %v864
  %v866 = vmul.f32 %v863, %v865
  %v867 = vadd.f32 %v863, %v866
  %vm868 = vweird.f32 %v859
  %vm869 = vweird.f32 %v863
  %vm870 = vmor %vm868, %vm869
  %v871 = vsel %vm870, %v863, %v867
  %v872 = vand.u32 2147483647, %v859
  %vm873 = vcmp.eq.f32.partialorder %v872, 8.507059e+37
  %v874 = vand.u32 %v859, 2147483648
  %v875 = vor.u32 1.1754944e-38, %v874
  %v876 = vsel %vm873, %v875, %v871
  %v877 = vmul.f32 1.0, %v876
  %v878 = vrcp.pop %v860
  %v879 = vmul.f32 %v860, %v878
  %v880 = vsub.f32 1.0, %v879
  %v881 = vmul.f32 %v878, %v880
  %v882 = vadd.f32 %v878, %v881
  %vm883 = vweird.f32 %v860
  %vm884 = vweird.f32 %v878
  %vm885 = vmor %vm883, %vm884
  %v886 = vsel %vm885, %v878, %v882
  %v887 = vand.u32 2147483647, %v860
  %vm888 = vcmp.eq.f32.partialorder %v887, 8.507059e+37
  %v889 = vand.u32 %v860, 2147483648
  %v890 = vor.u32 1.1754944e-38, %v889
  %v891 = vsel %vm888, %v890, %v886
  %v892 = vmul.f32 1.0, %v891
  %v893 = vrcp.pop %v861
  %v894 = vmul.f32 %v861, %v893
  %v895 = vsub.f32 1.0, %v894
  %v896 = vmul.f32 %v893, %v895
  %v897 = vadd.f32 %v893, %v896
  %vm898 = vweird.f32 %v861
  %vm899 = vweird.f32 %v893
  %vm900 = vmor %vm898, %vm899
  %v901 = vsel %vm900, %v893, %v897
  %v902 = vand.u32 2147483647, %v861
  %vm903 = vcmp.eq.f32.partialorder %v902, 8.507059e+37
  %v904 = vand.u32 %v861, 2147483648
  %v905 = vor.u32 1.1754944e-38, %v904
  %v906 = vsel %vm903, %v905, %v901
  %v907 = vmul.f32 1.0, %v906
  %v908 = vrcp.pop %v862
  %v909 = vmul.f32 %v862, %v908
  %v910 = vsub.f32 1.0, %v909
  %v911 = vmul.f32 %v908, %v910
  %v912 = vadd.f32 %v908, %v911
  %vm913 = vweird.f32 %v862
  %vm914 = vweird.f32 %v908
  %vm915 = vmor %vm913, %vm914
  %v916 = vsel %vm915, %v908, %v912
  %v917 = vand.u32 2147483647, %v862
  %vm918 = vcmp.eq.f32.partialorder %v917, 8.507059e+37
  %v919 = vand.u32 %v862, 2147483648
  %v920 = vor.u32 1.1754944e-38, %v919
  %v921 = vsel %vm918, %v920, %v916
  %v922 = vmul.f32 1.0, %v921
  %vm923 = vcmask 392192
  %924 = vst.msk [vmem:[%s14] sm:$0xff] %vm923, %v877
  %925 = vst.msk [vmem:[%s14 + $0x8] sm:$0xff] %vm923, %v892
  %926 = vst.msk [vmem:[%s14 + $0x10] sm:$0xff] %vm923, %v907
  %927 = vst.msk [vmem:[%s14 + $0x18] sm:$0xff] %vm923, %v922
  // Predicated region
  $region54: #{pallas_forward.5} parent=0 // pred_check
    _
  $region55: #{pallas_forward.5} parent=0 // pred_check_branch
    %929 = sbr.rel (0) target = $region57
  $region56: #{pallas_forward.5} parent=0 // pred_region
    _
  $region57: #{pallas_forward.5} parent=0 // pred_fallthru
    _
  // Predicated region
  $region58: #{pallas_forward.5} parent=0 // pred_check
    _
  $region59: #{pallas_forward.5} parent=0 // pred_check_branch
    %931 = sbr.rel (0) target = $region61
  $region60: #{pallas_forward.5} parent=0 // pred_region
    _
  $region61: #{pallas_forward.5} parent=0 // pred_fallthru
    _
  // Predicated region
  $region62: #{pallas_forward.5} parent=0 // pred_check
    _
  $region63: #{pallas_forward.5} parent=0 // pred_check_branch
    %933 = sbr.rel (0) target = $region65
  $region64: #{pallas_forward.5} parent=0 // pred_region
    _
  $region65: #{pallas_forward.5} parent=0 // pred_fallthru
    _
  // Predicated region
  $region66: #{pallas_forward.5} parent=0 // pred_check
    _
  $region67: #{pallas_forward.5} parent=0 // pred_check_branch
    %935 = sbr.rel (0) target = $region69
  $region68: #{pallas_forward.5} parent=0 // pred_region
    _
  $region69: #{pallas_forward.5} parent=0 // pred_fallthru
    _

</llo_original>
